<compile_context>
chip_gen: v7x
topology: tpu7x:2x2x1
jax: 0.10.0
libtpu: 0.0.40
codegen_flags: <defaults>
</compile_context>

<pallas_src>
import numpy as np
import jax
import jax.numpy as jnp
from jax.experimental import pallas as pl
from jax.experimental.pallas import tpu as pltpu

NEG_SLOPE = 0.01  # F.leaky_relu default negative slope

# (cin, cout, k, stride, pad) for conv1..conv7
_LAYER_CFG = [
    (3,    8, 5, 2, 2),
    (8,   16, 3, 2, 1),
    (16,  32, 3, 2, 1),
    (32,  64, 3, 2, 1),
    (64, 128, 3, 2, 1),
    (128, 32, 1, 1, 0),
    (32,  32, 3, 1, 1),
]


def _geometry(H, W):
    geos = []
    for (cin, cout, k, s, p) in _LAYER_CFG:
        Hp, Wp = H + 2 * p, W + 2 * p
        Ho, Wo = (Hp - k) // s + 1, (Wp - k) // s + 1
        geos.append(dict(cin=cin, cout=cout, k=k, s=s, p=p,
                         H=H, W=W, Hp=Hp, Wp=Wp, Ho=Ho, Wo=Wo))
        H, W = Ho, Wo
    # Layout assumptions of the fused kernel.
    g1 = geos[0]
    assert g1['s'] == 2 and g1['p'] % 2 == 0 and g1['H'] % 2 == 0
    for g in geos[1:4]:
        assert g['s'] == 2 and g['k'] == 3
    for g in geos[4:]:
        assert g['Ho'] == 1 and g['Wo'] == 1
    return geos


# ------------------------------ params ------------------------------------ #
def init_params(key):
    """PyTorch-style Conv2d init: raw (OIHW weight, bias) per layer (f32)."""
    params = []
    for (cin, cout, k, _, _) in _LAYER_CFG:
        key, wk, bk = jax.random.split(key, 3)
        bound = 1.0 / float(np.sqrt(cin * k * k))
        w = jax.random.uniform(wk, (cout, cin, k, k), jnp.float32, -bound, bound)
        b = jax.random.uniform(bk, (cout,), jnp.float32, -bound, bound)
        params.append((w, b))
    return params


def prep_params(params, geo):
    """One-time host-side weight folding.

    Layers 1-4 (stride-2 spatial): one bf16 matrix per H-tap *group*
      layer 1 : group g covers taps (2g, 2g+1) (leftover tap gets zero rows for
                the half-1 lanes), rows indexed by  c*(2W) + half*W + w_in
      layers 2-4 : a (2K, M) pair matrix (taps 0,1) and a (K, M) leftover matrix
                (tap 2), rows indexed by  half*K + w_in*cin + c
      Columns are wo*cout + co; W-direction taps, stride and W-padding are all
      absorbed (out-of-range taps -> zero rows, so no pad columns are stored).

    Layers 5-7 (1x1 output): plain dense (H*W*cin, cout) matrices; taps that
    only ever read zero padding are dropped.
    Biases are tiled over Wo once, kept in f32 for the f32 epilogue.
    """
    ws, bs = [], []
    for li in range(4):
        w, b = params[li]
        w = np.asarray(w, np.float32)
        b = np.asarray(b, np.float32)
        g = geo[li]
        cin, cout, k, s, p = g['cin'], g['cout'], g['k'], g['s'], g['p']
        W, Wo = g['W'], g['Wo']
        if li == 0:
            for grp in range((k + 1) // 2):
                B = np.zeros((cin * 2 * W, Wo * cout), np.float32)
                for half in range(2):
                    i = 2 * grp + half
                    if i >= k:
                        continue
                    for c in range(cin):
                        for wo in range(Wo):
                            for j in range(k):
                                w_in = s * wo + j - p
                                if 0 <= w_in < W:
                                    B[c * 2 * W + half * W + w_in,
                                      wo * cout:(wo + 1) * cout] = w[:, c, i, j]
                ws.append(jnp.asarray(B, dtype=jnp.bfloat16))
        else:
            K = W * cin
            Bp = np.zeros((2 * K, Wo * cout), np.float32)
            Bl = np.zeros((K, Wo * cout), np.float32)
            for c in range(cin):
                for wo in range(Wo):
                    for j in range(k):
                        w_in = s * wo + j - p
                        if not (0 <= w_in < W):
                            continue
                        for half in range(2):
                            Bp[half * K + w_in * cin + c,
                               wo * cout:(wo + 1) * cout] = w[:, c, half, j]
                        Bl[w_in * cin + c,
                           wo * cout:(wo + 1) * cout] = w[:, c, 2, j]
            ws.append(jnp.asarray(Bp, dtype=jnp.bfloat16))
            ws.append(jnp.asarray(Bl, dtype=jnp.bfloat16))
        bs.append(jnp.asarray(np.tile(b, Wo)[None, :], dtype=jnp.float32))

    for li in range(4, 7):
        w, b = params[li]
        w = np.asarray(w, np.float32)
        b = np.asarray(b, np.float32)
        g = geo[li]
        cin, cout, k, p = g['cin'], g['cout'], g['k'], g['p']
        H, W = g['H'], g['W']
        B = np.zeros((H * W * cin, cout), np.float32)
        for i in range(k):
            h = i - p
            if not (0 <= h < H):
                continue
            for j in range(k):
                w_in = j - p
                if not (0 <= w_in < W):
                    continue
                for c in range(cin):
                    B[(h * W + w_in) * cin + c, :] = w[:, c, i, j]
        ws.append(jnp.asarray(B, dtype=jnp.bfloat16))
        bs.append(jnp.asarray(b[None, :], dtype=jnp.float32))
    return ws, bs


# ------------------------------ fused kernel ------------------------------ #
def _make_kernel(geo, N):
    L = geo
    n_layers = len(L)
    HP = [(g['Hp'] + 1) // 2 for g in L]                   # pair-rows / sample
    nB = [(L[i]['k'] + 1) // 2 if i < 4 else 1 for i in range(n_layers)]
    n_w = sum(nB)

    def kernel(*refs):
        x_ref = refs[0]
        w_flat = refs[1:1 + n_w]
        bias_refs = refs[1 + n_w:1 + n_w + n_layers]
        out_ref = refs[1 + n_w + n_layers]
        a1, a2, a3, a4, a5 = refs[2 + n_w + n_layers:]

        Ws, ofs = [], 0
        for cnt in nB:
            Ws.append(w_flat[ofs:ofs + cnt])
            ofs += cnt

        f32, bf16 = jnp.float32, jnp.bfloat16

        def lrelu(v):
            return jnp.maximum(v, NEG_SLOPE * v)

        # 0) zero the pair-folded scratches (halo rows must read as exact 0).
        for a in (a1, a2, a3, a4):
            a[...] = jnp.zeros(a.shape, a.dtype)

        # 1) stage NCHW x into the layer-1 scratch:
        #    row = n*HP1 + (h+p)//2 ; lane = c*(2W) + (h%2)*W + w
        g = L[0]
        W1, C1, p1 = g['W'], g['cin'], g['p']
        blk = 2 * W1
        for n in range(N):
            for c in range(C1):
                a1[n * HP[0] + p1 // 2: n * HP[0] + p1 // 2 + g['H'] // 2,
                   c * blk:(c + 1) * blk] = x_ref[n * C1 + c]

        # 2) layer 1 : ceil(k/2)=3 tap-group dots over both samples at once.
        R = HP[0] + g['Ho']                 # rows n*HP1 + ho hold the real data
        acc = None
        for t in range(nB[0]):
            lhs = a1[t:t + R, :].astype(bf16)
            part = jnp.dot(lhs, Ws[0][t][...], preferred_element_type=f32)
            acc = part if acc is None else acc + part
        act = lrelu(acc + bias_refs[0][...])
        prev_HP, prev_Ho = HP[0], g['Ho']

        # 3) layers 2..4 : scatter into pair-folded scratch, then 2 dots each.
        for li, dst in zip((1, 2, 3), (a2, a3, a4)):
            g = L[li]
            K = g['W'] * g['cin']                     # 128 for every layer here
            for n in range(N):
                for ho in range(prev_Ho):
                    r = g['p'] + ho                   # padded row index
                    dst[n * HP[li] + r // 2: n * HP[li] + r // 2 + 1,
                        (r % 2) * K: (r % 2) * K + K] = \
                        act[n * prev_HP + ho: n * prev_HP + ho + 1, :]
            R = HP[li] + g['Ho']
            lhs_pair = dst[0:R, :].astype(bf16)            # taps (0,1), full 2K
            lhs_last = dst[1:1 + R, 0:K].astype(bf16)      # tap 2, lane-half 0
            acc = jnp.dot(lhs_pair, Ws[li][0][...], preferred_element_type=f32)
            acc = acc + jnp.dot(lhs_last, Ws[li][1][...],
                                preferred_element_type=f32)
            act = lrelu(acc + bias_refs[li][...])
            prev_HP, prev_Ho = HP[li], g['Ho']

        # 4) flatten the layer-4 output (2x2x64 per sample) into (N, 256).
        M4 = L[3]['Wo'] * L[3]['cout']
        for n in range(N):
            for ho in range(prev_Ho):
                a5[n:n + 1, ho * M4:(ho + 1) * M4] = \
                    act[n * prev_HP + ho: n * prev_HP + ho + 1, :]

        # 5) layers 5..7 : plain dense matmuls (all-padding taps were dropped).
        z = a5[...]
        for li in range(4, n_layers):
            z = lrelu(jnp.dot(z.astype(bf16), Ws[li][0][...],
                              preferred_element_type=f32) + bias_refs[li][...])
        out_ref[...] = z

    return kernel


def make_forward(geo, N):
    L = geo
    HP = [(g['Hp'] + 1) // 2 for g in L]
    nB = [(L[i]['k'] + 1) // 2 if i < 4 else 1 for i in range(len(L))]
    n_inputs = 1 + sum(nB) + len(L)
    scratch = [
        pltpu.VMEM((N * HP[0], L[0]['cin'] * 2 * L[0]['W']), jnp.float32),
        pltpu.VMEM((N * HP[1], 2 * L[1]['W'] * L[1]['cin']), jnp.float32),
        pltpu.VMEM((N * HP[2], 2 * L[2]['W'] * L[2]['cin']), jnp.float32),
        pltpu.VMEM((N * HP[3], 2 * L[3]['W'] * L[3]['cin']), jnp.float32),
        pltpu.VMEM((N, L[3]['Ho'] * L[3]['Wo'] * L[3]['cout']), jnp.float32),
    ]
    kernel = _make_kernel(geo, N)
    out_features = L[-1]['cout'] * L[-1]['Ho'] * L[-1]['Wo']

    def forward(ws, bs, x_nchw):
        Nb, C, H, W = x_nchw.shape
        assert (Nb, C, H, W) == (N, L[0]['cin'], L[0]['H'], L[0]['W'])
        # Free row-major reshape; no transpose, no pad, no extra HBM round trip.
        x_in = x_nchw.reshape(Nb * C, H // 2, 2 * W)
        args = [x_in] + list(ws) + list(bs)
        assert len(args) == n_inputs
        return pl.pallas_call(
            kernel,
            out_shape=jax.ShapeDtypeStruct((N, out_features), jnp.float32),
            in_specs=[pl.BlockSpec(memory_space=pltpu.MemorySpace.VMEM)] * n_inputs,
            out_specs=pl.BlockSpec(memory_space=pltpu.MemorySpace.VMEM),
            scratch_shapes=scratch,
        )(*args)

    return jax.jit(forward)


# ------------------------------- reference -------------------------------- #
def _reference_forward(params, x_nchw):
    out = x_nchw
    for (w, b), (_, _, _, s, p) in zip(params, _LAYER_CFG):
        out = jax.lax.conv_general_dilated(
            out, w, window_strides=(s, s), padding=[(p, p), (p, p)],
            dimension_numbers=("NCHW", "OIHW", "NCHW"),
        ) + b.reshape(1, -1, 1, 1)
        out = jnp.where(out >= 0, out, NEG_SLOPE * out)
    return out.reshape(out.shape[0], -1)


if __name__ == "__main__":
    key = jax.random.PRNGKey(0)
    pkey, xkey = jax.random.split(key)
    params = init_params(pkey)

    # Input consistent with the module: NCHW, 3 channels, 32x32 spatial, N=2.
    N, H, W = 2, 32, 32
    x = jax.random.normal(xkey, (N, _LAYER_CFG[0][0], H, W), dtype=jnp.float32)

    geo = _geometry(H, W)
    ws, bs = prep_params(params, geo)      # one-time host-side folding (bf16)
    forward = make_forward(geo, N)

    out = jax.block_until_ready(forward(ws, bs, x))
    ref = jax.block_until_ready(_reference_forward(params, x))

    assert out.shape == ref.shape, (out.shape, ref.shape)
    err = float(jnp.max(jnp.abs(out - ref)))
    # bf16 folded weights / bf16 MXU operands (per perf review) -> relaxed tol.
    assert jnp.allclose(out, ref, atol=1e-2, rtol=1e-2), err

    print("KERNEL_OK")
</pallas_src>

<mosaic_0001>
module attributes {stable_mosaic.version = 11 : i64} {
  func.func @kernel(%arg0: memref<6x16x64xf32, #tpu.memory_space<vmem>>, %arg1: memref<192x128xbf16, #tpu.memory_space<vmem>>, %arg2: memref<192x128xbf16, #tpu.memory_space<vmem>>, %arg3: memref<192x128xbf16, #tpu.memory_space<vmem>>, %arg4: memref<256x128xbf16, #tpu.memory_space<vmem>>, %arg5: memref<128x128xbf16, #tpu.memory_space<vmem>>, %arg6: memref<256x128xbf16, #tpu.memory_space<vmem>>, %arg7: memref<128x128xbf16, #tpu.memory_space<vmem>>, %arg8: memref<256x128xbf16, #tpu.memory_space<vmem>>, %arg9: memref<128x128xbf16, #tpu.memory_space<vmem>>, %arg10: memref<256x128xbf16, #tpu.memory_space<vmem>>, %arg11: memref<128x32xbf16, #tpu.memory_space<vmem>>, %arg12: memref<32x32xbf16, #tpu.memory_space<vmem>>, %arg13: memref<1x128xf32, #tpu.memory_space<vmem>>, %arg14: memref<1x128xf32, #tpu.memory_space<vmem>>, %arg15: memref<1x128xf32, #tpu.memory_space<vmem>>, %arg16: memref<1x128xf32, #tpu.memory_space<vmem>>, %arg17: memref<1x128xf32, #tpu.memory_space<vmem>>, %arg18: memref<1x32xf32, #tpu.memory_space<vmem>>, %arg19: memref<1x32xf32, #tpu.memory_space<vmem>>, %arg20: memref<2x32xf32, #tpu.memory_space<vmem>>, %arg21: memref<36x192xf32, #tpu.memory_space<vmem>>, %arg22: memref<18x256xf32, #tpu.memory_space<vmem>>, %arg23: memref<10x256xf32, #tpu.memory_space<vmem>>, %arg24: memref<6x256xf32, #tpu.memory_space<vmem>>, %arg25: memref<2x256xf32, #tpu.memory_space<vmem>>) attributes {dimension_semantics = [], scalar_prefetch = 0 : i64, scratch_operands = 5 : i64, tpu.core_type = #tpu.core_type<tc>} {
    %cst = arith.constant 0.000000e+00 : f32
    %0 = vector.broadcast %cst : f32 to vector<36x192xf32>
    %c0 = arith.constant 0 : index
    %c0_0 = arith.constant 0 : index
    %1 = vector.load %arg21[%c0, %c0_0] : memref<36x192xf32, #tpu.memory_space<vmem>>, vector<36x192xf32>
    tpu.vector_store %arg21[%c0, %c0_0], %0 {strides = array<i32>} : memref<36x192xf32, #tpu.memory_space<vmem>>, vector<36x192xf32>,
    %cst_1 = arith.constant 0.000000e+00 : f32
    %2 = vector.broadcast %cst_1 : f32 to vector<18x256xf32>
    %c0_2 = arith.constant 0 : index
    %c0_3 = arith.constant 0 : index
    %3 = vector.load %arg22[%c0_2, %c0_3] : memref<18x256xf32, #tpu.memory_space<vmem>>, vector<18x256xf32>
    tpu.vector_store %arg22[%c0_2, %c0_3], %2 {strides = array<i32>} : memref<18x256xf32, #tpu.memory_space<vmem>>, vector<18x256xf32>,
    %cst_4 = arith.constant 0.000000e+00 : f32
    %4 = vector.broadcast %cst_4 : f32 to vector<10x256xf32>
    %c0_5 = arith.constant 0 : index
    %c0_6 = arith.constant 0 : index
    %5 = vector.load %arg23[%c0_5, %c0_6] : memref<10x256xf32, #tpu.memory_space<vmem>>, vector<10x256xf32>
    tpu.vector_store %arg23[%c0_5, %c0_6], %4 {strides = array<i32>} : memref<10x256xf32, #tpu.memory_space<vmem>>, vector<10x256xf32>,
    %cst_7 = arith.constant 0.000000e+00 : f32
    %6 = vector.broadcast %cst_7 : f32 to vector<6x256xf32>
    %c0_8 = arith.constant 0 : index
    %c0_9 = arith.constant 0 : index
    %7 = vector.load %arg24[%c0_8, %c0_9] : memref<6x256xf32, #tpu.memory_space<vmem>>, vector<6x256xf32>
    tpu.vector_store %arg24[%c0_8, %c0_9], %6 {strides = array<i32>} : memref<6x256xf32, #tpu.memory_space<vmem>>, vector<6x256xf32>,
    %c0_10 = arith.constant 0 : index
    %c0_11 = arith.constant 0 : index
    %c0_12 = arith.constant 0 : index
    %8 = vector.load %arg0[%c0_10, %c0_11, %c0_12] : memref<6x16x64xf32, #tpu.memory_space<vmem>>, vector<1x16x64xf32>
    %9 = vector.shape_cast %8 : vector<1x16x64xf32> to vector<16x64xf32>
    %c1 = arith.constant 1 : index
    %c0_13 = arith.constant 0 : index
    %10 = vector.load %arg21[%c1, %c0_13] : memref<36x192xf32, #tpu.memory_space<vmem>>, vector<16x64xf32>
    tpu.vector_store %arg21[%c1, %c0_13], %9 {strides = array<i32>} : memref<36x192xf32, #tpu.memory_space<vmem>>, vector<16x64xf32>,
    %c1_14 = arith.constant 1 : index
    %c0_15 = arith.constant 0 : index
    %c0_16 = arith.constant 0 : index
    %11 = vector.load %arg0[%c1_14, %c0_15, %c0_16] : memref<6x16x64xf32, #tpu.memory_space<vmem>>, vector<1x16x64xf32>
    %12 = vector.shape_cast %11 : vector<1x16x64xf32> to vector<16x64xf32>
    %c1_17 = arith.constant 1 : index
    %c64 = arith.constant 64 : index
    %13 = vector.load %arg21[%c1_17, %c64] : memref<36x192xf32, #tpu.memory_space<vmem>>, vector<16x64xf32>
    tpu.vector_store %arg21[%c1_17, %c64], %12 {strides = array<i32>} : memref<36x192xf32, #tpu.memory_space<vmem>>, vector<16x64xf32>,
    %c2 = arith.constant 2 : index
    %c0_18 = arith.constant 0 : index
    %c0_19 = arith.constant 0 : index
    %14 = vector.load %arg0[%c2, %c0_18, %c0_19] : memref<6x16x64xf32, #tpu.memory_space<vmem>>, vector<1x16x64xf32>
    %15 = vector.shape_cast %14 : vector<1x16x64xf32> to vector<16x64xf32>
    %c1_20 = arith.constant 1 : index
    %c128 = arith.constant 128 : index
    %16 = vector.load %arg21[%c1_20, %c128] : memref<36x192xf32, #tpu.memory_space<vmem>>, vector<16x64xf32>
    tpu.vector_store %arg21[%c1_20, %c128], %15 {strides = array<i32>} : memref<36x192xf32, #tpu.memory_space<vmem>>, vector<16x64xf32>,
    %c3 = arith.constant 3 : index
    %c0_21 = arith.constant 0 : index
    %c0_22 = arith.constant 0 : index
    %17 = vector.load %arg0[%c3, %c0_21, %c0_22] : memref<6x16x64xf32, #tpu.memory_space<vmem>>, vector<1x16x64xf32>
    %18 = vector.shape_cast %17 : vector<1x16x64xf32> to vector<16x64xf32>
    %c19 = arith.constant 19 : index
    %c0_23 = arith.constant 0 : index
    %19 = vector.load %arg21[%c19, %c0_23] : memref<36x192xf32, #tpu.memory_space<vmem>>, vector<16x64xf32>
    tpu.vector_store %arg21[%c19, %c0_23], %18 {strides = array<i32>} : memref<36x192xf32, #tpu.memory_space<vmem>>, vector<16x64xf32>,
    %c4 = arith.constant 4 : index
    %c0_24 = arith.constant 0 : index
    %c0_25 = arith.constant 0 : index
    %20 = vector.load %arg0[%c4, %c0_24, %c0_25] : memref<6x16x64xf32, #tpu.memory_space<vmem>>, vector<1x16x64xf32>
    %21 = vector.shape_cast %20 : vector<1x16x64xf32> to vector<16x64xf32>
    %c19_26 = arith.constant 19 : index
    %c64_27 = arith.constant 64 : index
    %22 = vector.load %arg21[%c19_26, %c64_27] : memref<36x192xf32, #tpu.memory_space<vmem>>, vector<16x64xf32>
    tpu.vector_store %arg21[%c19_26, %c64_27], %21 {strides = array<i32>} : memref<36x192xf32, #tpu.memory_space<vmem>>, vector<16x64xf32>,
    %c5 = arith.constant 5 : index
    %c0_28 = arith.constant 0 : index
    %c0_29 = arith.constant 0 : index
    %23 = vector.load %arg0[%c5, %c0_28, %c0_29] : memref<6x16x64xf32, #tpu.memory_space<vmem>>, vector<1x16x64xf32>
    %24 = vector.shape_cast %23 : vector<1x16x64xf32> to vector<16x64xf32>
    %c19_30 = arith.constant 19 : index
    %c128_31 = arith.constant 128 : index
    %25 = vector.load %arg21[%c19_30, %c128_31] : memref<36x192xf32, #tpu.memory_space<vmem>>, vector<16x64xf32>
    tpu.vector_store %arg21[%c19_30, %c128_31], %24 {strides = array<i32>} : memref<36x192xf32, #tpu.memory_space<vmem>>, vector<16x64xf32>,
    %c0_32 = arith.constant 0 : index
    %c0_33 = arith.constant 0 : index
    %26 = vector.load %arg21[%c0_32, %c0_33] : memref<36x192xf32, #tpu.memory_space<vmem>>, vector<34x192xf32>
    %27 = arith.truncf %26 : vector<34x192xf32> to vector<34x192xbf16>
    %c0_34 = arith.constant 0 : index
    %c0_35 = arith.constant 0 : index
    %28 = vector.load %arg1[%c0_34, %c0_35] : memref<192x128xbf16, #tpu.memory_space<vmem>>, vector<192x128xbf16>
    %cst_36 = arith.constant dense<0.000000e+00> : vector<34x128xf32>
    %29 = tpu.matmul %27, %28, %cst_36 {dimension_numbers = #tpu.dot_dimension_numbers<[1], [0], [0], [1], [0, 0, 1, 1], [], []>} : vector<34x192xbf16>, vector<192x128xbf16>, vector<34x128xf32> -> vector<34x128xf32>
    %c1_37 = arith.constant 1 : index
    %c0_38 = arith.constant 0 : index
    %30 = vector.load %arg21[%c1_37, %c0_38] : memref<36x192xf32, #tpu.memory_space<vmem>>, vector<34x192xf32>
    %31 = arith.truncf %30 : vector<34x192xf32> to vector<34x192xbf16>
    %c0_39 = arith.constant 0 : index
    %c0_40 = arith.constant 0 : index
    %32 = vector.load %arg2[%c0_39, %c0_40] : memref<192x128xbf16, #tpu.memory_space<vmem>>, vector<192x128xbf16>
    %cst_41 = arith.constant dense<0.000000e+00> : vector<34x128xf32>
    %33 = tpu.matmul %31, %32, %cst_41 {dimension_numbers = #tpu.dot_dimension_numbers<[1], [0], [0], [1], [0, 0, 1, 1], [], []>} : vector<34x192xbf16>, vector<192x128xbf16>, vector<34x128xf32> -> vector<34x128xf32>
    %34 = arith.addf %29, %33 : vector<34x128xf32>
    %c2_42 = arith.constant 2 : index
    %c0_43 = arith.constant 0 : index
    %35 = vector.load %arg21[%c2_42, %c0_43] : memref<36x192xf32, #tpu.memory_space<vmem>>, vector<34x192xf32>
    %36 = arith.truncf %35 : vector<34x192xf32> to vector<34x192xbf16>
    %c0_44 = arith.constant 0 : index
    %c0_45 = arith.constant 0 : index
    %37 = vector.load %arg3[%c0_44, %c0_45] : memref<192x128xbf16, #tpu.memory_space<vmem>>, vector<192x128xbf16>
    %cst_46 = arith.constant dense<0.000000e+00> : vector<34x128xf32>
    %38 = tpu.matmul %36, %37, %cst_46 {dimension_numbers = #tpu.dot_dimension_numbers<[1], [0], [0], [1], [0, 0, 1, 1], [], []>} : vector<34x192xbf16>, vector<192x128xbf16>, vector<34x128xf32> -> vector<34x128xf32>
    %39 = arith.addf %34, %38 : vector<34x128xf32>
    %c0_47 = arith.constant 0 : index
    %c0_48 = arith.constant 0 : index
    %40 = vector.load %arg13[%c0_47, %c0_48] : memref<1x128xf32, #tpu.memory_space<vmem>>, vector<1x128xf32>
    %41 = vector.broadcast %40 : vector<1x128xf32> to vector<34x128xf32>
    %42 = arith.addf %39, %41 : vector<34x128xf32>
    %cst_49 = arith.constant 0.00999999977 : f32
    %43 = vector.broadcast %cst_49 : f32 to vector<34x128xf32>
    %44 = arith.mulf %43, %42 : vector<34x128xf32>
    %45 = arith.maximumf %42, %44 : vector<34x128xf32>
    %46 = vector.extract_strided_slice %45 {offsets = [0, 0], sizes = [1, 128], strides = [1, 1]} : vector<34x128xf32> to vector<1x128xf32>
    %c0_50 = arith.constant 0 : index
    %c128_51 = arith.constant 128 : index
    %47 = vector.load %arg22[%c0_50, %c128_51] : memref<18x256xf32, #tpu.memory_space<vmem>>, vector<1x128xf32>
    tpu.vector_store %arg22[%c0_50, %c128_51], %46 {strides = array<i32>} : memref<18x256xf32, #tpu.memory_space<vmem>>, vector<1x128xf32>,
    %48 = vector.extract_strided_slice %45 {offsets = [1, 0], sizes = [1, 128], strides = [1, 1]} : vector<34x128xf32> to vector<1x128xf32>
    %c1_52 = arith.constant 1 : index
    %c0_53 = arith.constant 0 : index
    %49 = vector.load %arg22[%c1_52, %c0_53] : memref<18x256xf32, #tpu.memory_space<vmem>>, vector<1x128xf32>
    tpu.vector_store %arg22[%c1_52, %c0_53], %48 {strides = array<i32>} : memref<18x256xf32, #tpu.memory_space<vmem>>, vector<1x128xf32>,
    %50 = vector.extract_strided_slice %45 {offsets = [2, 0], sizes = [1, 128], strides = [1, 1]} : vector<34x128xf32> to vector<1x128xf32>
    %c1_54 = arith.constant 1 : index
    %c128_55 = arith.constant 128 : index
    %51 = vector.load %arg22[%c1_54, %c128_55] : memref<18x256xf32, #tpu.memory_space<vmem>>, vector<1x128xf32>
    tpu.vector_store %arg22[%c1_54, %c128_55], %50 {strides = array<i32>} : memref<18x256xf32, #tpu.memory_space<vmem>>, vector<1x128xf32>,
    %52 = vector.extract_strided_slice %45 {offsets = [3, 0], sizes = [1, 128], strides = [1, 1]} : vector<34x128xf32> to vector<1x128xf32>
    %c2_56 = arith.constant 2 : index
    %c0_57 = arith.constant 0 : index
    %53 = vector.load %arg22[%c2_56, %c0_57] : memref<18x256xf32, #tpu.memory_space<vmem>>, vector<1x128xf32>
    tpu.vector_store %arg22[%c2_56, %c0_57], %52 {strides = array<i32>} : memref<18x256xf32, #tpu.memory_space<vmem>>, vector<1x128xf32>,
    %54 = vector.extract_strided_slice %45 {offsets = [4, 0], sizes = [1, 128], strides = [1, 1]} : vector<34x128xf32> to vector<1x128xf32>
    %c2_58 = arith.constant 2 : index
    %c128_59 = arith.constant 128 : index
    %55 = vector.load %arg22[%c2_58, %c128_59] : memref<18x256xf32, #tpu.memory_space<vmem>>, vector<1x128xf32>
    tpu.vector_store %arg22[%c2_58, %c128_59], %54 {strides = array<i32>} : memref<18x256xf32, #tpu.memory_space<vmem>>, vector<1x128xf32>,
    %56 = vector.extract_strided_slice %45 {offsets = [5, 0], sizes = [1, 128], strides = [1, 1]} : vector<34x128xf32> to vector<1x128xf32>
    %c3_60 = arith.constant 3 : index
    %c0_61 = arith.constant 0 : index
    %57 = vector.load %arg22[%c3_60, %c0_61] : memref<18x256xf32, #tpu.memory_space<vmem>>, vector<1x128xf32>
    tpu.vector_store %arg22[%c3_60, %c0_61], %56 {strides = array<i32>} : memref<18x256xf32, #tpu.memory_space<vmem>>, vector<1x128xf32>,
    %58 = vector.extract_strided_slice %45 {offsets = [6, 0], sizes = [1, 128], strides = [1, 1]} : vector<34x128xf32> to vector<1x128xf32>
    %c3_62 = arith.constant 3 : index
    %c128_63 = arith.constant 128 : index
    %59 = vector.load %arg22[%c3_62, %c128_63] : memref<18x256xf32, #tpu.memory_space<vmem>>, vector<1x128xf32>
    tpu.vector_store %arg22[%c3_62, %c128_63], %58 {strides = array<i32>} : memref<18x256xf32, #tpu.memory_space<vmem>>, vector<1x128xf32>,
    %60 = vector.extract_strided_slice %45 {offsets = [7, 0], sizes = [1, 128], strides = [1, 1]} : vector<34x128xf32> to vector<1x128xf32>
    %c4_64 = arith.constant 4 : index
    %c0_65 = arith.constant 0 : index
    %61 = vector.load %arg22[%c4_64, %c0_65] : memref<18x256xf32, #tpu.memory_space<vmem>>, vector<1x128xf32>
    tpu.vector_store %arg22[%c4_64, %c0_65], %60 {strides = array<i32>} : memref<18x256xf32, #tpu.memory_space<vmem>>, vector<1x128xf32>,
    %62 = vector.extract_strided_slice %45 {offsets = [8, 0], sizes = [1, 128], strides = [1, 1]} : vector<34x128xf32> to vector<1x128xf32>
    %c4_66 = arith.constant 4 : index
    %c128_67 = arith.constant 128 : index
    %63 = vector.load %arg22[%c4_66, %c128_67] : memref<18x256xf32, #tpu.memory_space<vmem>>, vector<1x128xf32>
    tpu.vector_store %arg22[%c4_66, %c128_67], %62 {strides = array<i32>} : memref<18x256xf32, #tpu.memory_space<vmem>>, vector<1x128xf32>,
    %64 = vector.extract_strided_slice %45 {offsets = [9, 0], sizes = [1, 128], strides = [1, 1]} : vector<34x128xf32> to vector<1x128xf32>
    %c5_68 = arith.constant 5 : index
    %c0_69 = arith.constant 0 : index
    %65 = vector.load %arg22[%c5_68, %c0_69] : memref<18x256xf32, #tpu.memory_space<vmem>>, vector<1x128xf32>
    tpu.vector_store %arg22[%c5_68, %c0_69], %64 {strides = array<i32>} : memref<18x256xf32, #tpu.memory_space<vmem>>, vector<1x128xf32>,
    %66 = vector.extract_strided_slice %45 {offsets = [10, 0], sizes = [1, 128], strides = [1, 1]} : vector<34x128xf32> to vector<1x128xf32>
    %c5_70 = arith.constant 5 : index
    %c128_71 = arith.constant 128 : index
    %67 = vector.load %arg22[%c5_70, %c128_71] : memref<18x256xf32, #tpu.memory_space<vmem>>, vector<1x128xf32>
    tpu.vector_store %arg22[%c5_70, %c128_71], %66 {strides = array<i32>} : memref<18x256xf32, #tpu.memory_space<vmem>>, vector<1x128xf32>,
    %68 = vector.extract_strided_slice %45 {offsets = [11, 0], sizes = [1, 128], strides = [1, 1]} : vector<34x128xf32> to vector<1x128xf32>
    %c6 = arith.constant 6 : index
    %c0_72 = arith.constant 0 : index
    %69 = vector.load %arg22[%c6, %c0_72] : memref<18x256xf32, #tpu.memory_space<vmem>>, vector<1x128xf32>
    tpu.vector_store %arg22[%c6, %c0_72], %68 {strides = array<i32>} : memref<18x256xf32, #tpu.memory_space<vmem>>, vector<1x128xf32>,
    %70 = vector.extract_strided_slice %45 {offsets = [12, 0], sizes = [1, 128], strides = [1, 1]} : vector<34x128xf32> to vector<1x128xf32>
    %c6_73 = arith.constant 6 : index
    %c128_74 = arith.constant 128 : index
    %71 = vector.load %arg22[%c6_73, %c128_74] : memref<18x256xf32, #tpu.memory_space<vmem>>, vector<1x128xf32>
    tpu.vector_store %arg22[%c6_73, %c128_74], %70 {strides = array<i32>} : memref<18x256xf32, #tpu.memory_space<vmem>>, vector<1x128xf32>,
    %72 = vector.extract_strided_slice %45 {offsets = [13, 0], sizes = [1, 128], strides = [1, 1]} : vector<34x128xf32> to vector<1x128xf32>
    %c7 = arith.constant 7 : index
    %c0_75 = arith.constant 0 : index
    %73 = vector.load %arg22[%c7, %c0_75] : memref<18x256xf32, #tpu.memory_space<vmem>>, vector<1x128xf32>
    tpu.vector_store %arg22[%c7, %c0_75], %72 {strides = array<i32>} : memref<18x256xf32, #tpu.memory_space<vmem>>, vector<1x128xf32>,
    %74 = vector.extract_strided_slice %45 {offsets = [14, 0], sizes = [1, 128], strides = [1, 1]} : vector<34x128xf32> to vector<1x128xf32>
    %c7_76 = arith.constant 7 : index
    %c128_77 = arith.constant 128 : index
    %75 = vector.load %arg22[%c7_76, %c128_77] : memref<18x256xf32, #tpu.memory_space<vmem>>, vector<1x128xf32>
    tpu.vector_store %arg22[%c7_76, %c128_77], %74 {strides = array<i32>} : memref<18x256xf32, #tpu.memory_space<vmem>>, vector<1x128xf32>,
    %76 = vector.extract_strided_slice %45 {offsets = [15, 0], sizes = [1, 128], strides = [1, 1]} : vector<34x128xf32> to vector<1x128xf32>
    %c8 = arith.constant 8 : index
    %c0_78 = arith.constant 0 : index
    %77 = vector.load %arg22[%c8, %c0_78] : memref<18x256xf32, #tpu.memory_space<vmem>>, vector<1x128xf32>
    tpu.vector_store %arg22[%c8, %c0_78], %76 {strides = array<i32>} : memref<18x256xf32, #tpu.memory_space<vmem>>, vector<1x128xf32>,
    %78 = vector.extract_strided_slice %45 {offsets = [18, 0], sizes = [1, 128], strides = [1, 1]} : vector<34x128xf32> to vector<1x128xf32>
    %c9 = arith.constant 9 : index
    %c128_79 = arith.constant 128 : index
    %79 = vector.load %arg22[%c9, %c128_79] : memref<18x256xf32, #tpu.memory_space<vmem>>, vector<1x128xf32>
    tpu.vector_store %arg22[%c9, %c128_79], %78 {strides = array<i32>} : memref<18x256xf32, #tpu.memory_space<vmem>>, vector<1x128xf32>,
    %80 = vector.extract_strided_slice %45 {offsets = [19, 0], sizes = [1, 128], strides = [1, 1]} : vector<34x128xf32> to vector<1x128xf32>
    %c10 = arith.constant 10 : index
    %c0_80 = arith.constant 0 : index
    %81 = vector.load %arg22[%c10, %c0_80] : memref<18x256xf32, #tpu.memory_space<vmem>>, vector<1x128xf32>
    tpu.vector_store %arg22[%c10, %c0_80], %80 {strides = array<i32>} : memref<18x256xf32, #tpu.memory_space<vmem>>, vector<1x128xf32>,
    %82 = vector.extract_strided_slice %45 {offsets = [20, 0], sizes = [1, 128], strides = [1, 1]} : vector<34x128xf32> to vector<1x128xf32>
    %c10_81 = arith.constant 10 : index
    %c128_82 = arith.constant 128 : index
    %83 = vector.load %arg22[%c10_81, %c128_82] : memref<18x256xf32, #tpu.memory_space<vmem>>, vector<1x128xf32>
    tpu.vector_store %arg22[%c10_81, %c128_82], %82 {strides = array<i32>} : memref<18x256xf32, #tpu.memory_space<vmem>>, vector<1x128xf32>,
    %84 = vector.extract_strided_slice %45 {offsets = [21, 0], sizes = [1, 128], strides = [1, 1]} : vector<34x128xf32> to vector<1x128xf32>
    %c11 = arith.constant 11 : index
    %c0_83 = arith.constant 0 : index
    %85 = vector.load %arg22[%c11, %c0_83] : memref<18x256xf32, #tpu.memory_space<vmem>>, vector<1x128xf32>
    tpu.vector_store %arg22[%c11, %c0_83], %84 {strides = array<i32>} : memref<18x256xf32, #tpu.memory_space<vmem>>, vector<1x128xf32>,
    %86 = vector.extract_strided_slice %45 {offsets = [22, 0], sizes = [1, 128], strides = [1, 1]} : vector<34x128xf32> to vector<1x128xf32>
    %c11_84 = arith.constant 11 : index
    %c128_85 = arith.constant 128 : index
    %87 = vector.load %arg22[%c11_84, %c128_85] : memref<18x256xf32, #tpu.memory_space<vmem>>, vector<1x128xf32>
    tpu.vector_store %arg22[%c11_84, %c128_85], %86 {strides = array<i32>} : memref<18x256xf32, #tpu.memory_space<vmem>>, vector<1x128xf32>,
    %88 = vector.extract_strided_slice %45 {offsets = [23, 0], sizes = [1, 128], strides = [1, 1]} : vector<34x128xf32> to vector<1x128xf32>
    %c12 = arith.constant 12 : index
    %c0_86 = arith.constant 0 : index
    %89 = vector.load %arg22[%c12, %c0_86] : memref<18x256xf32, #tpu.memory_space<vmem>>, vector<1x128xf32>
    tpu.vector_store %arg22[%c12, %c0_86], %88 {strides = array<i32>} : memref<18x256xf32, #tpu.memory_space<vmem>>, vector<1x128xf32>,
    %90 = vector.extract_strided_slice %45 {offsets = [24, 0], sizes = [1, 128], strides = [1, 1]} : vector<34x128xf32> to vector<1x128xf32>
    %c12_87 = arith.constant 12 : index
    %c128_88 = arith.constant 128 : index
    %91 = vector.load %arg22[%c12_87, %c128_88] : memref<18x256xf32, #tpu.memory_space<vmem>>, vector<1x128xf32>
    tpu.vector_store %arg22[%c12_87, %c128_88], %90 {strides = array<i32>} : memref<18x256xf32, #tpu.memory_space<vmem>>, vector<1x128xf32>,
    %92 = vector.extract_strided_slice %45 {offsets = [25, 0], sizes = [1, 128], strides = [1, 1]} : vector<34x128xf32> to vector<1x128xf32>
    %c13 = arith.constant 13 : index
    %c0_89 = arith.constant 0 : index
    %93 = vector.load %arg22[%c13, %c0_89] : memref<18x256xf32, #tpu.memory_space<vmem>>, vector<1x128xf32>
    tpu.vector_store %arg22[%c13, %c0_89], %92 {strides = array<i32>} : memref<18x256xf32, #tpu.memory_space<vmem>>, vector<1x128xf32>,
    %94 = vector.extract_strided_slice %45 {offsets = [26, 0], sizes = [1, 128], strides = [1, 1]} : vector<34x128xf32> to vector<1x128xf32>
    %c13_90 = arith.constant 13 : index
    %c128_91 = arith.constant 128 : index
    %95 = vector.load %arg22[%c13_90, %c128_91] : memref<18x256xf32, #tpu.memory_space<vmem>>, vector<1x128xf32>
    tpu.vector_store %arg22[%c13_90, %c128_91], %94 {strides = array<i32>} : memref<18x256xf32, #tpu.memory_space<vmem>>, vector<1x128xf32>,
    %96 = vector.extract_strided_slice %45 {offsets = [27, 0], sizes = [1, 128], strides = [1, 1]} : vector<34x128xf32> to vector<1x128xf32>
    %c14 = arith.constant 14 : index
    %c0_92 = arith.constant 0 : index
    %97 = vector.load %arg22[%c14, %c0_92] : memref<18x256xf32, #tpu.memory_space<vmem>>, vector<1x128xf32>
    tpu.vector_store %arg22[%c14, %c0_92], %96 {strides = array<i32>} : memref<18x256xf32, #tpu.memory_space<vmem>>, vector<1x128xf32>,
    %98 = vector.extract_strided_slice %45 {offsets = [28, 0], sizes = [1, 128], strides = [1, 1]} : vector<34x128xf32> to vector<1x128xf32>
    %c14_93 = arith.constant 14 : index
    %c128_94 = arith.constant 128 : index
    %99 = vector.load %arg22[%c14_93, %c128_94] : memref<18x256xf32, #tpu.memory_space<vmem>>, vector<1x128xf32>
    tpu.vector_store %arg22[%c14_93, %c128_94], %98 {strides = array<i32>} : memref<18x256xf32, #tpu.memory_space<vmem>>, vector<1x128xf32>,
    %100 = vector.extract_strided_slice %45 {offsets = [29, 0], sizes = [1, 128], strides = [1, 1]} : vector<34x128xf32> to vector<1x128xf32>
    %c15 = arith.constant 15 : index
    %c0_95 = arith.constant 0 : index
    %101 = vector.load %arg22[%c15, %c0_95] : memref<18x256xf32, #tpu.memory_space<vmem>>, vector<1x128xf32>
    tpu.vector_store %arg22[%c15, %c0_95], %100 {strides = array<i32>} : memref<18x256xf32, #tpu.memory_space<vmem>>, vector<1x128xf32>,
    %102 = vector.extract_strided_slice %45 {offsets = [30, 0], sizes = [1, 128], strides = [1, 1]} : vector<34x128xf32> to vector<1x128xf32>
    %c15_96 = arith.constant 15 : index
    %c128_97 = arith.constant 128 : index
    %103 = vector.load %arg22[%c15_96, %c128_97] : memref<18x256xf32, #tpu.memory_space<vmem>>, vector<1x128xf32>
    tpu.vector_store %arg22[%c15_96, %c128_97], %102 {strides = array<i32>} : memref<18x256xf32, #tpu.memory_space<vmem>>, vector<1x128xf32>,
    %104 = vector.extract_strided_slice %45 {offsets = [31, 0], sizes = [1, 128], strides = [1, 1]} : vector<34x128xf32> to vector<1x128xf32>
    %c16 = arith.constant 16 : index
    %c0_98 = arith.constant 0 : index
    %105 = vector.load %arg22[%c16, %c0_98] : memref<18x256xf32, #tpu.memory_space<vmem>>, vector<1x128xf32>
    tpu.vector_store %arg22[%c16, %c0_98], %104 {strides = array<i32>} : memref<18x256xf32, #tpu.memory_space<vmem>>, vector<1x128xf32>,
    %106 = vector.extract_strided_slice %45 {offsets = [32, 0], sizes = [1, 128], strides = [1, 1]} : vector<34x128xf32> to vector<1x128xf32>
    %c16_99 = arith.constant 16 : index
    %c128_100 = arith.constant 128 : index
    %107 = vector.load %arg22[%c16_99, %c128_100] : memref<18x256xf32, #tpu.memory_space<vmem>>, vector<1x128xf32>
    tpu.vector_store %arg22[%c16_99, %c128_100], %106 {strides = array<i32>} : memref<18x256xf32, #tpu.memory_space<vmem>>, vector<1x128xf32>,
    %108 = vector.extract_strided_slice %45 {offsets = [33, 0], sizes = [1, 128], strides = [1, 1]} : vector<34x128xf32> to vector<1x128xf32>
    %c17 = arith.constant 17 : index
    %c0_101 = arith.constant 0 : index
    %109 = vector.load %arg22[%c17, %c0_101] : memref<18x256xf32, #tpu.memory_space<vmem>>, vector<1x128xf32>
    tpu.vector_store %arg22[%c17, %c0_101], %108 {strides = array<i32>} : memref<18x256xf32, #tpu.memory_space<vmem>>, vector<1x128xf32>,
    %c0_102 = arith.constant 0 : index
    %c0_103 = arith.constant 0 : index
    %110 = vector.load %arg22[%c0_102, %c0_103] : memref<18x256xf32, #tpu.memory_space<vmem>>, vector<17x256xf32>
    %111 = arith.truncf %110 : vector<17x256xf32> to vector<17x256xbf16>
    %c1_104 = arith.constant 1 : index
    %c0_105 = arith.constant 0 : index
    %112 = vector.load %arg22[%c1_104, %c0_105] : memref<18x256xf32, #tpu.memory_space<vmem>>, vector<17x128xf32>
    %113 = arith.truncf %112 : vector<17x128xf32> to vector<17x128xbf16>
    %c0_106 = arith.constant 0 : index
    %c0_107 = arith.constant 0 : index
    %114 = vector.load %arg4[%c0_106, %c0_107] : memref<256x128xbf16, #tpu.memory_space<vmem>>, vector<256x128xbf16>
    %cst_108 = arith.constant dense<0.000000e+00> : vector<17x128xf32>
    %115 = tpu.matmul %111, %114, %cst_108 {dimension_numbers = #tpu.dot_dimension_numbers<[1], [0], [0], [1], [0, 0, 1, 1], [], []>} : vector<17x256xbf16>, vector<256x128xbf16>, vector<17x128xf32> -> vector<17x128xf32>
    %c0_109 = arith.constant 0 : index
    %c0_110 = arith.constant 0 : index
    %116 = vector.load %arg5[%c0_109, %c0_110] : memref<128x128xbf16, #tpu.memory_space<vmem>>, vector<128x128xbf16>
    %cst_111 = arith.constant dense<0.000000e+00> : vector<17x128xf32>
    %117 = tpu.matmul %113, %116, %cst_111 {dimension_numbers = #tpu.dot_dimension_numbers<[1], [0], [0], [1], [0, 0, 1, 1], [], []>} : vector<17x128xbf16>, vector<128x128xbf16>, vector<17x128xf32> -> vector<17x128xf32>
    %118 = arith.addf %115, %117 : vector<17x128xf32>
    %c0_112 = arith.constant 0 : index
    %c0_113 = arith.constant 0 : index
    %119 = vector.load %arg14[%c0_112, %c0_113] : memref<1x128xf32, #tpu.memory_space<vmem>>, vector<1x128xf32>
    %120 = vector.broadcast %119 : vector<1x128xf32> to vector<17x128xf32>
    %121 = arith.addf %118, %120 : vector<17x128xf32>
    %cst_114 = arith.constant 0.00999999977 : f32
    %122 = vector.broadcast %cst_114 : f32 to vector<17x128xf32>
    %123 = arith.mulf %122, %121 : vector<17x128xf32>
    %124 = arith.maximumf %121, %123 : vector<17x128xf32>
    %125 = vector.extract_strided_slice %124 {offsets = [0, 0], sizes = [1, 128], strides = [1, 1]} : vector<17x128xf32> to vector<1x128xf32>
    %c0_115 = arith.constant 0 : index
    %c128_116 = arith.constant 128 : index
    %126 = vector.load %arg23[%c0_115, %c128_116] : memref<10x256xf32, #tpu.memory_space<vmem>>, vector<1x128xf32>
    tpu.vector_store %arg23[%c0_115, %c128_116], %125 {strides = array<i32>} : memref<10x256xf32, #tpu.memory_space<vmem>>, vector<1x128xf32>,
    %127 = vector.extract_strided_slice %124 {offsets = [1, 0], sizes = [1, 128], strides = [1, 1]} : vector<17x128xf32> to vector<1x128xf32>
    %c1_117 = arith.constant 1 : index
    %c0_118 = arith.constant 0 : index
    %128 = vector.load %arg23[%c1_117, %c0_118] : memref<10x256xf32, #tpu.memory_space<vmem>>, vector<1x128xf32>
    tpu.vector_store %arg23[%c1_117, %c0_118], %127 {strides = array<i32>} : memref<10x256xf32, #tpu.memory_space<vmem>>, vector<1x128xf32>,
    %129 = vector.extract_strided_slice %124 {offsets = [2, 0], sizes = [1, 128], strides = [1, 1]} : vector<17x128xf32> to vector<1x128xf32>
    %c1_119 = arith.constant 1 : index
    %c128_120 = arith.constant 128 : index
    %130 = vector.load %arg23[%c1_119, %c128_120] : memref<10x256xf32, #tpu.memory_space<vmem>>, vector<1x128xf32>
    tpu.vector_store %arg23[%c1_119, %c128_120], %129 {strides = array<i32>} : memref<10x256xf32, #tpu.memory_space<vmem>>, vector<1x128xf32>,
    %131 = vector.extract_strided_slice %124 {offsets = [3, 0], sizes = [1, 128], strides = [1, 1]} : vector<17x128xf32> to vector<1x128xf32>
    %c2_121 = arith.constant 2 : index
    %c0_122 = arith.constant 0 : index
    %132 = vector.load %arg23[%c2_121, %c0_122] : memref<10x256xf32, #tpu.memory_space<vmem>>, vector<1x128xf32>
    tpu.vector_store %arg23[%c2_121, %c0_122], %131 {strides = array<i32>} : memref<10x256xf32, #tpu.memory_space<vmem>>, vector<1x128xf32>,
    %133 = vector.extract_strided_slice %124 {offsets = [4, 0], sizes = [1, 128], strides = [1, 1]} : vector<17x128xf32> to vector<1x128xf32>
    %c2_123 = arith.constant 2 : index
    %c128_124 = arith.constant 128 : index
    %134 = vector.load %arg23[%c2_123, %c128_124] : memref<10x256xf32, #tpu.memory_space<vmem>>, vector<1x128xf32>
    tpu.vector_store %arg23[%c2_123, %c128_124], %133 {strides = array<i32>} : memref<10x256xf32, #tpu.memory_space<vmem>>, vector<1x128xf32>,
    %135 = vector.extract_strided_slice %124 {offsets = [5, 0], sizes = [1, 128], strides = [1, 1]} : vector<17x128xf32> to vector<1x128xf32>
    %c3_125 = arith.constant 3 : index
    %c0_126 = arith.constant 0 : index
    %136 = vector.load %arg23[%c3_125, %c0_126] : memref<10x256xf32, #tpu.memory_space<vmem>>, vector<1x128xf32>
    tpu.vector_store %arg23[%c3_125, %c0_126], %135 {strides = array<i32>} : memref<10x256xf32, #tpu.memory_space<vmem>>, vector<1x128xf32>,
    %137 = vector.extract_strided_slice %124 {offsets = [6, 0], sizes = [1, 128], strides = [1, 1]} : vector<17x128xf32> to vector<1x128xf32>
    %c3_127 = arith.constant 3 : index
    %c128_128 = arith.constant 128 : index
    %138 = vector.load %arg23[%c3_127, %c128_128] : memref<10x256xf32, #tpu.memory_space<vmem>>, vector<1x128xf32>
    tpu.vector_store %arg23[%c3_127, %c128_128], %137 {strides = array<i32>} : memref<10x256xf32, #tpu.memory_space<vmem>>, vector<1x128xf32>,
    %139 = vector.extract_strided_slice %124 {offsets = [7, 0], sizes = [1, 128], strides = [1, 1]} : vector<17x128xf32> to vector<1x128xf32>
    %c4_129 = arith.constant 4 : index
    %c0_130 = arith.constant 0 : index
    %140 = vector.load %arg23[%c4_129, %c0_130] : memref<10x256xf32, #tpu.memory_space<vmem>>, vector<1x128xf32>
    tpu.vector_store %arg23[%c4_129, %c0_130], %139 {strides = array<i32>} : memref<10x256xf32, #tpu.memory_space<vmem>>, vector<1x128xf32>,
    %141 = vector.extract_strided_slice %124 {offsets = [9, 0], sizes = [1, 128], strides = [1, 1]} : vector<17x128xf32> to vector<1x128xf32>
    %c5_131 = arith.constant 5 : index
    %c128_132 = arith.constant 128 : index
    %142 = vector.load %arg23[%c5_131, %c128_132] : memref<10x256xf32, #tpu.memory_space<vmem>>, vector<1x128xf32>
    tpu.vector_store %arg23[%c5_131, %c128_132], %141 {strides = array<i32>} : memref<10x256xf32, #tpu.memory_space<vmem>>, vector<1x128xf32>,
    %143 = vector.extract_strided_slice %124 {offsets = [10, 0], sizes = [1, 128], strides = [1, 1]} : vector<17x128xf32> to vector<1x128xf32>
    %c6_133 = arith.constant 6 : index
    %c0_134 = arith.constant 0 : index
    %144 = vector.load %arg23[%c6_133, %c0_134] : memref<10x256xf32, #tpu.memory_space<vmem>>, vector<1x128xf32>
    tpu.vector_store %arg23[%c6_133, %c0_134], %143 {strides = array<i32>} : memref<10x256xf32, #tpu.memory_space<vmem>>, vector<1x128xf32>,
    %145 = vector.extract_strided_slice %124 {offsets = [11, 0], sizes = [1, 128], strides = [1, 1]} : vector<17x128xf32> to vector<1x128xf32>
    %c6_135 = arith.constant 6 : index
    %c128_136 = arith.constant 128 : index
    %146 = vector.load %arg23[%c6_135, %c128_136] : memref<10x256xf32, #tpu.memory_space<vmem>>, vector<1x128xf32>
    tpu.vector_store %arg23[%c6_135, %c128_136], %145 {strides = array<i32>} : memref<10x256xf32, #tpu.memory_space<vmem>>, vector<1x128xf32>,
    %147 = vector.extract_strided_slice %124 {offsets = [12, 0], sizes = [1, 128], strides = [1, 1]} : vector<17x128xf32> to vector<1x128xf32>
    %c7_137 = arith.constant 7 : index
    %c0_138 = arith.constant 0 : index
    %148 = vector.load %arg23[%c7_137, %c0_138] : memref<10x256xf32, #tpu.memory_space<vmem>>, vector<1x128xf32>
    tpu.vector_store %arg23[%c7_137, %c0_138], %147 {strides = array<i32>} : memref<10x256xf32, #tpu.memory_space<vmem>>, vector<1x128xf32>,
    %149 = vector.extract_strided_slice %124 {offsets = [13, 0], sizes = [1, 128], strides = [1, 1]} : vector<17x128xf32> to vector<1x128xf32>
    %c7_139 = arith.constant 7 : index
    %c128_140 = arith.constant 128 : index
    %150 = vector.load %arg23[%c7_139, %c128_140] : memref<10x256xf32, #tpu.memory_space<vmem>>, vector<1x128xf32>
    tpu.vector_store %arg23[%c7_139, %c128_140], %149 {strides = array<i32>} : memref<10x256xf32, #tpu.memory_space<vmem>>, vector<1x128xf32>,
    %151 = vector.extract_strided_slice %124 {offsets = [14, 0], sizes = [1, 128], strides = [1, 1]} : vector<17x128xf32> to vector<1x128xf32>
    %c8_141 = arith.constant 8 : index
    %c0_142 = arith.constant 0 : index
    %152 = vector.load %arg23[%c8_141, %c0_142] : memref<10x256xf32, #tpu.memory_space<vmem>>, vector<1x128xf32>
    tpu.vector_store %arg23[%c8_141, %c0_142], %151 {strides = array<i32>} : memref<10x256xf32, #tpu.memory_space<vmem>>, vector<1x128xf32>,
    %153 = vector.extract_strided_slice %124 {offsets = [15, 0], sizes = [1, 128], strides = [1, 1]} : vector<17x128xf32> to vector<1x128xf32>
    %c8_143 = arith.constant 8 : index
    %c128_144 = arith.constant 128 : index
    %154 = vector.load %arg23[%c8_143, %c128_144] : memref<10x256xf32, #tpu.memory_space<vmem>>, vector<1x128xf32>
    tpu.vector_store %arg23[%c8_143, %c128_144], %153 {strides = array<i32>} : memref<10x256xf32, #tpu.memory_space<vmem>>, vector<1x128xf32>,
    %155 = vector.extract_strided_slice %124 {offsets = [16, 0], sizes = [1, 128], strides = [1, 1]} : vector<17x128xf32> to vector<1x128xf32>
    %c9_145 = arith.constant 9 : index
    %c0_146 = arith.constant 0 : index
    %156 = vector.load %arg23[%c9_145, %c0_146] : memref<10x256xf32, #tpu.memory_space<vmem>>, vector<1x128xf32>
    tpu.vector_store %arg23[%c9_145, %c0_146], %155 {strides = array<i32>} : memref<10x256xf32, #tpu.memory_space<vmem>>, vector<1x128xf32>,
    %c0_147 = arith.constant 0 : index
    %c0_148 = arith.constant 0 : index
    %157 = vector.load %arg23[%c0_147, %c0_148] : memref<10x256xf32, #tpu.memory_space<vmem>>, vector<9x256xf32>
    %158 = arith.truncf %157 : vector<9x256xf32> to vector<9x256xbf16>
    %c1_149 = arith.constant 1 : index
    %c0_150 = arith.constant 0 : index
    %159 = vector.load %arg23[%c1_149, %c0_150] : memref<10x256xf32, #tpu.memory_space<vmem>>, vector<9x128xf32>
    %160 = arith.truncf %159 : vector<9x128xf32> to vector<9x128xbf16>
    %c0_151 = arith.constant 0 : index
    %c0_152 = arith.constant 0 : index
    %161 = vector.load %arg6[%c0_151, %c0_152] : memref<256x128xbf16, #tpu.memory_space<vmem>>, vector<256x128xbf16>
    %cst_153 = arith.constant dense<0.000000e+00> : vector<9x128xf32>
    %162 = tpu.matmul %158, %161, %cst_153 {dimension_numbers = #tpu.dot_dimension_numbers<[1], [0], [0], [1], [0, 0, 1, 1], [], []>} : vector<9x256xbf16>, vector<256x128xbf16>, vector<9x128xf32> -> vector<9x128xf32>
    %c0_154 = arith.constant 0 : index
    %c0_155 = arith.constant 0 : index
    %163 = vector.load %arg7[%c0_154, %c0_155] : memref<128x128xbf16, #tpu.memory_space<vmem>>, vector<128x128xbf16>
    %cst_156 = arith.constant dense<0.000000e+00> : vector<9x128xf32>
    %164 = tpu.matmul %160, %163, %cst_156 {dimension_numbers = #tpu.dot_dimension_numbers<[1], [0], [0], [1], [0, 0, 1, 1], [], []>} : vector<9x128xbf16>, vector<128x128xbf16>, vector<9x128xf32> -> vector<9x128xf32>
    %165 = arith.addf %162, %164 : vector<9x128xf32>
    %c0_157 = arith.constant 0 : index
    %c0_158 = arith.constant 0 : index
    %166 = vector.load %arg15[%c0_157, %c0_158] : memref<1x128xf32, #tpu.memory_space<vmem>>, vector<1x128xf32>
    %167 = vector.broadcast %166 : vector<1x128xf32> to vector<9x128xf32>
    %168 = arith.addf %165, %167 : vector<9x128xf32>
    %cst_159 = arith.constant 0.00999999977 : f32
    %169 = vector.broadcast %cst_159 : f32 to vector<9x128xf32>
    %170 = arith.mulf %169, %168 : vector<9x128xf32>
    %171 = arith.maximumf %168, %170 : vector<9x128xf32>
    %172 = vector.extract_strided_slice %171 {offsets = [0, 0], sizes = [1, 128], strides = [1, 1]} : vector<9x128xf32> to vector<1x128xf32>
    %c0_160 = arith.constant 0 : index
    %c128_161 = arith.constant 128 : index
    %173 = vector.load %arg24[%c0_160, %c128_161] : memref<6x256xf32, #tpu.memory_space<vmem>>, vector<1x128xf32>
    tpu.vector_store %arg24[%c0_160, %c128_161], %172 {strides = array<i32>} : memref<6x256xf32, #tpu.memory_space<vmem>>, vector<1x128xf32>,
    %174 = vector.extract_strided_slice %171 {offsets = [1, 0], sizes = [1, 128], strides = [1, 1]} : vector<9x128xf32> to vector<1x128xf32>
    %c1_162 = arith.constant 1 : index
    %c0_163 = arith.constant 0 : index
    %175 = vector.load %arg24[%c1_162, %c0_163] : memref<6x256xf32, #tpu.memory_space<vmem>>, vector<1x128xf32>
    tpu.vector_store %arg24[%c1_162, %c0_163], %174 {strides = array<i32>} : memref<6x256xf32, #tpu.memory_space<vmem>>, vector<1x128xf32>,
    %176 = vector.extract_strided_slice %171 {offsets = [2, 0], sizes = [1, 128], strides = [1, 1]} : vector<9x128xf32> to vector<1x128xf32>
    %c1_164 = arith.constant 1 : index
    %c128_165 = arith.constant 128 : index
    %177 = vector.load %arg24[%c1_164, %c128_165] : memref<6x256xf32, #tpu.memory_space<vmem>>, vector<1x128xf32>
    tpu.vector_store %arg24[%c1_164, %c128_165], %176 {strides = array<i32>} : memref<6x256xf32, #tpu.memory_space<vmem>>, vector<1x128xf32>,
    %178 = vector.extract_strided_slice %171 {offsets = [3, 0], sizes = [1, 128], strides = [1, 1]} : vector<9x128xf32> to vector<1x128xf32>
    %c2_166 = arith.constant 2 : index
    %c0_167 = arith.constant 0 : index
    %179 = vector.load %arg24[%c2_166, %c0_167] : memref<6x256xf32, #tpu.memory_space<vmem>>, vector<1x128xf32>
    tpu.vector_store %arg24[%c2_166, %c0_167], %178 {strides = array<i32>} : memref<6x256xf32, #tpu.memory_space<vmem>>, vector<1x128xf32>,
    %180 = vector.extract_strided_slice %171 {offsets = [5, 0], sizes = [1, 128], strides = [1, 1]} : vector<9x128xf32> to vector<1x128xf32>
    %c3_168 = arith.constant 3 : index
    %c128_169 = arith.constant 128 : index
    %181 = vector.load %arg24[%c3_168, %c128_169] : memref<6x256xf32, #tpu.memory_space<vmem>>, vector<1x128xf32>
    tpu.vector_store %arg24[%c3_168, %c128_169], %180 {strides = array<i32>} : memref<6x256xf32, #tpu.memory_space<vmem>>, vector<1x128xf32>,
    %182 = vector.extract_strided_slice %171 {offsets = [6, 0], sizes = [1, 128], strides = [1, 1]} : vector<9x128xf32> to vector<1x128xf32>
    %c4_170 = arith.constant 4 : index
    %c0_171 = arith.constant 0 : index
    %183 = vector.load %arg24[%c4_170, %c0_171] : memref<6x256xf32, #tpu.memory_space<vmem>>, vector<1x128xf32>
    tpu.vector_store %arg24[%c4_170, %c0_171], %182 {strides = array<i32>} : memref<6x256xf32, #tpu.memory_space<vmem>>, vector<1x128xf32>,
    %184 = vector.extract_strided_slice %171 {offsets = [7, 0], sizes = [1, 128], strides = [1, 1]} : vector<9x128xf32> to vector<1x128xf32>
    %c4_172 = arith.constant 4 : index
    %c128_173 = arith.constant 128 : index
    %185 = vector.load %arg24[%c4_172, %c128_173] : memref<6x256xf32, #tpu.memory_space<vmem>>, vector<1x128xf32>
    tpu.vector_store %arg24[%c4_172, %c128_173], %184 {strides = array<i32>} : memref<6x256xf32, #tpu.memory_space<vmem>>, vector<1x128xf32>,
    %186 = vector.extract_strided_slice %171 {offsets = [8, 0], sizes = [1, 128], strides = [1, 1]} : vector<9x128xf32> to vector<1x128xf32>
    %c5_174 = arith.constant 5 : index
    %c0_175 = arith.constant 0 : index
    %187 = vector.load %arg24[%c5_174, %c0_175] : memref<6x256xf32, #tpu.memory_space<vmem>>, vector<1x128xf32>
    tpu.vector_store %arg24[%c5_174, %c0_175], %186 {strides = array<i32>} : memref<6x256xf32, #tpu.memory_space<vmem>>, vector<1x128xf32>,
    %c0_176 = arith.constant 0 : index
    %c0_177 = arith.constant 0 : index
    %188 = vector.load %arg24[%c0_176, %c0_177] : memref<6x256xf32, #tpu.memory_space<vmem>>, vector<5x256xf32>
    %189 = arith.truncf %188 : vector<5x256xf32> to vector<5x256xbf16>
    %c1_178 = arith.constant 1 : index
    %c0_179 = arith.constant 0 : index
    %190 = vector.load %arg24[%c1_178, %c0_179] : memref<6x256xf32, #tpu.memory_space<vmem>>, vector<5x128xf32>
    %191 = arith.truncf %190 : vector<5x128xf32> to vector<5x128xbf16>
    %c0_180 = arith.constant 0 : index
    %c0_181 = arith.constant 0 : index
    %192 = vector.load %arg8[%c0_180, %c0_181] : memref<256x128xbf16, #tpu.memory_space<vmem>>, vector<256x128xbf16>
    %cst_182 = arith.constant dense<0.000000e+00> : vector<5x128xf32>
    %193 = tpu.matmul %189, %192, %cst_182 {dimension_numbers = #tpu.dot_dimension_numbers<[1], [0], [0], [1], [0, 0, 1, 1], [], []>} : vector<5x256xbf16>, vector<256x128xbf16>, vector<5x128xf32> -> vector<5x128xf32>
    %c0_183 = arith.constant 0 : index
    %c0_184 = arith.constant 0 : index
    %194 = vector.load %arg9[%c0_183, %c0_184] : memref<128x128xbf16, #tpu.memory_space<vmem>>, vector<128x128xbf16>
    %cst_185 = arith.constant dense<0.000000e+00> : vector<5x128xf32>
    %195 = tpu.matmul %191, %194, %cst_185 {dimension_numbers = #tpu.dot_dimension_numbers<[1], [0], [0], [1], [0, 0, 1, 1], [], []>} : vector<5x128xbf16>, vector<128x128xbf16>, vector<5x128xf32> -> vector<5x128xf32>
    %196 = arith.addf %193, %195 : vector<5x128xf32>
    %c0_186 = arith.constant 0 : index
    %c0_187 = arith.constant 0 : index
    %197 = vector.load %arg16[%c0_186, %c0_187] : memref<1x128xf32, #tpu.memory_space<vmem>>, vector<1x128xf32>
    %198 = vector.broadcast %197 : vector<1x128xf32> to vector<5x128xf32>
    %199 = arith.addf %196, %198 : vector<5x128xf32>
    %cst_188 = arith.constant 0.00999999977 : f32
    %200 = vector.broadcast %cst_188 : f32 to vector<5x128xf32>
    %201 = arith.mulf %200, %199 : vector<5x128xf32>
    %202 = arith.maximumf %199, %201 : vector<5x128xf32>
    %203 = vector.extract_strided_slice %202 {offsets = [0, 0], sizes = [1, 128], strides = [1, 1]} : vector<5x128xf32> to vector<1x128xf32>
    %c0_189 = arith.constant 0 : index
    %c0_190 = arith.constant 0 : index
    %204 = vector.load %arg25[%c0_189, %c0_190] : memref<2x256xf32, #tpu.memory_space<vmem>>, vector<1x128xf32>
    tpu.vector_store %arg25[%c0_189, %c0_190], %203 {strides = array<i32>} : memref<2x256xf32, #tpu.memory_space<vmem>>, vector<1x128xf32>,
    %205 = vector.extract_strided_slice %202 {offsets = [1, 0], sizes = [1, 128], strides = [1, 1]} : vector<5x128xf32> to vector<1x128xf32>
    %c0_191 = arith.constant 0 : index
    %c128_192 = arith.constant 128 : index
    %206 = vector.load %arg25[%c0_191, %c128_192] : memref<2x256xf32, #tpu.memory_space<vmem>>, vector<1x128xf32>
    tpu.vector_store %arg25[%c0_191, %c128_192], %205 {strides = array<i32>} : memref<2x256xf32, #tpu.memory_space<vmem>>, vector<1x128xf32>,
    %207 = vector.extract_strided_slice %202 {offsets = [3, 0], sizes = [1, 128], strides = [1, 1]} : vector<5x128xf32> to vector<1x128xf32>
    %c1_193 = arith.constant 1 : index
    %c0_194 = arith.constant 0 : index
    %208 = vector.load %arg25[%c1_193, %c0_194] : memref<2x256xf32, #tpu.memory_space<vmem>>, vector<1x128xf32>
    tpu.vector_store %arg25[%c1_193, %c0_194], %207 {strides = array<i32>} : memref<2x256xf32, #tpu.memory_space<vmem>>, vector<1x128xf32>,
    %209 = vector.extract_strided_slice %202 {offsets = [4, 0], sizes = [1, 128], strides = [1, 1]} : vector<5x128xf32> to vector<1x128xf32>
    %c1_195 = arith.constant 1 : index
    %c128_196 = arith.constant 128 : index
    %210 = vector.load %arg25[%c1_195, %c128_196] : memref<2x256xf32, #tpu.memory_space<vmem>>, vector<1x128xf32>
    tpu.vector_store %arg25[%c1_195, %c128_196], %209 {strides = array<i32>} : memref<2x256xf32, #tpu.memory_space<vmem>>, vector<1x128xf32>,
    %c0_197 = arith.constant 0 : index
    %c0_198 = arith.constant 0 : index
    %211 = vector.load %arg25[%c0_197, %c0_198] : memref<2x256xf32, #tpu.memory_space<vmem>>, vector<2x256xf32>
    %212 = arith.truncf %211 : vector<2x256xf32> to vector<2x256xbf16>
    %c0_199 = arith.constant 0 : index
    %c0_200 = arith.constant 0 : index
    %213 = vector.load %arg10[%c0_199, %c0_200] : memref<256x128xbf16, #tpu.memory_space<vmem>>, vector<256x128xbf16>
    %cst_201 = arith.constant dense<0.000000e+00> : vector<2x128xf32>
    %214 = tpu.matmul %212, %213, %cst_201 {dimension_numbers = #tpu.dot_dimension_numbers<[1], [0], [0], [1], [0, 0, 1, 1], [], []>} : vector<2x256xbf16>, vector<256x128xbf16>, vector<2x128xf32> -> vector<2x128xf32>
    %c0_202 = arith.constant 0 : index
    %c0_203 = arith.constant 0 : index
    %215 = vector.load %arg17[%c0_202, %c0_203] : memref<1x128xf32, #tpu.memory_space<vmem>>, vector<1x128xf32>
    %216 = vector.broadcast %215 : vector<1x128xf32> to vector<2x128xf32>
    %217 = arith.addf %214, %216 : vector<2x128xf32>
    %cst_204 = arith.constant 0.00999999977 : f32
    %218 = vector.broadcast %cst_204 : f32 to vector<2x128xf32>
    %219 = arith.mulf %218, %217 : vector<2x128xf32>
    %220 = arith.maximumf %217, %219 : vector<2x128xf32>
    %221 = arith.truncf %220 : vector<2x128xf32> to vector<2x128xbf16>
    %c0_205 = arith.constant 0 : index
    %c0_206 = arith.constant 0 : index
    %222 = vector.load %arg11[%c0_205, %c0_206] : memref<128x32xbf16, #tpu.memory_space<vmem>>, vector<128x32xbf16>
    %cst_207 = arith.constant dense<0.000000e+00> : vector<2x32xf32>
    %223 = tpu.matmul %221, %222, %cst_207 {dimension_numbers = #tpu.dot_dimension_numbers<[1], [0], [0], [1], [0, 0, 1, 1], [], []>} : vector<2x128xbf16>, vector<128x32xbf16>, vector<2x32xf32> -> vector<2x32xf32>
    %c0_208 = arith.constant 0 : index
    %c0_209 = arith.constant 0 : index
    %224 = vector.load %arg18[%c0_208, %c0_209] : memref<1x32xf32, #tpu.memory_space<vmem>>, vector<1x32xf32>
    %225 = vector.broadcast %224 : vector<1x32xf32> to vector<2x32xf32>
    %226 = arith.addf %223, %225 : vector<2x32xf32>
    %cst_210 = arith.constant 0.00999999977 : f32
    %227 = vector.broadcast %cst_210 : f32 to vector<2x32xf32>
    %228 = arith.mulf %227, %226 : vector<2x32xf32>
    %229 = arith.maximumf %226, %228 : vector<2x32xf32>
    %230 = arith.truncf %229 : vector<2x32xf32> to vector<2x32xbf16>
    %c0_211 = arith.constant 0 : index
    %c0_212 = arith.constant 0 : index
    %231 = vector.load %arg12[%c0_211, %c0_212] : memref<32x32xbf16, #tpu.memory_space<vmem>>, vector<32x32xbf16>
    %cst_213 = arith.constant dense<0.000000e+00> : vector<2x32xf32>
    %232 = tpu.matmul %230, %231, %cst_213 {dimension_numbers = #tpu.dot_dimension_numbers<[1], [0], [0], [1], [0, 0, 1, 1], [], []>} : vector<2x32xbf16>, vector<32x32xbf16>, vector<2x32xf32> -> vector<2x32xf32>
    %c0_214 = arith.constant 0 : index
    %c0_215 = arith.constant 0 : index
    %233 = vector.load %arg19[%c0_214, %c0_215] : memref<1x32xf32, #tpu.memory_space<vmem>>, vector<1x32xf32>
    %234 = vector.broadcast %233 : vector<1x32xf32> to vector<2x32xf32>
    %235 = arith.addf %232, %234 : vector<2x32xf32>
    %cst_216 = arith.constant 0.00999999977 : f32
    %236 = vector.broadcast %cst_216 : f32 to vector<2x32xf32>
    %237 = arith.mulf %236, %235 : vector<2x32xf32>
    %238 = arith.maximumf %235, %237 : vector<2x32xf32>
    %c0_217 = arith.constant 0 : index
    %c0_218 = arith.constant 0 : index
    %239 = vector.load %arg20[%c0_217, %c0_218] : memref<2x32xf32, #tpu.memory_space<vmem>>, vector<2x32xf32>
    tpu.vector_store %arg20[%c0_217, %c0_218], %238 {strides = array<i32>} : memref<2x32xf32, #tpu.memory_space<vmem>>, vector<2x32xf32>,
    return
  }
}

</mosaic_0001>

<llo_original>
// kernel: forward.1
$region0: #{forward.1}
  #allocation0 [shape = 'u32[]', space=smem, size = 0x4, offset = 0x4, fixed_abs, tag = 'smem constant byte address 0x4 - core index']
  #allocation1 [shape = 'u32[144,128]{1,0:T(1,128)}', space=vmem, size = 0x12000, scoped, tag = 'internal scratch']
  #allocation2 [shape = 'f32[36,192]{1,0:T(8,128)}', space=vmem, size = 0xa000, scoped, tag = 'scratch operand']
  #allocation3 [shape = 'f32[18,256]{1,0:T(8,128)}', space=vmem, size = 0x6000, scoped, tag = 'scratch operand']
  #allocation4 [shape = 'f32[10,256]{1,0:T(8,128)}', space=vmem, size = 0x4000, scoped, tag = 'scratch operand']
  #allocation5 [shape = 'f32[6,256]{1,0:T(8,128)}', space=vmem, size = 0x2000, scoped, tag = 'scratch operand']
  #allocation6 [shape = 'f32[2,256]{1,0:T(2,128)}', space=vmem, size = 0x800, scoped, tag = 'scratch operand']
  %s0 = inlined_call_operand.vmem [shape: f32[6,16,64], index: 0, kind: input, shape index: {}]
  %s1 = inlined_call_operand.hbm [shape: bf16[192,128], index: 1, kind: input, shape index: {}]
  %s2 = inlined_call_operand.hbm [shape: bf16[192,128], index: 2, kind: input, shape index: {}]
  %s3 = inlined_call_operand.hbm [shape: bf16[192,128], index: 3, kind: input, shape index: {}]
  %s4 = inlined_call_operand.vmem [shape: bf16[256,128], index: 4, kind: input, shape index: {}]
  %s5 = inlined_call_operand.hbm [shape: bf16[128,128], index: 5, kind: input, shape index: {}]
  %s6 = inlined_call_operand.vmem [shape: bf16[256,128], index: 6, kind: input, shape index: {}]
  %s7 = inlined_call_operand.hbm [shape: bf16[128,128], index: 7, kind: input, shape index: {}]
  %s8 = inlined_call_operand.vmem [shape: bf16[256,128], index: 8, kind: input, shape index: {}]
  %s9 = inlined_call_operand.hbm [shape: bf16[128,128], index: 9, kind: input, shape index: {}]
  %s10 = inlined_call_operand.hbm [shape: bf16[256,128], index: 10, kind: input, shape index: {}]
  %s11 = inlined_call_operand.vmem [shape: bf16[128,32], index: 11, kind: input, shape index: {}]
  %s12 = inlined_call_operand.vmem [shape: bf16[32,32], index: 12, kind: input, shape index: {}]
  %s13 = inlined_call_operand.vmem [shape: f32[1,128], index: 13, kind: input, shape index: {}]
  %s14 = inlined_call_operand.vmem [shape: f32[1,128], index: 14, kind: input, shape index: {}]
  %s15 = inlined_call_operand.vmem [shape: f32[1,128], index: 15, kind: input, shape index: {}]
  %s16 = inlined_call_operand.vmem [shape: f32[1,128], index: 16, kind: input, shape index: {}]
  %s17 = inlined_call_operand.vmem [shape: f32[1,128], index: 17, kind: input, shape index: {}]
  %s18 = inlined_call_operand.vmem [shape: f32[1,32], index: 18, kind: input, shape index: {}]
  %s19 = inlined_call_operand.vmem [shape: f32[1,32], index: 19, kind: input, shape index: {}]
  %s20 = inlined_call_operand.hbm [shape: f32[2,32], index: 20, kind: output, shape index: {}]
  %s21 = sld [smem:[#allocation0]]
  $region118: #{forward.1} parent=0
    _
  %s23 = ssub.s32 1, %s21
  %s24 = scalar_select 0, %s23, %s21
  $region1: #{forward.1} parent=0
    #allocation7 [shape = 'u8[49152]{0}', space=vmem, size = 0xc000, scoped, tag = 'input window, operand 1, single buffered']
    #allocation8 [shape = 's32[1]{0}', space=sflag, size = 0x4, scoped, tag = 'scoped memory for forward.1']
    #allocation9 [shape = 's32[1]{0}', space=sflag, size = 0x4, scoped, tag = 'scoped memory for forward.1']
    #allocation10 [shape = 'u8[49152]{0}', space=vmem, size = 0xc000, scoped, tag = 'input window, operand 2, single buffered']
    #allocation11 [shape = 's32[1]{0}', space=sflag, size = 0x4, scoped, tag = 'scoped memory for forward.1']
    #allocation12 [shape = 'u8[49152]{0}', space=vmem, size = 0xc000, scoped, tag = 'input window, operand 3, single buffered']
    #allocation13 [shape = 'u8[32768]{0}', space=vmem, size = 0x8000, scoped, tag = 'input window, operand 5, single buffered']
    #allocation14 [shape = 's32[1]{0}', space=sflag, size = 0x4, scoped, tag = 'scoped memory for forward.1']
    #allocation15 [shape = 'u8[32768]{0}', space=vmem, size = 0x8000, scoped, tag = 'input window, operand 7, single buffered']
    #allocation16 [shape = 'u8[32768]{0}', space=vmem, size = 0x8000, scoped, tag = 'input window, operand 9, single buffered']
    #allocation17 [shape = 's32[1]{0}', space=sflag, size = 0x4, scoped, tag = 'scoped memory for forward.1']
    #allocation18 [shape = 'u8[65536]{0}', space=vmem, size = 0x10000, scoped, tag = 'input window, operand 10, single buffered']
    #allocation19 [shape = 'u8[1024]{0}', space=vmem, size = 0x400, scoped, tag = 'output window, operand 0, single buffered']
    %25 = vsyncpa [#allocation8], 0
    %26 = vsyncpa [#allocation11], 0
    %27 = vsyncpa [#allocation14], 0
    %28 = vsyncpa [#allocation17], 0
    %29 = vsyncpa [#allocation9], 0
    // Predicated region
    $region2: #{forward.1} parent=1 // pred_check
      _
    $region3: #{forward.1} parent=1 // pred_check_branch
      %31 = sbr.rel (0) target = $region5
    $region4: #{forward.1} parent=1 // pred_region
      _
    $region5: #{forward.1} parent=1 // pred_fallthru
      _
    // Predicated region
    $region6: #{forward.1} parent=1 // pred_check
      _
    $region7: #{forward.1} parent=1 // pred_check_branch
      %33 = sbr.rel (0) target = $region9
    $region8: #{forward.1} parent=1 // pred_region
      %s35 = ssub.s32 1536, 1536
      %36 = vsyncadd [#allocation8], %s35
      %s37 = sshll.u32 [#allocation7], 4
      %s38 = int_to_ptr.vmem [resolvable:$true] %s37
      %43 = dma.hbm_to_vmem [thread:$0]  %s1, 1536, %s38, [#allocation8], 64, 64, 4
    $region9: #{forward.1} parent=1 // pred_fallthru
      _
    // Predicated region
    $region10: #{forward.1} parent=1 // pred_check
      _
    $region11: #{forward.1} parent=1 // pred_check_branch
      %45 = sbr.rel (0) target = $region13
    $region12: #{forward.1} parent=1 // pred_region
      %s47 = ssub.s32 1536, 1536
      %48 = vsyncadd [#allocation11], %s47
      %s49 = sshll.u32 [#allocation10], 4
      %s50 = int_to_ptr.vmem [resolvable:$true] %s49
      %55 = dma.hbm_to_vmem [thread:$0]  %s2, 1536, %s50, [#allocation11], 64, 64, 4
    $region13: #{forward.1} parent=1 // pred_fallthru
      _
    // Predicated region
    $region14: #{forward.1} parent=1 // pred_check
      _
    $region15: #{forward.1} parent=1 // pred_check_branch
      %57 = sbr.rel (0) target = $region17
    $region16: #{forward.1} parent=1 // pred_region
      %s59 = ssub.s32 1536, 1536
      %60 = vsyncadd [#allocation11], %s59
      %s61 = sshll.u32 [#allocation12], 4
      %s62 = int_to_ptr.vmem [resolvable:$true] %s61
      %67 = dma.hbm_to_vmem [thread:$0]  %s3, 1536, %s62, [#allocation11], 64, 64, 4
    $region17: #{forward.1} parent=1 // pred_fallthru
      _
    // Predicated region
    $region18: #{forward.1} parent=1 // pred_check
      _
    $region19: #{forward.1} parent=1 // pred_check_branch
      %69 = sbr.rel (0) target = $region21
    $region20: #{forward.1} parent=1 // pred_region
      _
    $region21: #{forward.1} parent=1 // pred_fallthru
      _
    // Predicated region
    $region22: #{forward.1} parent=1 // pred_check
      _
    $region23: #{forward.1} parent=1 // pred_check_branch
      %71 = sbr.rel (0) target = $region25
    $region24: #{forward.1} parent=1 // pred_region
      %s73 = ssub.s32 1024, 1024
      %74 = vsyncadd [#allocation14], %s73
      %s75 = sshll.u32 [#allocation13], 4
      %s76 = int_to_ptr.vmem [resolvable:$true] %s75
      %81 = dma.hbm_to_vmem [thread:$0]  %s5, 1024, %s76, [#allocation14], 64, 64, 4
    $region25: #{forward.1} parent=1 // pred_fallthru
      _
    // Predicated region
    $region26: #{forward.1} parent=1 // pred_check
      _
    $region27: #{forward.1} parent=1 // pred_check_branch
      %83 = sbr.rel (0) target = $region29
    $region28: #{forward.1} parent=1 // pred_region
      _
    $region29: #{forward.1} parent=1 // pred_fallthru
      _
    // Predicated region
    $region30: #{forward.1} parent=1 // pred_check
      _
    $region31: #{forward.1} parent=1 // pred_check_branch
      %85 = sbr.rel (0) target = $region33
    $region32: #{forward.1} parent=1 // pred_region
      %s87 = ssub.s32 1024, 1024
      %88 = vsyncadd [#allocation14], %s87
      %s89 = sshll.u32 [#allocation15], 4
      %s90 = int_to_ptr.vmem [resolvable:$true] %s89
      %95 = dma.hbm_to_vmem [thread:$0]  %s7, 1024, %s90, [#allocation14], 64, 64, 4
    $region33: #{forward.1} parent=1 // pred_fallthru
      _
    // Predicated region
    $region34: #{forward.1} parent=1 // pred_check
      _
    $region35: #{forward.1} parent=1 // pred_check_branch
      %97 = sbr.rel (0) target = $region37
    $region36: #{forward.1} parent=1 // pred_region
      _
    $region37: #{forward.1} parent=1 // pred_fallthru
      _
    // Predicated region
    $region38: #{forward.1} parent=1 // pred_check
      _
    $region39: #{forward.1} parent=1 // pred_check_branch
      %99 = sbr.rel (0) target = $region41
    $region40: #{forward.1} parent=1 // pred_region
      %s101 = ssub.s32 1024, 1024
      %102 = vsyncadd [#allocation17], %s101
      %s103 = sshll.u32 [#allocation16], 4
      %s104 = int_to_ptr.vmem [resolvable:$true] %s103
      %109 = dma.hbm_to_vmem [thread:$0]  %s9, 1024, %s104, [#allocation17], 64, 64, 4
    $region41: #{forward.1} parent=1 // pred_fallthru
      _
    // Predicated region
    $region42: #{forward.1} parent=1 // pred_check
      _
    $region43: #{forward.1} parent=1 // pred_check_branch
      %111 = sbr.rel (0) target = $region45
    $region44: #{forward.1} parent=1 // pred_region
      %s113 = ssub.s32 2048, 2048
      %114 = vsyncadd [#allocation17], %s113
      %s115 = sshll.u32 [#allocation18], 4
      %s116 = int_to_ptr.vmem [resolvable:$true] %s115
      %121 = dma.hbm_to_vmem [thread:$0]  %s10, 2048, %s116, [#allocation17], 64, 64, 4
    $region45: #{forward.1} parent=1 // pred_fallthru
      _
    // Predicated region
    $region46: #{forward.1} parent=1 // pred_check
      _
    $region47: #{forward.1} parent=1 // pred_check_branch
      %123 = sbr.rel (0) target = $region49
    $region48: #{forward.1} parent=1 // pred_region
      _
    $region49: #{forward.1} parent=1 // pred_fallthru
      _
    // Predicated region
    $region50: #{forward.1} parent=1 // pred_check
      _
    $region51: #{forward.1} parent=1 // pred_check_branch
      %125 = sbr.rel (0) target = $region53
    $region52: #{forward.1} parent=1 // pred_region
      _
    $region53: #{forward.1} parent=1 // pred_fallthru
      _
    // Predicated region
    $region54: #{forward.1} parent=1 // pred_check
      _
    $region55: #{forward.1} parent=1 // pred_check_branch
      %127 = sbr.rel (0) target = $region57
    $region56: #{forward.1} parent=1 // pred_region
      _
    $region57: #{forward.1} parent=1 // pred_fallthru
      _
    // Predicated region
    $region58: #{forward.1} parent=1 // pred_check
      _
    $region59: #{forward.1} parent=1 // pred_check_branch
      %129 = sbr.rel (0) target = $region61
    $region60: #{forward.1} parent=1 // pred_region
      _
    $region61: #{forward.1} parent=1 // pred_fallthru
      _
    // Predicated region
    $region62: #{forward.1} parent=1 // pred_check
      _
    $region63: #{forward.1} parent=1 // pred_check_branch
      %131 = sbr.rel (0) target = $region65
    $region64: #{forward.1} parent=1 // pred_region
      _
    $region65: #{forward.1} parent=1 // pred_fallthru
      _
    // Predicated region
    $region66: #{forward.1} parent=1 // pred_check
      _
    $region67: #{forward.1} parent=1 // pred_check_branch
      %133 = sbr.rel (0) target = $region69
    $region68: #{forward.1} parent=1 // pred_region
      _
    $region69: #{forward.1} parent=1 // pred_fallthru
      _
    // Predicated region
    $region70: #{forward.1} parent=1 // pred_check
      _
    $region71: #{forward.1} parent=1 // pred_check_branch
      %135 = sbr.rel (0) target = $region73
    $region72: #{forward.1} parent=1 // pred_region
      _
    $region73: #{forward.1} parent=1 // pred_fallthru
      _
    // Predicated region
    $region74: #{forward.1} parent=1 // pred_check
      _
    $region75: #{forward.1} parent=1 // pred_check_branch
      %137 = sbr.rel (0) target = $region77
    $region76: #{forward.1} parent=1 // pred_region
      _
    $region77: #{forward.1} parent=1 // pred_fallthru
      _
    // Predicated region
    $region78: #{forward.1} parent=1 // pred_check
      _
    $region79: #{forward.1} parent=1 // pred_check_branch
      %139 = sbr.rel (0) target = $region81
    $region80: #{forward.1} parent=1 // pred_region
      _
    $region81: #{forward.1} parent=1 // pred_fallthru
      _
    // Predicated region
    $region82: #{forward.1} parent=1 // pred_check
      _
    $region83: #{forward.1} parent=1 // pred_check_branch
      %141 = sbr.rel (0) target = $region85
    $region84: #{forward.1} parent=1 // pred_region
      %142 = dma.done [#allocation8], 1536
    $region85: #{forward.1} parent=1 // pred_fallthru
      _
    // Predicated region
    $region86: #{forward.1} parent=1 // pred_check
      _
    $region87: #{forward.1} parent=1 // pred_check_branch
      %144 = sbr.rel (0) target = $region89
    $region88: #{forward.1} parent=1 // pred_region
      %145 = dma.done [#allocation11], 1536
    $region89: #{forward.1} parent=1 // pred_fallthru
      _
    // Predicated region
    $region90: #{forward.1} parent=1 // pred_check
      _
    $region91: #{forward.1} parent=1 // pred_check_branch
      %147 = sbr.rel (0) target = $region93
    $region92: #{forward.1} parent=1 // pred_region
      %148 = dma.done [#allocation11], 1536
    $region93: #{forward.1} parent=1 // pred_fallthru
      _
    // Predicated region
    $region94: #{forward.1} parent=1 // pred_check
      _
    $region95: #{forward.1} parent=1 // pred_check_branch
      %150 = sbr.rel (0) target = $region97
    $region96: #{forward.1} parent=1 // pred_region
      %151 = dma.done [#allocation14], 1024
    $region97: #{forward.1} parent=1 // pred_fallthru
      _
    // Predicated region
    $region98: #{forward.1} parent=1 // pred_check
      _
    $region99: #{forward.1} parent=1 // pred_check_branch
      %153 = sbr.rel (0) target = $region101
    $region100: #{forward.1} parent=1 // pred_region
      %154 = dma.done [#allocation14], 1024
    $region101: #{forward.1} parent=1 // pred_fallthru
      _
    // Predicated region
    $region102: #{forward.1} parent=1 // pred_check
      _
    $region103: #{forward.1} parent=1 // pred_check_branch
      %156 = sbr.rel (0) target = $region105
    $region104: #{forward.1} parent=1 // pred_region
      %157 = dma.done [#allocation17], 1024
    $region105: #{forward.1} parent=1 // pred_fallthru
      _
    // Predicated region
    $region106: #{forward.1} parent=1 // pred_check
      _
    $region107: #{forward.1} parent=1 // pred_check_branch
      %159 = sbr.rel (0) target = $region109
    $region108: #{forward.1} parent=1 // pred_region
      %160 = dma.done [#allocation17], 2048
    $region109: #{forward.1} parent=1 // pred_fallthru
      _
    %162 = vst [vmem:[#allocation2] sm:$0xff] 0.0
    %vm163 = vcmask 523264
    %164 = vst.msk [vmem:[#allocation2 + $0x8] sm:$0xff] %vm163, 0.0
    %165 = vst [vmem:[#allocation2 + $0x10] sm:$0xff] 0.0
    %166 = vst.msk [vmem:[#allocation2 + $0x18] sm:$0xff] %vm163, 0.0
    %167 = vst [vmem:[#allocation2 + $0x20] sm:$0xff] 0.0
    %168 = vst.msk [vmem:[#allocation2 + $0x28] sm:$0xff] %vm163, 0.0
    %169 = vst [vmem:[#allocation2 + $0x30] sm:$0xff] 0.0
    %170 = vst.msk [vmem:[#allocation2 + $0x38] sm:$0xff] %vm163, 0.0
    %171 = vst [vmem:[#allocation2 + $0x40] sm:$0xf] 0.0
    %vm172 = vcmask 519168
    %173 = vst.msk [vmem:[#allocation2 + $0x48] sm:$0xf] %vm172, 0.0
    %174 = vst [vmem:[#allocation3] sm:$0xff] 0.0
    %175 = vst [vmem:[#allocation3 + $0x8] sm:$0xff] 0.0
    %176 = vst [vmem:[#allocation3 + $0x10] sm:$0xff] 0.0
    %177 = vst [vmem:[#allocation3 + $0x18] sm:$0xff] 0.0
    %178 = vst [vmem:[#allocation3 + $0x20] sm:$0x3] 0.0
    %179 = vst [vmem:[#allocation3 + $0x28] sm:$0x3] 0.0
    %180 = vst [vmem:[#allocation4] sm:$0xff] 0.0
    %181 = vst [vmem:[#allocation4 + $0x8] sm:$0xff] 0.0
    %182 = vst [vmem:[#allocation4 + $0x10] sm:$0x3] 0.0
    %183 = vst [vmem:[#allocation4 + $0x18] sm:$0x3] 0.0
    %184 = vst [vmem:[#allocation5] sm:$0x3f] 0.0
    %185 = vst [vmem:[#allocation5 + $0x8] sm:$0x3f] 0.0
    %v186 = vld [vmem:[%s0] sm:$0xff]
    %v187 = vld [vmem:[%s0 + $0x8] sm:$0xff]
    %vm190 = vcmask 1040384
    %v191 = vrot.slane %v186, 7
    %v192 = vrot.slane %v187, 7
    %v193 = vsel %vm190, %v191, %v192
    %vm197 = vcmask 523265
    %198 = vst.msk [vmem:[#allocation2] sm:$0xfe] %vm197, %v191
    %199 = vst.msk [vmem:[#allocation2 + $0x10] sm:$0xff] %vm163, %v193
    %vm200 = vcmask 516096
    %201 = vst.msk [vmem:[#allocation2 + $0x20] sm:$0x1] %vm200, %v192
    %s202 = scalar_lea.vmem %s0, 16
    %v203 = vld [vmem:[%s202] sm:$0xff]
    %v204 = vld [vmem:[%s202 + $0x8] sm:$0xff]
    %v207 = vrot.slane %v203, 7
    %v208 = vrot.slane %v204, 7
    %v209 = vsel %vm190, %v207, %v208
    %210 = vrot.lane.b32.xlu0 %v207, 64
    %v211 = vpop.permute.xlu0 %210
    %212 = vrot.lane.b32.xlu0 %v209, 64
    %v213 = vpop.permute.xlu0 %212
    %214 = vrot.lane.b32.xlu0 %v208, 64
    %v215 = vpop.permute.xlu0 %214
    %vm219 = vcmask 1048065
    %220 = vst.msk [vmem:[#allocation2] sm:$0xfe] %vm219, %v211
    %vm221 = vcmask 1048064
    %222 = vst.msk [vmem:[#allocation2 + $0x10] sm:$0xff] %vm221, %v213
    %vm223 = vcmask 1040896
    %224 = vst.msk [vmem:[#allocation2 + $0x20] sm:$0x1] %vm223, %v215
    %s225 = scalar_lea.vmem %s0, 32
    %v226 = vld [vmem:[%s225] sm:$0xff]
    %v227 = vld [vmem:[%s225 + $0x8] sm:$0xff]
    %v230 = vrot.slane %v226, 7
    %v231 = vrot.slane %v227, 7
    %v232 = vsel %vm190, %v230, %v231
    %236 = vst.msk [vmem:[#allocation2 + $0x8] sm:$0xfe] %vm197, %v230
    %237 = vst.msk [vmem:[#allocation2 + $0x18] sm:$0xff] %vm163, %v232
    %238 = vst.msk [vmem:[#allocation2 + $0x28] sm:$0x1] %vm200, %v231
    %s239 = scalar_lea.vmem %s0, 48
    %v240 = vld [vmem:[%s239] sm:$0xff]
    %v241 = vld [vmem:[%s239 + $0x8] sm:$0xff]
    %vm244 = vcmask 1042432
    %v245 = vrot.slane %v240, 5
    %v246 = vrot.slane %v241, 5
    %v247 = vsel %vm244, %v245, %v246
    %vm251 = vcmask 523267
    %252 = vst.msk [vmem:[#allocation2 + $0x20] sm:$0xf8] %vm251, %v245
    %253 = vst.msk [vmem:[#allocation2 + $0x30] sm:$0xff] %vm163, %v247
    %vm254 = vcmask 518144
    %255 = vst.msk [vmem:[#allocation2 + $0x40] sm:$0x7] %vm254, %v246
    %s256 = scalar_lea.vmem %s0, 64
    %v257 = vld [vmem:[%s256] sm:$0xff]
    %v258 = vld [vmem:[%s256 + $0x8] sm:$0xff]
    %v261 = vrot.slane %v257, 5
    %v262 = vrot.slane %v258, 5
    %v263 = vsel %vm244, %v261, %v262
    %264 = vrot.lane.b32.xlu0 %v261, 64
    %v265 = vpop.permute.xlu0 %264
    %266 = vrot.lane.b32.xlu0 %v263, 64
    %v267 = vpop.permute.xlu0 %266
    %268 = vrot.lane.b32.xlu0 %v262, 64
    %v269 = vpop.permute.xlu0 %268
    %vm273 = vcmask 1048067
    %274 = vst.msk [vmem:[#allocation2 + $0x20] sm:$0xf8] %vm273, %v265
    %275 = vst.msk [vmem:[#allocation2 + $0x30] sm:$0xff] %vm221, %v267
    %vm276 = vcmask 1042944
    %277 = vst.msk [vmem:[#allocation2 + $0x40] sm:$0x7] %vm276, %v269
    %s278 = scalar_lea.vmem %s0, 80
    %v279 = vld [vmem:[%s278] sm:$0xff]
    %v280 = vld [vmem:[%s278 + $0x8] sm:$0xff]
    %v283 = vrot.slane %v279, 5
    %v284 = vrot.slane %v280, 5
    %v285 = vsel %vm244, %v283, %v284
    %289 = vst.msk [vmem:[#allocation2 + $0x28] sm:$0xf8] %vm251, %v283
    %290 = vst.msk [vmem:[#allocation2 + $0x38] sm:$0xff] %vm163, %v285
    %291 = vst.msk [vmem:[#allocation2 + $0x48] sm:$0x7] %vm254, %v284
    %v292 = vld [vmem:[#allocation2] sm:$0xff]
    %v293 = vld [vmem:[#allocation2 + $0x8] sm:$0xff]
    %v294 = vld [vmem:[#allocation2 + $0x10] sm:$0xff]
    %v295 = vld [vmem:[#allocation2 + $0x18] sm:$0xff]
    %v296 = vld [vmem:[#allocation2 + $0x20] sm:$0xff]
    %v297 = vld [vmem:[#allocation2 + $0x28] sm:$0xff]
    %v298 = vld [vmem:[#allocation2 + $0x30] sm:$0xff]
    %v299 = vld [vmem:[#allocation2 + $0x38] sm:$0xff]
    %v300 = vld [vmem:[#allocation2 + $0x40] sm:$0x3]
    %v301 = vld [vmem:[#allocation2 + $0x48] sm:$0x3]
    %v302 = vpack.c.bf16 %v294, %v292
    %v303 = vpack.c.bf16 %v295, %v293
    %v304 = vpack.c.bf16 %v298, %v296
    %v305 = vpack.c.bf16 %v299, %v297
    %v306 = vpack.c.bf16 %v300, %v300
    %v307 = vpack.c.bf16 %v301, %v301
    %v308 = vld [vmem:[#allocation7] sm:$0xf]
    %v309 = vld [vmem:[#allocation7 + $0x4] sm:$0xf]
    %v310 = vld [vmem:[#allocation7 + $0x8] sm:$0xf]
    %v311 = vld [vmem:[#allocation7 + $0xc] sm:$0xf]
    %v312 = vld [vmem:[#allocation7 + $0x10] sm:$0xf]
    %v313 = vld [vmem:[#allocation7 + $0x14] sm:$0xf]
    %v314 = vld [vmem:[#allocation7 + $0x18] sm:$0xf]
    %v315 = vld [vmem:[#allocation7 + $0x1c] sm:$0xf]
    %v316 = vld [vmem:[#allocation7 + $0x20] sm:$0xf]
    %v317 = vld [vmem:[#allocation7 + $0x24] sm:$0xf]
    %v318 = vld [vmem:[#allocation7 + $0x28] sm:$0xf]
    %v319 = vld [vmem:[#allocation7 + $0x2c] sm:$0xf]
    %v320 = vld [vmem:[#allocation7 + $0x30] sm:$0xf]
    %v321 = vld [vmem:[#allocation7 + $0x34] sm:$0xf]
    %v322 = vld [vmem:[#allocation7 + $0x38] sm:$0xf]
    %v323 = vld [vmem:[#allocation7 + $0x3c] sm:$0xf]
    %v324 = vld [vmem:[#allocation7 + $0x40] sm:$0xf]
    %v325 = vld [vmem:[#allocation7 + $0x44] sm:$0xf]
    %v326 = vld [vmem:[#allocation7 + $0x48] sm:$0xf]
    %v327 = vld [vmem:[#allocation7 + $0x4c] sm:$0xf]
    %v328 = vld [vmem:[#allocation7 + $0x50] sm:$0xf]
    %v329 = vld [vmem:[#allocation7 + $0x54] sm:$0xf]
    %v330 = vld [vmem:[#allocation7 + $0x58] sm:$0xf]
    %v331 = vld [vmem:[#allocation7 + $0x5c] sm:$0xf]
    %v332 = vld [vmem:[#allocation2] sm:$0xfe]
    %v333 = vld [vmem:[#allocation2 + $0x8] sm:$0xfe]
    %v334 = vld [vmem:[#allocation2 + $0x40] sm:$0x7]
    %v335 = vld [vmem:[#allocation2 + $0x48] sm:$0x7]
    %v336 = vpack.c.bf16 %v294, %v332
    %v337 = vpack.c.bf16 %v295, %v333
    %v338 = vpack.c.bf16 %v334, %v334
    %v339 = vpack.c.bf16 %v335, %v335
    %v340 = vld [vmem:[#allocation10] sm:$0xf]
    %v341 = vld [vmem:[#allocation10 + $0x4] sm:$0xf]
    %v342 = vld [vmem:[#allocation10 + $0x8] sm:$0xf]
    %v343 = vld [vmem:[#allocation10 + $0xc] sm:$0xf]
    %v344 = vld [vmem:[#allocation10 + $0x10] sm:$0xf]
    %v345 = vld [vmem:[#allocation10 + $0x14] sm:$0xf]
    %v346 = vld [vmem:[#allocation10 + $0x18] sm:$0xf]
    %v347 = vld [vmem:[#allocation10 + $0x1c] sm:$0xf]
    %v348 = vld [vmem:[#allocation10 + $0x20] sm:$0xf]
    %v349 = vld [vmem:[#allocation10 + $0x24] sm:$0xf]
    %v350 = vld [vmem:[#allocation10 + $0x28] sm:$0xf]
    %v351 = vld [vmem:[#allocation10 + $0x2c] sm:$0xf]
    %v352 = vld [vmem:[#allocation10 + $0x30] sm:$0xf]
    %v353 = vld [vmem:[#allocation10 + $0x34] sm:$0xf]
    %v354 = vld [vmem:[#allocation10 + $0x38] sm:$0xf]
    %v355 = vld [vmem:[#allocation10 + $0x3c] sm:$0xf]
    %v356 = vld [vmem:[#allocation10 + $0x40] sm:$0xf]
    %v357 = vld [vmem:[#allocation10 + $0x44] sm:$0xf]
    %v358 = vld [vmem:[#allocation10 + $0x48] sm:$0xf]
    %v359 = vld [vmem:[#allocation10 + $0x4c] sm:$0xf]
    %v360 = vld [vmem:[#allocation10 + $0x50] sm:$0xf]
    %v361 = vld [vmem:[#allocation10 + $0x54] sm:$0xf]
    %v362 = vld [vmem:[#allocation10 + $0x58] sm:$0xf]
    %v363 = vld [vmem:[#allocation10 + $0x5c] sm:$0xf]
    %vm364 = vsmask.f32 7424
    %v366 = vshrl.u32 %v336, 16
    %v368 = vshll.u32 %v336, 16
    %v370 = vrot.slane %v368, 1
    %v371 = vor.u32 %v366, %v370
    %v373 = vshll.u32 %v304, 16
    %v375 = vrot.slane %v373, 1
    %v376 = vsel %vm364, %v371, %v375
    %v378 = vshrl.u32 %v337, 16
    %v380 = vshll.u32 %v337, 16
    %v382 = vrot.slane %v380, 1
    %v383 = vor.u32 %v378, %v382
    %v385 = vshll.u32 %v305, 16
    %v387 = vrot.slane %v385, 1
    %v388 = vsel %vm364, %v383, %v387
    %v389 = vshrl.u32 %v304, 16
    %v391 = vor.u32 %v389, %v375
    %v393 = vshll.u32 %v338, 16
    %v395 = vrot.slane %v393, 1
    %v396 = vsel %vm364, %v391, %v395
    %v397 = vshrl.u32 %v305, 16
    %v399 = vor.u32 %v397, %v387
    %v401 = vshll.u32 %v339, 16
    %v403 = vrot.slane %v401, 1
    %v404 = vsel %vm364, %v399, %v403
    %v405 = vshrl.u32 %v338, 16
    %v407 = vor.u32 %v405, %v395
    %v408 = vshrl.u32 %v339, 16
    %v410 = vor.u32 %v408, %v403
    %v438 = vunpack.c.l.b16 %v340
    %v439 = vunpack.c.l.b16 %v341
    %v440 = vunpack.c.l.b16 %v342
    %v441 = vunpack.c.l.b16 %v343
    %v442 = vunpack.c.l.b16 %v344
    %v443 = vunpack.c.l.b16 %v345
    %v444 = vunpack.c.l.b16 %v346
    %v445 = vunpack.c.l.b16 %v347
    %v446 = vunpack.c.l.b16 %v348
    %v447 = vunpack.c.l.b16 %v349
    %v448 = vunpack.c.l.b16 %v350
    %v449 = vunpack.c.l.b16 %v351
    %v450 = vunpack.c.l.b16 %v352
    %v451 = vunpack.c.l.b16 %v353
    %v452 = vunpack.c.l.b16 %v354
    %v453 = vunpack.c.l.b16 %v355
    %v454 = vunpack.c.l.b16 %v356
    %v455 = vunpack.c.l.b16 %v357
    %v456 = vunpack.c.l.b16 %v358
    %v457 = vunpack.c.l.b16 %v359
    %v458 = vunpack.c.l.b16 %v360
    %v459 = vunpack.c.l.b16 %v361
    %v460 = vunpack.c.l.b16 %v362
    %v461 = vunpack.c.l.b16 %v363
    %v462 = vpack.c.b16 %v439, %v438
    %v463 = vpack.c.b16 %v441, %v440
    %v464 = vpack.c.b16 %v443, %v442
    %v465 = vpack.c.b16 %v445, %v444
    %v466 = vpack.c.b16 %v447, %v446
    %v467 = vpack.c.b16 %v449, %v448
    %v468 = vpack.c.b16 %v451, %v450
    %v469 = vpack.c.b16 %v453, %v452
    %v470 = vpack.c.b16 %v455, %v454
    %v471 = vpack.c.b16 %v457, %v456
    %v472 = vpack.c.b16 %v459, %v458
    %v473 = vpack.c.b16 %v461, %v460
    %v487 = vsel %vm163, %v388, 0
    %v490 = vsel %vm163, %v404, 0
    %v493 = vsel %vm163, %v410, 0
    %495 = vmatprep.subr.bf16.mxu0 0
    %496 = vmatpush1.bf16.msra.mxu0 %v462
    %497 = vmatprep.subr.bf16.mxu0 0
    %498 = vmatpush1.bf16.msra.mxu0 %v463
    %499 = vmatprep.subr.bf16.mxu0 0
    %500 = vmatpush1.bf16.msra.mxu0 %v464
    %501 = vmatprep.subr.bf16.mxu0 0
    %502 = vmatpush1.bf16.msra.mxu0 %v465
    %503 = vmatprep.subr.bf16.mxu0 0
    %504 = vmatpush1.bf16.msra.mxu0 %v466
    %505 = vmatprep.subr.bf16.mxu0 0
    %506 = vmatpush1.bf16.msra.mxu0 %v467
    %507 = vmatprep.subr.bf16.mxu0 0
    %508 = vmatpush1.bf16.msra.mxu0 %v468
    %509 = vmatprep.subr.bf16.mxu0 0
    %510 = vmatpush1.bf16.msra.mxu0 %v469
    %511 = vmatprep.subr.bf16.mxu0 0
    %512 = vmatpush1.bf16.msra.mxu0 %v470
    %513 = vmatprep.subr.bf16.mxu0 0
    %514 = vmatpush1.bf16.msra.mxu0 %v471
    %515 = vmatprep.subr.bf16.mxu0 0
    %516 = vmatpush1.bf16.msra.mxu0 %v472
    %517 = vmatprep.subr.bf16.mxu0 0
    %518 = vmatpush1.bf16.msra.mxu0 %v473
    %519 = vmatprep.subr.bf16.mxu0 0
    %520 = vmatpush1.bf16.msra.mxu0 0
    %521 = vmatprep.subr.bf16.mxu0 0
    %522 = vmatpush1.bf16.msra.mxu0 0
    %523 = vmatprep.subr.bf16.mxu0 0
    %524 = vmatpush1.bf16.msra.mxu0 0
    %525 = vmatprep.subr.bf16.mxu0 0
    %526 = vmatpush1.bf16.msra.mxu0 0
    %527 = vmatprep.mubr.bf16.mxu0 %v487
    %528 = vmatmul.mubr.bf16.gmra.mrb[0].mxu0 %v376
    %v529 = vpop.f32.mrb[0].mxu0
    %v530 = vadd.f32 0.0, %v529
    %v531 = vpop.f32.mrb[0].mxu0
    %v532 = vpop.f32.mrb[0].mxu0
    %v533 = vadd.f32 0.0, %v532
    %v534 = vpop.f32.mrb[0].mxu0
    %535 = vmatprep.mubr.bf16.mxu0 %v490
    %536 = vmatmul.mubr.bf16.gmra.mrb[0].mxu0 %v396
    %v537 = vpop.f32.mrb[0].mxu0
    %v538 = vadd.f32 0.0, %v537
    %v539 = vpop.f32.mrb[0].mxu0
    %v540 = vpop.f32.mrb[0].mxu0
    %v541 = vadd.f32 0.0, %v540
    %v542 = vpop.f32.mrb[0].mxu0
    %543 = vmatprep.mubr.bf16.mxu0 %v493
    %544 = vmatmul.mubr.bf16.gmra.mrb[0].mxu0 %v407
    %v545 = vpop.f32.mrb[0].mxu0
    %v546 = vadd.f32 0.0, %v545
    %v547 = vpop.f32.mrb[0].mxu0
    %v548 = vpop.f32.mrb[0].mxu0
    %v549 = vpop.f32.mrb[0].mxu0
    %550 = vdwg.mxu0
    %v575 = vunpack.c.l.b16 %v308
    %v576 = vunpack.c.l.b16 %v309
    %v577 = vunpack.c.l.b16 %v310
    %v578 = vunpack.c.l.b16 %v311
    %v579 = vunpack.c.l.b16 %v312
    %v580 = vunpack.c.l.b16 %v313
    %v581 = vunpack.c.l.b16 %v314
    %v582 = vunpack.c.l.b16 %v315
    %v583 = vunpack.c.l.b16 %v316
    %v584 = vunpack.c.l.b16 %v317
    %v585 = vunpack.c.l.b16 %v318
    %v586 = vunpack.c.l.b16 %v319
    %v587 = vunpack.c.l.b16 %v320
    %v588 = vunpack.c.l.b16 %v321
    %v589 = vunpack.c.l.b16 %v322
    %v590 = vunpack.c.l.b16 %v323
    %v591 = vunpack.c.l.b16 %v324
    %v592 = vunpack.c.l.b16 %v325
    %v593 = vunpack.c.l.b16 %v326
    %v594 = vunpack.c.l.b16 %v327
    %v595 = vunpack.c.l.b16 %v328
    %v596 = vunpack.c.l.b16 %v329
    %v597 = vunpack.c.l.b16 %v330
    %v598 = vunpack.c.l.b16 %v331
    %v599 = vpack.c.b16 %v576, %v575
    %v600 = vpack.c.b16 %v578, %v577
    %v601 = vpack.c.b16 %v580, %v579
    %v602 = vpack.c.b16 %v582, %v581
    %v603 = vpack.c.b16 %v584, %v583
    %v604 = vpack.c.b16 %v586, %v585
    %v605 = vpack.c.b16 %v588, %v587
    %v606 = vpack.c.b16 %v590, %v589
    %v607 = vpack.c.b16 %v592, %v591
    %v608 = vpack.c.b16 %v594, %v593
    %v609 = vpack.c.b16 %v596, %v595
    %v610 = vpack.c.b16 %v598, %v597
    %v624 = vsel %vm163, %v303, 0
    %v626 = vsel %vm163, %v305, 0
    %v629 = vsel %vm163, %v307, 0
    %631 = vmatprep.subr.bf16.mxu0 0
    %632 = vmatpush1.bf16.msra.mxu0 %v599
    %633 = vmatprep.subr.bf16.mxu0 0
    %634 = vmatpush1.bf16.msra.mxu0 %v600
    %635 = vmatprep.subr.bf16.mxu0 0
    %636 = vmatpush1.bf16.msra.mxu0 %v601
    %637 = vmatprep.subr.bf16.mxu0 0
    %638 = vmatpush1.bf16.msra.mxu0 %v602
    %639 = vmatprep.subr.bf16.mxu0 0
    %640 = vmatpush1.bf16.msra.mxu0 %v603
    %641 = vmatprep.subr.bf16.mxu0 0
    %642 = vmatpush1.bf16.msra.mxu0 %v604
    %643 = vmatprep.subr.bf16.mxu0 0
    %644 = vmatpush1.bf16.msra.mxu0 %v605
    %645 = vmatprep.subr.bf16.mxu0 0
    %646 = vmatpush1.bf16.msra.mxu0 %v606
    %647 = vmatprep.subr.bf16.mxu0 0
    %648 = vmatpush1.bf16.msra.mxu0 %v607
    %649 = vmatprep.subr.bf16.mxu0 0
    %650 = vmatpush1.bf16.msra.mxu0 %v608
    %651 = vmatprep.subr.bf16.mxu0 0
    %652 = vmatpush1.bf16.msra.mxu0 %v609
    %653 = vmatprep.subr.bf16.mxu0 0
    %654 = vmatpush1.bf16.msra.mxu0 %v610
    %655 = vmatprep.subr.bf16.mxu0 0
    %656 = vmatpush1.bf16.msra.mxu0 0
    %657 = vmatprep.subr.bf16.mxu0 0
    %658 = vmatpush1.bf16.msra.mxu0 0
    %659 = vmatprep.subr.bf16.mxu0 0
    %660 = vmatpush1.bf16.msra.mxu0 0
    %661 = vmatprep.subr.bf16.mxu0 0
    %662 = vmatpush1.bf16.msra.mxu0 0
    %663 = vmatprep.mubr.bf16.mxu0 %v624
    %664 = vmatmul.mubr.bf16.gmra.mrb[0].mxu0 %v302
    %v665 = vpop.f32.mrb[0].mxu0
    %v666 = vadd.f32 %v530, %v665
    %v667 = vpop.f32.mrb[0].mxu0
    %v668 = vpop.f32.mrb[0].mxu0
    %v669 = vadd.f32 %v533, %v668
    %v670 = vpop.f32.mrb[0].mxu0
    %671 = vmatprep.mubr.bf16.mxu0 %v626
    %672 = vmatmul.mubr.bf16.gmra.mrb[0].mxu0 %v304
    %v673 = vpop.f32.mrb[0].mxu0
    %v674 = vadd.f32 %v538, %v673
    %v675 = vpop.f32.mrb[0].mxu0
    %v676 = vpop.f32.mrb[0].mxu0
    %v677 = vadd.f32 %v541, %v676
    %v678 = vpop.f32.mrb[0].mxu0
    %679 = vmatprep.mubr.bf16.mxu0 %v629
    %680 = vmatmul.mubr.bf16.gmra.mrb[0].mxu0 %v306
    %v681 = vpop.f32.mrb[0].mxu0
    %v682 = vadd.f32 %v546, %v681
    %v683 = vpop.f32.mrb[0].mxu0
    %v684 = vpop.f32.mrb[0].mxu0
    %v685 = vpop.f32.mrb[0].mxu0
    %686 = vdwg.mxu0
    %v687 = vld [vmem:[#allocation2] sm:$0xfc]
    %v688 = vld [vmem:[#allocation2 + $0x8] sm:$0xfc]
    %v689 = vld [vmem:[#allocation2 + $0x40] sm:$0xf]
    %v690 = vld [vmem:[#allocation2 + $0x48] sm:$0xf]
    %v691 = vpack.c.bf16 %v294, %v687
    %v692 = vpack.c.bf16 %v295, %v688
    %v693 = vpack.c.bf16 %v689, %v689
    %v694 = vpack.c.bf16 %v690, %v690
    %v695 = vld [vmem:[#allocation12] sm:$0xf]
    %v696 = vld [vmem:[#allocation12 + $0x4] sm:$0xf]
    %v697 = vld [vmem:[#allocation12 + $0x8] sm:$0xf]
    %v698 = vld [vmem:[#allocation12 + $0xc] sm:$0xf]
    %v699 = vld [vmem:[#allocation12 + $0x10] sm:$0xf]
    %v700 = vld [vmem:[#allocation12 + $0x14] sm:$0xf]
    %v701 = vld [vmem:[#allocation12 + $0x18] sm:$0xf]
    %v702 = vld [vmem:[#allocation12 + $0x1c] sm:$0xf]
    %v703 = vld [vmem:[#allocation12 + $0x20] sm:$0xf]
    %v704 = vld [vmem:[#allocation12 + $0x24] sm:$0xf]
    %v705 = vld [vmem:[#allocation12 + $0x28] sm:$0xf]
    %v706 = vld [vmem:[#allocation12 + $0x2c] sm:$0xf]
    %v707 = vld [vmem:[#allocation12 + $0x30] sm:$0xf]
    %v708 = vld [vmem:[#allocation12 + $0x34] sm:$0xf]
    %v709 = vld [vmem:[#allocation12 + $0x38] sm:$0xf]
    %v710 = vld [vmem:[#allocation12 + $0x3c] sm:$0xf]
    %v711 = vld [vmem:[#allocation12 + $0x40] sm:$0xf]
    %v712 = vld [vmem:[#allocation12 + $0x44] sm:$0xf]
    %v713 = vld [vmem:[#allocation12 + $0x48] sm:$0xf]
    %v714 = vld [vmem:[#allocation12 + $0x4c] sm:$0xf]
    %v715 = vld [vmem:[#allocation12 + $0x50] sm:$0xf]
    %v716 = vld [vmem:[#allocation12 + $0x54] sm:$0xf]
    %v717 = vld [vmem:[#allocation12 + $0x58] sm:$0xf]
    %v718 = vld [vmem:[#allocation12 + $0x5c] sm:$0xf]
    %vm725 = vcmask 1046528
    %v726 = vrot.slane %v691, 1
    %v727 = vrot.slane %v304, 1
    %v728 = vsel %vm725, %v726, %v727
    %v729 = vrot.slane %v692, 1
    %v730 = vrot.slane %v305, 1
    %v731 = vsel %vm725, %v729, %v730
    %v732 = vrot.slane %v693, 1
    %v733 = vsel %vm725, %v727, %v732
    %v734 = vrot.slane %v694, 1
    %v735 = vsel %vm725, %v730, %v734
    %v763 = vunpack.c.l.b16 %v695
    %v764 = vunpack.c.l.b16 %v696
    %v765 = vunpack.c.l.b16 %v697
    %v766 = vunpack.c.l.b16 %v698
    %v767 = vunpack.c.l.b16 %v699
    %v768 = vunpack.c.l.b16 %v700
    %v769 = vunpack.c.l.b16 %v701
    %v770 = vunpack.c.l.b16 %v702
    %v771 = vunpack.c.l.b16 %v703
    %v772 = vunpack.c.l.b16 %v704
    %v773 = vunpack.c.l.b16 %v705
    %v774 = vunpack.c.l.b16 %v706
    %v775 = vunpack.c.l.b16 %v707
    %v776 = vunpack.c.l.b16 %v708
    %v777 = vunpack.c.l.b16 %v709
    %v778 = vunpack.c.l.b16 %v710
    %v779 = vunpack.c.l.b16 %v711
    %v780 = vunpack.c.l.b16 %v712
    %v781 = vunpack.c.l.b16 %v713
    %v782 = vunpack.c.l.b16 %v714
    %v783 = vunpack.c.l.b16 %v715
    %v784 = vunpack.c.l.b16 %v716
    %v785 = vunpack.c.l.b16 %v717
    %v786 = vunpack.c.l.b16 %v718
    %v787 = vpack.c.b16 %v764, %v763
    %v788 = vpack.c.b16 %v766, %v765
    %v789 = vpack.c.b16 %v768, %v767
    %v790 = vpack.c.b16 %v770, %v769
    %v791 = vpack.c.b16 %v772, %v771
    %v792 = vpack.c.b16 %v774, %v773
    %v793 = vpack.c.b16 %v776, %v775
    %v794 = vpack.c.b16 %v778, %v777
    %v795 = vpack.c.b16 %v780, %v779
    %v796 = vpack.c.b16 %v782, %v781
    %v797 = vpack.c.b16 %v784, %v783
    %v798 = vpack.c.b16 %v786, %v785
    %v812 = vsel %vm163, %v731, 0
    %v815 = vsel %vm163, %v735, 0
    %v818 = vsel %vm163, %v734, 0
    %820 = vmatprep.subr.bf16.mxu0 0
    %821 = vmatpush1.bf16.msra.mxu0 %v787
    %822 = vmatprep.subr.bf16.mxu0 0
    %823 = vmatpush1.bf16.msra.mxu0 %v788
    %824 = vmatprep.subr.bf16.mxu0 0
    %825 = vmatpush1.bf16.msra.mxu0 %v789
    %826 = vmatprep.subr.bf16.mxu0 0
    %827 = vmatpush1.bf16.msra.mxu0 %v790
    %828 = vmatprep.subr.bf16.mxu0 0
    %829 = vmatpush1.bf16.msra.mxu0 %v791
    %830 = vmatprep.subr.bf16.mxu0 0
    %831 = vmatpush1.bf16.msra.mxu0 %v792
    %832 = vmatprep.subr.bf16.mxu0 0
    %833 = vmatpush1.bf16.msra.mxu0 %v793
    %834 = vmatprep.subr.bf16.mxu0 0
    %835 = vmatpush1.bf16.msra.mxu0 %v794
    %836 = vmatprep.subr.bf16.mxu0 0
    %837 = vmatpush1.bf16.msra.mxu0 %v795
    %838 = vmatprep.subr.bf16.mxu0 0
    %839 = vmatpush1.bf16.msra.mxu0 %v796
    %840 = vmatprep.subr.bf16.mxu0 0
    %841 = vmatpush1.bf16.msra.mxu0 %v797
    %842 = vmatprep.subr.bf16.mxu0 0
    %843 = vmatpush1.bf16.msra.mxu0 %v798
    %844 = vmatprep.subr.bf16.mxu0 0
    %845 = vmatpush1.bf16.msra.mxu0 0
    %846 = vmatprep.subr.bf16.mxu0 0
    %847 = vmatpush1.bf16.msra.mxu0 0
    %848 = vmatprep.subr.bf16.mxu0 0
    %849 = vmatpush1.bf16.msra.mxu0 0
    %850 = vmatprep.subr.bf16.mxu0 0
    %851 = vmatpush1.bf16.msra.mxu0 0
    %852 = vmatprep.mubr.bf16.mxu0 %v812
    %853 = vmatmul.mubr.bf16.gmra.mrb[0].mxu0 %v728
    %v854 = vpop.f32.mrb[0].mxu0
    %v855 = vadd.f32 0.0, %v854
    %v856 = vpop.f32.mrb[0].mxu0
    %v857 = vpop.f32.mrb[0].mxu0
    %v858 = vadd.f32 0.0, %v857
    %v859 = vpop.f32.mrb[0].mxu0
    %860 = vmatprep.mubr.bf16.mxu0 %v815
    %861 = vmatmul.mubr.bf16.gmra.mrb[0].mxu0 %v733
    %v862 = vpop.f32.mrb[0].mxu0
    %v863 = vadd.f32 0.0, %v862
    %v864 = vpop.f32.mrb[0].mxu0
    %v865 = vpop.f32.mrb[0].mxu0
    %v866 = vadd.f32 0.0, %v865
    %v867 = vpop.f32.mrb[0].mxu0
    %868 = vmatprep.mubr.bf16.mxu0 %v818
    %869 = vmatmul.mubr.bf16.gmra.mrb[0].mxu0 %v732
    %v870 = vpop.f32.mrb[0].mxu0
    %v871 = vadd.f32 0.0, %v870
    %v872 = vpop.f32.mrb[0].mxu0
    %v873 = vpop.f32.mrb[0].mxu0
    %v874 = vpop.f32.mrb[0].mxu0
    %875 = vdwg.mxu0
    %v876 = vadd.f32 %v666, %v855
    %v877 = vadd.f32 %v669, %v858
    %v878 = vadd.f32 %v674, %v863
    %v879 = vadd.f32 %v677, %v866
    %v880 = vadd.f32 %v682, %v871
    %v881 = vld [vmem:[%s13] sm:$0x1]
    %v883 = vlaneseq
    %v884 = vshrl.u32 %v883, 7
    %v885 = vsub.s32 0, %v884
    %v886 = vrot.slane %v881, %v885
    %v888 = vadd.f32 %v876, %v886
    %v889 = vadd.f32 %v877, %v886
    %v890 = vadd.f32 %v878, %v886
    %v891 = vadd.f32 %v879, %v886
    %v892 = vadd.f32 %v880, %v886
    %v893 = vmul.f32 %v888, 0.01
    %v894 = vmul.f32 %v889, 0.01
    %v895 = vmul.f32 %v890, 0.01
    %v896 = vmul.f32 %v891, 0.01
    %v897 = vmul.f32 %v892, 0.01
    %v898 = vmax.f32 %v888, %v893
    %v899 = vmax.f32 %v889, %v894
    %v900 = vmax.f32 %v890, %v895
    %v901 = vmax.f32 %v891, %v896
    %v902 = vmax.f32 %v892, %v897
    %903 = vst [vmem:[#allocation3 + $0x8] sm:$0x1] %v898
    %v905 = vrot.slane %v898, 1
    %907 = vst [vmem:[#allocation3 + $0x1] sm:$0x1] %v905
    %v908 = vrot.slane %v898, 2
    %910 = vst [vmem:[#allocation3 + $0x9] sm:$0x1] %v908
    %v911 = vrot.slane %v898, 3
    %913 = vst [vmem:[#allocation3 + $0x2] sm:$0x1] %v911
    %v914 = vrot.slane %v898, 4
    %916 = vst [vmem:[#allocation3 + $0xa] sm:$0x1] %v914
    %v917 = vrot.slane %v898, 5
    %919 = vst [vmem:[#allocation3 + $0x3] sm:$0x1] %v917
    %v920 = vrot.slane %v898, 6
    %922 = vst [vmem:[#allocation3 + $0xb] sm:$0x1] %v920
    %v923 = vrot.slane %v898, 7
    %925 = vst [vmem:[#allocation3 + $0x4] sm:$0x1] %v923
    %926 = vst [vmem:[#allocation3 + $0xc] sm:$0x1] %v899
    %v928 = vrot.slane %v899, 1
    %930 = vst [vmem:[#allocation3 + $0x5] sm:$0x1] %v928
    %v931 = vrot.slane %v899, 2
    %933 = vst [vmem:[#allocation3 + $0xd] sm:$0x1] %v931
    %v934 = vrot.slane %v899, 3
    %936 = vst [vmem:[#allocation3 + $0x6] sm:$0x1] %v934
    %v937 = vrot.slane %v899, 4
    %939 = vst [vmem:[#allocation3 + $0xe] sm:$0x1] %v937
    %v940 = vrot.slane %v899, 5
    %942 = vst [vmem:[#allocation3 + $0x7] sm:$0x1] %v940
    %v943 = vrot.slane %v899, 6
    %945 = vst [vmem:[#allocation3 + $0xf] sm:$0x1] %v943
    %v946 = vrot.slane %v899, 7
    %948 = vst [vmem:[#allocation3 + $0x10] sm:$0x1] %v946
    %v950 = vrot.slane %v900, 2
    %952 = vst [vmem:[#allocation3 + $0x19] sm:$0x1] %v950
    %v953 = vrot.slane %v900, 3
    %955 = vst [vmem:[#allocation3 + $0x12] sm:$0x1] %v953
    %v956 = vrot.slane %v900, 4
    %958 = vst [vmem:[#allocation3 + $0x1a] sm:$0x1] %v956
    %v959 = vrot.slane %v900, 5
    %961 = vst [vmem:[#allocation3 + $0x13] sm:$0x1] %v959
    %v962 = vrot.slane %v900, 6
    %964 = vst [vmem:[#allocation3 + $0x1b] sm:$0x1] %v962
    %v965 = vrot.slane %v900, 7
    %967 = vst [vmem:[#allocation3 + $0x14] sm:$0x1] %v965
    %968 = vst [vmem:[#allocation3 + $0x1c] sm:$0x1] %v901
    %v970 = vrot.slane %v901, 1
    %972 = vst [vmem:[#allocation3 + $0x15] sm:$0x1] %v970
    %v973 = vrot.slane %v901, 2
    %975 = vst [vmem:[#allocation3 + $0x1d] sm:$0x1] %v973
    %v976 = vrot.slane %v901, 3
    %978 = vst [vmem:[#allocation3 + $0x16] sm:$0x1] %v976
    %v979 = vrot.slane %v901, 4
    %981 = vst [vmem:[#allocation3 + $0x1e] sm:$0x1] %v979
    %v982 = vrot.slane %v901, 5
    %984 = vst [vmem:[#allocation3 + $0x17] sm:$0x1] %v982
    %v985 = vrot.slane %v901, 6
    %987 = vst [vmem:[#allocation3 + $0x1f] sm:$0x1] %v985
    %v988 = vrot.slane %v901, 7
    %990 = vst [vmem:[#allocation3 + $0x20] sm:$0x1] %v988
    %991 = vst [vmem:[#allocation3 + $0x28] sm:$0x1] %v902
    %v993 = vrot.slane %v902, 1
    %995 = vst [vmem:[#allocation3 + $0x21] sm:$0x1] %v993
    %v996 = vld [vmem:[#allocation3] sm:$0xff]
    %v997 = vld [vmem:[#allocation3 + $0x8] sm:$0xff]
    %v998 = vld [vmem:[#allocation3 + $0x10] sm:$0xff]
    %v999 = vld [vmem:[#allocation3 + $0x18] sm:$0xff]
    %v1000 = vld [vmem:[#allocation3 + $0x20] sm:$0x1]
    %v1001 = vld [vmem:[#allocation3 + $0x28] sm:$0x1]
    %v1002 = vpack.c.bf16 %v998, %v996
    %v1003 = vpack.c.bf16 %v999, %v997
    %v1004 = vpack.c.bf16 %v1000, %v1000
    %v1005 = vpack.c.bf16 %v1001, %v1001
    %v1006 = vld [vmem:[#allocation3] sm:$0xfe]
    %v1007 = vld [vmem:[#allocation3 + $0x20] sm:$0x3]
    %v1008 = vpack.c.bf16 %v998, %v1006
    %v1009 = vpack.c.bf16 %v1007, %v1007
    %v1010 = vld [vmem:[%s4] sm:$0xf]
    %v1011 = vld [vmem:[%s4 + $0x4] sm:$0xf]
    %v1012 = vld [vmem:[%s4 + $0x8] sm:$0xf]
    %v1013 = vld [vmem:[%s4 + $0xc] sm:$0xf]
    %v1014 = vld [vmem:[%s4 + $0x10] sm:$0xf]
    %v1015 = vld [vmem:[%s4 + $0x14] sm:$0xf]
    %v1016 = vld [vmem:[%s4 + $0x18] sm:$0xf]
    %v1017 = vld [vmem:[%s4 + $0x1c] sm:$0xf]
    %v1018 = vld [vmem:[%s4 + $0x20] sm:$0xf]
    %v1019 = vld [vmem:[%s4 + $0x24] sm:$0xf]
    %v1020 = vld [vmem:[%s4 + $0x28] sm:$0xf]
    %v1021 = vld [vmem:[%s4 + $0x2c] sm:$0xf]
    %v1022 = vld [vmem:[%s4 + $0x30] sm:$0xf]
    %v1023 = vld [vmem:[%s4 + $0x34] sm:$0xf]
    %v1024 = vld [vmem:[%s4 + $0x38] sm:$0xf]
    %v1025 = vld [vmem:[%s4 + $0x3c] sm:$0xf]
    %v1026 = vld [vmem:[%s4 + $0x40] sm:$0xf]
    %v1027 = vld [vmem:[%s4 + $0x44] sm:$0xf]
    %v1028 = vld [vmem:[%s4 + $0x48] sm:$0xf]
    %v1029 = vld [vmem:[%s4 + $0x4c] sm:$0xf]
    %v1030 = vld [vmem:[%s4 + $0x50] sm:$0xf]
    %v1031 = vld [vmem:[%s4 + $0x54] sm:$0xf]
    %v1032 = vld [vmem:[%s4 + $0x58] sm:$0xf]
    %v1033 = vld [vmem:[%s4 + $0x5c] sm:$0xf]
    %v1034 = vld [vmem:[%s4 + $0x60] sm:$0xf]
    %v1035 = vld [vmem:[%s4 + $0x64] sm:$0xf]
    %v1036 = vld [vmem:[%s4 + $0x68] sm:$0xf]
    %v1037 = vld [vmem:[%s4 + $0x6c] sm:$0xf]
    %v1038 = vld [vmem:[%s4 + $0x70] sm:$0xf]
    %v1039 = vld [vmem:[%s4 + $0x74] sm:$0xf]
    %v1040 = vld [vmem:[%s4 + $0x78] sm:$0xf]
    %v1041 = vld [vmem:[%s4 + $0x7c] sm:$0xf]
    %v1042 = vld [vmem:[#allocation13] sm:$0xf]
    %v1043 = vld [vmem:[#allocation13 + $0x4] sm:$0xf]
    %v1044 = vld [vmem:[#allocation13 + $0x8] sm:$0xf]
    %v1045 = vld [vmem:[#allocation13 + $0xc] sm:$0xf]
    %v1046 = vld [vmem:[#allocation13 + $0x10] sm:$0xf]
    %v1047 = vld [vmem:[#allocation13 + $0x14] sm:$0xf]
    %v1048 = vld [vmem:[#allocation13 + $0x18] sm:$0xf]
    %v1049 = vld [vmem:[#allocation13 + $0x1c] sm:$0xf]
    %v1050 = vld [vmem:[#allocation13 + $0x20] sm:$0xf]
    %v1051 = vld [vmem:[#allocation13 + $0x24] sm:$0xf]
    %v1052 = vld [vmem:[#allocation13 + $0x28] sm:$0xf]
    %v1053 = vld [vmem:[#allocation13 + $0x2c] sm:$0xf]
    %v1054 = vld [vmem:[#allocation13 + $0x30] sm:$0xf]
    %v1055 = vld [vmem:[#allocation13 + $0x34] sm:$0xf]
    %v1056 = vld [vmem:[#allocation13 + $0x38] sm:$0xf]
    %v1057 = vld [vmem:[#allocation13 + $0x3c] sm:$0xf]
    %v1059 = vshrl.u32 %v1008, 16
    %v1061 = vshll.u32 %v1008, 16
    %v1063 = vrot.slane %v1061, 1
    %v1064 = vor.u32 %v1059, %v1063
    %v1066 = vshll.u32 %v1009, 16
    %v1068 = vrot.slane %v1066, 1
    %v1069 = vsel %vm364, %v1064, %v1068
    %v1070 = vshrl.u32 %v1009, 16
    %v1090 = vunpack.c.l.b16 %v1042
    %v1091 = vunpack.c.l.b16 %v1043
    %v1092 = vunpack.c.l.b16 %v1044
    %v1093 = vunpack.c.l.b16 %v1045
    %v1094 = vunpack.c.l.b16 %v1046
    %v1095 = vunpack.c.l.b16 %v1047
    %v1096 = vunpack.c.l.b16 %v1048
    %v1097 = vunpack.c.l.b16 %v1049
    %v1098 = vunpack.c.l.b16 %v1050
    %v1099 = vunpack.c.l.b16 %v1051
    %v1100 = vunpack.c.l.b16 %v1052
    %v1101 = vunpack.c.l.b16 %v1053
    %v1102 = vunpack.c.l.b16 %v1054
    %v1103 = vunpack.c.l.b16 %v1055
    %v1104 = vunpack.c.l.b16 %v1056
    %v1105 = vunpack.c.l.b16 %v1057
    %v1106 = vpack.c.b16 %v1091, %v1090
    %v1107 = vpack.c.b16 %v1093, %v1092
    %v1108 = vpack.c.b16 %v1095, %v1094
    %v1109 = vpack.c.b16 %v1097, %v1096
    %v1110 = vpack.c.b16 %v1099, %v1098
    %v1111 = vpack.c.b16 %v1101, %v1100
    %v1112 = vpack.c.b16 %v1103, %v1102
    %v1113 = vpack.c.b16 %v1105, %v1104
    %1122 = vmatprep.subr.bf16.mxu0 0
    %1123 = vmatpush1.bf16.msra.mxu0 %v1106
    %1124 = vmatprep.subr.bf16.mxu0 0
    %1125 = vmatpush1.bf16.msra.mxu0 %v1107
    %1126 = vmatprep.subr.bf16.mxu0 0
    %1127 = vmatpush1.bf16.msra.mxu0 %v1108
    %1128 = vmatprep.subr.bf16.mxu0 0
    %1129 = vmatpush1.bf16.msra.mxu0 %v1109
    %1130 = vmatprep.subr.bf16.mxu0 0
    %1131 = vmatpush1.bf16.msra.mxu0 %v1110
    %1132 = vmatprep.subr.bf16.mxu0 0
    %1133 = vmatpush1.bf16.msra.mxu0 %v1111
    %1134 = vmatprep.subr.bf16.mxu0 0
    %1135 = vmatpush1.bf16.msra.mxu0 %v1112
    %1136 = vmatprep.subr.bf16.mxu0 0
    %1137 = vmatpush1.bf16.msra.mxu0 %v1113
    %1138 = vmatprep.subr.bf16.mxu0 0
    %1139 = vmatpush1.bf16.msra.mxu0 0
    %1140 = vmatprep.subr.bf16.mxu0 0
    %1141 = vmatpush1.bf16.msra.mxu0 0
    %1142 = vmatprep.subr.bf16.mxu0 0
    %1143 = vmatpush1.bf16.msra.mxu0 0
    %1144 = vmatprep.subr.bf16.mxu0 0
    %1145 = vmatpush1.bf16.msra.mxu0 0
    %1146 = vmatprep.subr.bf16.mxu0 0
    %1147 = vmatpush1.bf16.msra.mxu0 0
    %1148 = vmatprep.subr.bf16.mxu0 0
    %1149 = vmatpush1.bf16.msra.mxu0 0
    %1150 = vmatprep.subr.bf16.mxu0 0
    %1151 = vmatpush1.bf16.msra.mxu0 0
    %1152 = vmatprep.subr.bf16.mxu0 0
    %1153 = vmatpush1.bf16.msra.mxu0 0
    %1154 = vmatprep.mubr.bf16.mxu0 0
    %1155 = vmatmul.mubr.bf16.gmra.mrb[0].mxu0 %v1069
    %v1156 = vpop.f32.mrb[0].mxu0
    %v1157 = vadd.f32 0.0, %v1156
    %v1158 = vpop.f32.mrb[0].mxu0
    %v1159 = vpop.f32.mrb[0].mxu0
    %v1160 = vadd.f32 0.0, %v1159
    %v1161 = vpop.f32.mrb[0].mxu0
    %1162 = vmatprep.mubr.bf16.mxu0 0
    %1163 = vmatmul.mubr.bf16.gmra.mrb[0].mxu0 %v1070
    %v1164 = vpop.f32.mrb[0].mxu0
    %v1165 = vadd.f32 0.0, %v1164
    %v1166 = vpop.f32.mrb[0].mxu0
    %v1167 = vpop.f32.mrb[0].mxu0
    %v1168 = vpop.f32.mrb[0].mxu0
    %1169 = vdwg.mxu0
    %v1202 = vunpack.c.l.b16 %v1010
    %v1203 = vunpack.c.l.b16 %v1011
    %v1204 = vunpack.c.l.b16 %v1012
    %v1205 = vunpack.c.l.b16 %v1013
    %v1206 = vunpack.c.l.b16 %v1014
    %v1207 = vunpack.c.l.b16 %v1015
    %v1208 = vunpack.c.l.b16 %v1016
    %v1209 = vunpack.c.l.b16 %v1017
    %v1210 = vunpack.c.l.b16 %v1018
    %v1211 = vunpack.c.l.b16 %v1019
    %v1212 = vunpack.c.l.b16 %v1020
    %v1213 = vunpack.c.l.b16 %v1021
    %v1214 = vunpack.c.l.b16 %v1022
    %v1215 = vunpack.c.l.b16 %v1023
    %v1216 = vunpack.c.l.b16 %v1024
    %v1217 = vunpack.c.l.b16 %v1025
    %v1218 = vunpack.c.l.b16 %v1026
    %v1219 = vunpack.c.l.b16 %v1027
    %v1220 = vunpack.c.l.b16 %v1028
    %v1221 = vunpack.c.l.b16 %v1029
    %v1222 = vunpack.c.l.b16 %v1030
    %v1223 = vunpack.c.l.b16 %v1031
    %v1224 = vunpack.c.l.b16 %v1032
    %v1225 = vunpack.c.l.b16 %v1033
    %v1226 = vunpack.c.l.b16 %v1034
    %v1227 = vunpack.c.l.b16 %v1035
    %v1228 = vunpack.c.l.b16 %v1036
    %v1229 = vunpack.c.l.b16 %v1037
    %v1230 = vunpack.c.l.b16 %v1038
    %v1231 = vunpack.c.l.b16 %v1039
    %v1232 = vunpack.c.l.b16 %v1040
    %v1233 = vunpack.c.l.b16 %v1041
    %v1234 = vpack.c.b16 %v1203, %v1202
    %v1235 = vpack.c.b16 %v1205, %v1204
    %v1236 = vpack.c.b16 %v1207, %v1206
    %v1237 = vpack.c.b16 %v1209, %v1208
    %v1238 = vpack.c.b16 %v1211, %v1210
    %v1239 = vpack.c.b16 %v1213, %v1212
    %v1240 = vpack.c.b16 %v1215, %v1214
    %v1241 = vpack.c.b16 %v1217, %v1216
    %v1242 = vpack.c.b16 %v1219, %v1218
    %v1243 = vpack.c.b16 %v1221, %v1220
    %v1244 = vpack.c.b16 %v1223, %v1222
    %v1245 = vpack.c.b16 %v1225, %v1224
    %v1246 = vpack.c.b16 %v1227, %v1226
    %v1247 = vpack.c.b16 %v1229, %v1228
    %v1248 = vpack.c.b16 %v1231, %v1230
    %v1249 = vpack.c.b16 %v1233, %v1232
    %1266 = vmatprep.subr.bf16.mxu0 0
    %1267 = vmatpush1.bf16.msra.mxu0 %v1234
    %1268 = vmatprep.subr.bf16.mxu0 0
    %1269 = vmatpush1.bf16.msra.mxu0 %v1235
    %1270 = vmatprep.subr.bf16.mxu0 0
    %1271 = vmatpush1.bf16.msra.mxu0 %v1236
    %1272 = vmatprep.subr.bf16.mxu0 0
    %1273 = vmatpush1.bf16.msra.mxu0 %v1237
    %1274 = vmatprep.subr.bf16.mxu0 0
    %1275 = vmatpush1.bf16.msra.mxu0 %v1238
    %1276 = vmatprep.subr.bf16.mxu0 0
    %1277 = vmatpush1.bf16.msra.mxu0 %v1239
    %1278 = vmatprep.subr.bf16.mxu0 0
    %1279 = vmatpush1.bf16.msra.mxu0 %v1240
    %1280 = vmatprep.subr.bf16.mxu0 0
    %1281 = vmatpush1.bf16.msra.mxu0 %v1241
    %1282 = vmatprep.subr.bf16.mxu0 0
    %1283 = vmatpush1.bf16.msra.mxu0 %v1242
    %1284 = vmatprep.subr.bf16.mxu0 0
    %1285 = vmatpush1.bf16.msra.mxu0 %v1243
    %1286 = vmatprep.subr.bf16.mxu0 0
    %1287 = vmatpush1.bf16.msra.mxu0 %v1244
    %1288 = vmatprep.subr.bf16.mxu0 0
    %1289 = vmatpush1.bf16.msra.mxu0 %v1245
    %1290 = vmatprep.subr.bf16.mxu0 0
    %1291 = vmatpush1.bf16.msra.mxu0 %v1246
    %1292 = vmatprep.subr.bf16.mxu0 0
    %1293 = vmatpush1.bf16.msra.mxu0 %v1247
    %1294 = vmatprep.subr.bf16.mxu0 0
    %1295 = vmatpush1.bf16.msra.mxu0 %v1248
    %1296 = vmatprep.subr.bf16.mxu0 0
    %1297 = vmatpush1.bf16.msra.mxu0 %v1249
    %1298 = vmatprep.mubr.bf16.mxu0 %v1003
    %1299 = vmatmul.mubr.bf16.gmra.mrb[0].mxu0 %v1002
    %v1300 = vpop.f32.mrb[0].mxu0
    %v1301 = vadd.f32 %v1157, %v1300
    %v1302 = vpop.f32.mrb[0].mxu0
    %v1303 = vpop.f32.mrb[0].mxu0
    %v1304 = vadd.f32 %v1160, %v1303
    %v1305 = vpop.f32.mrb[0].mxu0
    %1306 = vmatprep.mubr.bf16.mxu0 %v1005
    %1307 = vmatmul.mubr.bf16.gmra.mrb[0].mxu0 %v1004
    %v1308 = vpop.f32.mrb[0].mxu0
    %v1309 = vadd.f32 %v1165, %v1308
    %v1310 = vpop.f32.mrb[0].mxu0
    %v1311 = vpop.f32.mrb[0].mxu0
    %v1312 = vpop.f32.mrb[0].mxu0
    %1313 = vdwg.mxu0
    %v1314 = vld [vmem:[%s14] sm:$0x1]
    %v1316 = vlaneseq
    %v1317 = vshrl.u32 %v1316, 7
    %v1318 = vsub.s32 0, %v1317
    %v1319 = vrot.slane %v1314, %v1318
    %v1321 = vadd.f32 %v1301, %v1319
    %v1322 = vadd.f32 %v1304, %v1319
    %v1323 = vadd.f32 %v1309, %v1319
    %v1324 = vmul.f32 %v1321, 0.01
    %v1325 = vmul.f32 %v1322, 0.01
    %v1326 = vmul.f32 %v1323, 0.01
    %v1327 = vmax.f32 %v1321, %v1324
    %v1328 = vmax.f32 %v1322, %v1325
    %v1329 = vmax.f32 %v1323, %v1326
    %1330 = vst [vmem:[#allocation4 + $0x8] sm:$0x1] %v1327
    %v1332 = vrot.slane %v1327, 1
    %1334 = vst [vmem:[#allocation4 + $0x1] sm:$0x1] %v1332
    %v1335 = vrot.slane %v1327, 2
    %1337 = vst [vmem:[#allocation4 + $0x9] sm:$0x1] %v1335
    %v1338 = vrot.slane %v1327, 3
    %1340 = vst [vmem:[#allocation4 + $0x2] sm:$0x1] %v1338
    %v1341 = vrot.slane %v1327, 4
    %1343 = vst [vmem:[#allocation4 + $0xa] sm:$0x1] %v1341
    %v1344 = vrot.slane %v1327, 5
    %1346 = vst [vmem:[#allocation4 + $0x3] sm:$0x1] %v1344
    %v1347 = vrot.slane %v1327, 6
    %1349 = vst [vmem:[#allocation4 + $0xb] sm:$0x1] %v1347
    %v1350 = vrot.slane %v1327, 7
    %1352 = vst [vmem:[#allocation4 + $0x4] sm:$0x1] %v1350
    %v1354 = vrot.slane %v1328, 1
    %1356 = vst [vmem:[#allocation4 + $0xd] sm:$0x1] %v1354
    %v1357 = vrot.slane %v1328, 2
    %1359 = vst [vmem:[#allocation4 + $0x6] sm:$0x1] %v1357
    %v1360 = vrot.slane %v1328, 3
    %1362 = vst [vmem:[#allocation4 + $0xe] sm:$0x1] %v1360
    %v1363 = vrot.slane %v1328, 4
    %1365 = vst [vmem:[#allocation4 + $0x7] sm:$0x1] %v1363
    %v1366 = vrot.slane %v1328, 5
    %1368 = vst [vmem:[#allocation4 + $0xf] sm:$0x1] %v1366
    %v1369 = vrot.slane %v1328, 6
    %1371 = vst [vmem:[#allocation4 + $0x10] sm:$0x1] %v1369
    %v1372 = vrot.slane %v1328, 7
    %1374 = vst [vmem:[#allocation4 + $0x18] sm:$0x1] %v1372
    %1375 = vst [vmem:[#allocation4 + $0x11] sm:$0x1] %v1329
    %v1376 = vld [vmem:[#allocation4] sm:$0xff]
    %v1377 = vld [vmem:[#allocation4 + $0x8] sm:$0xff]
    %v1378 = vld [vmem:[#allocation4 + $0x10] sm:$0x1]
    %v1379 = vld [vmem:[#allocation4 + $0x18] sm:$0x1]
    %v1380 = vpack.c.bf16 %v1378, %v1376
    %v1381 = vpack.c.bf16 %v1379, %v1377
    %v1382 = vld [vmem:[#allocation4] sm:$0xfe]
    %v1383 = vld [vmem:[#allocation4 + $0x10] sm:$0x3]
    %v1384 = vpack.c.bf16 %v1383, %v1382
    %v1385 = vld [vmem:[%s6] sm:$0xf]
    %v1386 = vld [vmem:[%s6 + $0x4] sm:$0xf]
    %v1387 = vld [vmem:[%s6 + $0x8] sm:$0xf]
    %v1388 = vld [vmem:[%s6 + $0xc] sm:$0xf]
    %v1389 = vld [vmem:[%s6 + $0x10] sm:$0xf]
    %v1390 = vld [vmem:[%s6 + $0x14] sm:$0xf]
    %v1391 = vld [vmem:[%s6 + $0x18] sm:$0xf]
    %v1392 = vld [vmem:[%s6 + $0x1c] sm:$0xf]
    %v1393 = vld [vmem:[%s6 + $0x20] sm:$0xf]
    %v1394 = vld [vmem:[%s6 + $0x24] sm:$0xf]
    %v1395 = vld [vmem:[%s6 + $0x28] sm:$0xf]
    %v1396 = vld [vmem:[%s6 + $0x2c] sm:$0xf]
    %v1397 = vld [vmem:[%s6 + $0x30] sm:$0xf]
    %v1398 = vld [vmem:[%s6 + $0x34] sm:$0xf]
    %v1399 = vld [vmem:[%s6 + $0x38] sm:$0xf]
    %v1400 = vld [vmem:[%s6 + $0x3c] sm:$0xf]
    %v1401 = vld [vmem:[%s6 + $0x40] sm:$0xf]
    %v1402 = vld [vmem:[%s6 + $0x44] sm:$0xf]
    %v1403 = vld [vmem:[%s6 + $0x48] sm:$0xf]
    %v1404 = vld [vmem:[%s6 + $0x4c] sm:$0xf]
    %v1405 = vld [vmem:[%s6 + $0x50] sm:$0xf]
    %v1406 = vld [vmem:[%s6 + $0x54] sm:$0xf]
    %v1407 = vld [vmem:[%s6 + $0x58] sm:$0xf]
    %v1408 = vld [vmem:[%s6 + $0x5c] sm:$0xf]
    %v1409 = vld [vmem:[%s6 + $0x60] sm:$0xf]
    %v1410 = vld [vmem:[%s6 + $0x64] sm:$0xf]
    %v1411 = vld [vmem:[%s6 + $0x68] sm:$0xf]
    %v1412 = vld [vmem:[%s6 + $0x6c] sm:$0xf]
    %v1413 = vld [vmem:[%s6 + $0x70] sm:$0xf]
    %v1414 = vld [vmem:[%s6 + $0x74] sm:$0xf]
    %v1415 = vld [vmem:[%s6 + $0x78] sm:$0xf]
    %v1416 = vld [vmem:[%s6 + $0x7c] sm:$0xf]
    %v1417 = vld [vmem:[#allocation15] sm:$0xf]
    %v1418 = vld [vmem:[#allocation15 + $0x4] sm:$0xf]
    %v1419 = vld [vmem:[#allocation15 + $0x8] sm:$0xf]
    %v1420 = vld [vmem:[#allocation15 + $0xc] sm:$0xf]
    %v1421 = vld [vmem:[#allocation15 + $0x10] sm:$0xf]
    %v1422 = vld [vmem:[#allocation15 + $0x14] sm:$0xf]
    %v1423 = vld [vmem:[#allocation15 + $0x18] sm:$0xf]
    %v1424 = vld [vmem:[#allocation15 + $0x1c] sm:$0xf]
    %v1425 = vld [vmem:[#allocation15 + $0x20] sm:$0xf]
    %v1426 = vld [vmem:[#allocation15 + $0x24] sm:$0xf]
    %v1427 = vld [vmem:[#allocation15 + $0x28] sm:$0xf]
    %v1428 = vld [vmem:[#allocation15 + $0x2c] sm:$0xf]
    %v1429 = vld [vmem:[#allocation15 + $0x30] sm:$0xf]
    %v1430 = vld [vmem:[#allocation15 + $0x34] sm:$0xf]
    %v1431 = vld [vmem:[#allocation15 + $0x38] sm:$0xf]
    %v1432 = vld [vmem:[#allocation15 + $0x3c] sm:$0xf]
    %v1434 = vshrl.u32 %v1384, 16
    %v1436 = vshll.u32 %v1384, 16
    %v1438 = vrot.slane %v1436, 1
    %v1439 = vor.u32 %v1434, %v1438
    %v1457 = vunpack.c.l.b16 %v1417
    %v1458 = vunpack.c.l.b16 %v1418
    %v1459 = vunpack.c.l.b16 %v1419
    %v1460 = vunpack.c.l.b16 %v1420
    %v1461 = vunpack.c.l.b16 %v1421
    %v1462 = vunpack.c.l.b16 %v1422
    %v1463 = vunpack.c.l.b16 %v1423
    %v1464 = vunpack.c.l.b16 %v1424
    %v1465 = vunpack.c.l.b16 %v1425
    %v1466 = vunpack.c.l.b16 %v1426
    %v1467 = vunpack.c.l.b16 %v1427
    %v1468 = vunpack.c.l.b16 %v1428
    %v1469 = vunpack.c.l.b16 %v1429
    %v1470 = vunpack.c.l.b16 %v1430
    %v1471 = vunpack.c.l.b16 %v1431
    %v1472 = vunpack.c.l.b16 %v1432
    %v1473 = vpack.c.b16 %v1458, %v1457
    %v1474 = vpack.c.b16 %v1460, %v1459
    %v1475 = vpack.c.b16 %v1462, %v1461
    %v1476 = vpack.c.b16 %v1464, %v1463
    %v1477 = vpack.c.b16 %v1466, %v1465
    %v1478 = vpack.c.b16 %v1468, %v1467
    %v1479 = vpack.c.b16 %v1470, %v1469
    %v1480 = vpack.c.b16 %v1472, %v1471
    %1489 = vmatprep.subr.bf16.mxu0 0
    %1490 = vmatpush1.bf16.msra.mxu0 %v1473
    %1491 = vmatprep.subr.bf16.mxu0 0
    %1492 = vmatpush1.bf16.msra.mxu0 %v1474
    %1493 = vmatprep.subr.bf16.mxu0 0
    %1494 = vmatpush1.bf16.msra.mxu0 %v1475
    %1495 = vmatprep.subr.bf16.mxu0 0
    %1496 = vmatpush1.bf16.msra.mxu0 %v1476
    %1497 = vmatprep.subr.bf16.mxu0 0
    %1498 = vmatpush1.bf16.msra.mxu0 %v1477
    %1499 = vmatprep.subr.bf16.mxu0 0
    %1500 = vmatpush1.bf16.msra.mxu0 %v1478
    %1501 = vmatprep.subr.bf16.mxu0 0
    %1502 = vmatpush1.bf16.msra.mxu0 %v1479
    %1503 = vmatprep.subr.bf16.mxu0 0
    %1504 = vmatpush1.bf16.msra.mxu0 %v1480
    %1505 = vmatprep.subr.bf16.mxu0 0
    %1506 = vmatpush1.bf16.msra.mxu0 0
    %1507 = vmatprep.subr.bf16.mxu0 0
    %1508 = vmatpush1.bf16.msra.mxu0 0
    %1509 = vmatprep.subr.bf16.mxu0 0
    %1510 = vmatpush1.bf16.msra.mxu0 0
    %1511 = vmatprep.subr.bf16.mxu0 0
    %1512 = vmatpush1.bf16.msra.mxu0 0
    %1513 = vmatprep.subr.bf16.mxu0 0
    %1514 = vmatpush1.bf16.msra.mxu0 0
    %1515 = vmatprep.subr.bf16.mxu0 0
    %1516 = vmatpush1.bf16.msra.mxu0 0
    %1517 = vmatprep.subr.bf16.mxu0 0
    %1518 = vmatpush1.bf16.msra.mxu0 0
    %1519 = vmatprep.subr.bf16.mxu0 0
    %1520 = vmatpush1.bf16.msra.mxu0 0
    %1521 = vmatprep.mubr.bf16.mxu0 0
    %1522 = vmatmul.mubr.bf16.gmra.mrb[0].mxu0 %v1439
    %v1523 = vpop.f32.mrb[0].mxu0
    %v1524 = vadd.f32 0.0, %v1523
    %v1525 = vpop.f32.mrb[0].mxu0
    %v1526 = vpop.f32.mrb[0].mxu0
    %v1527 = vadd.f32 0.0, %v1526
    %v1528 = vpop.f32.mrb[0].mxu0
    %1529 = vdwg.mxu0
    %v1562 = vunpack.c.l.b16 %v1385
    %v1563 = vunpack.c.l.b16 %v1386
    %v1564 = vunpack.c.l.b16 %v1387
    %v1565 = vunpack.c.l.b16 %v1388
    %v1566 = vunpack.c.l.b16 %v1389
    %v1567 = vunpack.c.l.b16 %v1390
    %v1568 = vunpack.c.l.b16 %v1391
    %v1569 = vunpack.c.l.b16 %v1392
    %v1570 = vunpack.c.l.b16 %v1393
    %v1571 = vunpack.c.l.b16 %v1394
    %v1572 = vunpack.c.l.b16 %v1395
    %v1573 = vunpack.c.l.b16 %v1396
    %v1574 = vunpack.c.l.b16 %v1397
    %v1575 = vunpack.c.l.b16 %v1398
    %v1576 = vunpack.c.l.b16 %v1399
    %v1577 = vunpack.c.l.b16 %v1400
    %v1578 = vunpack.c.l.b16 %v1401
    %v1579 = vunpack.c.l.b16 %v1402
    %v1580 = vunpack.c.l.b16 %v1403
    %v1581 = vunpack.c.l.b16 %v1404
    %v1582 = vunpack.c.l.b16 %v1405
    %v1583 = vunpack.c.l.b16 %v1406
    %v1584 = vunpack.c.l.b16 %v1407
    %v1585 = vunpack.c.l.b16 %v1408
    %v1586 = vunpack.c.l.b16 %v1409
    %v1587 = vunpack.c.l.b16 %v1410
    %v1588 = vunpack.c.l.b16 %v1411
    %v1589 = vunpack.c.l.b16 %v1412
    %v1590 = vunpack.c.l.b16 %v1413
    %v1591 = vunpack.c.l.b16 %v1414
    %v1592 = vunpack.c.l.b16 %v1415
    %v1593 = vunpack.c.l.b16 %v1416
    %v1594 = vpack.c.b16 %v1563, %v1562
    %v1595 = vpack.c.b16 %v1565, %v1564
    %v1596 = vpack.c.b16 %v1567, %v1566
    %v1597 = vpack.c.b16 %v1569, %v1568
    %v1598 = vpack.c.b16 %v1571, %v1570
    %v1599 = vpack.c.b16 %v1573, %v1572
    %v1600 = vpack.c.b16 %v1575, %v1574
    %v1601 = vpack.c.b16 %v1577, %v1576
    %v1602 = vpack.c.b16 %v1579, %v1578
    %v1603 = vpack.c.b16 %v1581, %v1580
    %v1604 = vpack.c.b16 %v1583, %v1582
    %v1605 = vpack.c.b16 %v1585, %v1584
    %v1606 = vpack.c.b16 %v1587, %v1586
    %v1607 = vpack.c.b16 %v1589, %v1588
    %v1608 = vpack.c.b16 %v1591, %v1590
    %v1609 = vpack.c.b16 %v1593, %v1592
    %1626 = vmatprep.subr.bf16.mxu0 0
    %1627 = vmatpush1.bf16.msra.mxu0 %v1594
    %1628 = vmatprep.subr.bf16.mxu0 0
    %1629 = vmatpush1.bf16.msra.mxu0 %v1595
    %1630 = vmatprep.subr.bf16.mxu0 0
    %1631 = vmatpush1.bf16.msra.mxu0 %v1596
    %1632 = vmatprep.subr.bf16.mxu0 0
    %1633 = vmatpush1.bf16.msra.mxu0 %v1597
    %1634 = vmatprep.subr.bf16.mxu0 0
    %1635 = vmatpush1.bf16.msra.mxu0 %v1598
    %1636 = vmatprep.subr.bf16.mxu0 0
    %1637 = vmatpush1.bf16.msra.mxu0 %v1599
    %1638 = vmatprep.subr.bf16.mxu0 0
    %1639 = vmatpush1.bf16.msra.mxu0 %v1600
    %1640 = vmatprep.subr.bf16.mxu0 0
    %1641 = vmatpush1.bf16.msra.mxu0 %v1601
    %1642 = vmatprep.subr.bf16.mxu0 0
    %1643 = vmatpush1.bf16.msra.mxu0 %v1602
    %1644 = vmatprep.subr.bf16.mxu0 0
    %1645 = vmatpush1.bf16.msra.mxu0 %v1603
    %1646 = vmatprep.subr.bf16.mxu0 0
    %1647 = vmatpush1.bf16.msra.mxu0 %v1604
    %1648 = vmatprep.subr.bf16.mxu0 0
    %1649 = vmatpush1.bf16.msra.mxu0 %v1605
    %1650 = vmatprep.subr.bf16.mxu0 0
    %1651 = vmatpush1.bf16.msra.mxu0 %v1606
    %1652 = vmatprep.subr.bf16.mxu0 0
    %1653 = vmatpush1.bf16.msra.mxu0 %v1607
    %1654 = vmatprep.subr.bf16.mxu0 0
    %1655 = vmatpush1.bf16.msra.mxu0 %v1608
    %1656 = vmatprep.subr.bf16.mxu0 0
    %1657 = vmatpush1.bf16.msra.mxu0 %v1609
    %1658 = vmatprep.mubr.bf16.mxu0 %v1381
    %1659 = vmatmul.mubr.bf16.gmra.mrb[0].mxu0 %v1380
    %v1660 = vpop.f32.mrb[0].mxu0
    %v1661 = vadd.f32 %v1524, %v1660
    %v1662 = vpop.f32.mrb[0].mxu0
    %v1663 = vpop.f32.mrb[0].mxu0
    %v1664 = vadd.f32 %v1527, %v1663
    %v1665 = vpop.f32.mrb[0].mxu0
    %1666 = vdwg.mxu0
    %v1667 = vld [vmem:[%s15] sm:$0x1]
    %v1669 = vlaneseq
    %v1670 = vshrl.u32 %v1669, 7
    %v1671 = vsub.s32 0, %v1670
    %v1672 = vrot.slane %v1667, %v1671
    %v1674 = vadd.f32 %v1661, %v1672
    %v1675 = vadd.f32 %v1664, %v1672
    %v1676 = vmul.f32 %v1674, 0.01
    %v1677 = vmul.f32 %v1675, 0.01
    %v1678 = vmax.f32 %v1674, %v1676
    %v1679 = vmax.f32 %v1675, %v1677
    %1680 = vst [vmem:[#allocation5 + $0x8] sm:$0x1] %v1678
    %v1682 = vrot.slane %v1678, 1
    %1684 = vst [vmem:[#allocation5 + $0x1] sm:$0x1] %v1682
    %v1685 = vrot.slane %v1678, 2
    %1687 = vst [vmem:[#allocation5 + $0x9] sm:$0x1] %v1685
    %v1688 = vrot.slane %v1678, 3
    %1690 = vst [vmem:[#allocation5 + $0x2] sm:$0x1] %v1688
    %v1691 = vrot.slane %v1678, 5
    %1693 = vst [vmem:[#allocation5 + $0xb] sm:$0x1] %v1691
    %v1694 = vrot.slane %v1678, 6
    %1696 = vst [vmem:[#allocation5 + $0x4] sm:$0x1] %v1694
    %v1697 = vrot.slane %v1678, 7
    %1699 = vst [vmem:[#allocation5 + $0xc] sm:$0x1] %v1697
    %1700 = vst [vmem:[#allocation5 + $0x5] sm:$0x1] %v1679
    %v1701 = vld [vmem:[#allocation5] sm:$0x1f]
    %v1702 = vld [vmem:[#allocation5 + $0x8] sm:$0x1f]
    %v1703 = vpack.c.bf16 %v1701, %v1701
    %v1704 = vpack.c.bf16 %v1702, %v1702
    %v1705 = vld [vmem:[#allocation5] sm:$0x3e]
    %v1706 = vpack.c.bf16 %v1705, %v1705
    %v1707 = vld [vmem:[%s8] sm:$0xf]
    %v1708 = vld [vmem:[%s8 + $0x4] sm:$0xf]
    %v1709 = vld [vmem:[%s8 + $0x8] sm:$0xf]
    %v1710 = vld [vmem:[%s8 + $0xc] sm:$0xf]
    %v1711 = vld [vmem:[%s8 + $0x10] sm:$0xf]
    %v1712 = vld [vmem:[%s8 + $0x14] sm:$0xf]
    %v1713 = vld [vmem:[%s8 + $0x18] sm:$0xf]
    %v1714 = vld [vmem:[%s8 + $0x1c] sm:$0xf]
    %v1715 = vld [vmem:[%s8 + $0x20] sm:$0xf]
    %v1716 = vld [vmem:[%s8 + $0x24] sm:$0xf]
    %v1717 = vld [vmem:[%s8 + $0x28] sm:$0xf]
    %v1718 = vld [vmem:[%s8 + $0x2c] sm:$0xf]
    %v1719 = vld [vmem:[%s8 + $0x30] sm:$0xf]
    %v1720 = vld [vmem:[%s8 + $0x34] sm:$0xf]
    %v1721 = vld [vmem:[%s8 + $0x38] sm:$0xf]
    %v1722 = vld [vmem:[%s8 + $0x3c] sm:$0xf]
    %v1723 = vld [vmem:[%s8 + $0x40] sm:$0xf]
    %v1724 = vld [vmem:[%s8 + $0x44] sm:$0xf]
    %v1725 = vld [vmem:[%s8 + $0x48] sm:$0xf]
    %v1726 = vld [vmem:[%s8 + $0x4c] sm:$0xf]
    %v1727 = vld [vmem:[%s8 + $0x50] sm:$0xf]
    %v1728 = vld [vmem:[%s8 + $0x54] sm:$0xf]
    %v1729 = vld [vmem:[%s8 + $0x58] sm:$0xf]
    %v1730 = vld [vmem:[%s8 + $0x5c] sm:$0xf]
    %v1731 = vld [vmem:[%s8 + $0x60] sm:$0xf]
    %v1732 = vld [vmem:[%s8 + $0x64] sm:$0xf]
    %v1733 = vld [vmem:[%s8 + $0x68] sm:$0xf]
    %v1734 = vld [vmem:[%s8 + $0x6c] sm:$0xf]
    %v1735 = vld [vmem:[%s8 + $0x70] sm:$0xf]
    %v1736 = vld [vmem:[%s8 + $0x74] sm:$0xf]
    %v1737 = vld [vmem:[%s8 + $0x78] sm:$0xf]
    %v1738 = vld [vmem:[%s8 + $0x7c] sm:$0xf]
    %v1739 = vld [vmem:[#allocation16] sm:$0xf]
    %v1740 = vld [vmem:[#allocation16 + $0x4] sm:$0xf]
    %v1741 = vld [vmem:[#allocation16 + $0x8] sm:$0xf]
    %v1742 = vld [vmem:[#allocation16 + $0xc] sm:$0xf]
    %v1743 = vld [vmem:[#allocation16 + $0x10] sm:$0xf]
    %v1744 = vld [vmem:[#allocation16 + $0x14] sm:$0xf]
    %v1745 = vld [vmem:[#allocation16 + $0x18] sm:$0xf]
    %v1746 = vld [vmem:[#allocation16 + $0x1c] sm:$0xf]
    %v1747 = vld [vmem:[#allocation16 + $0x20] sm:$0xf]
    %v1748 = vld [vmem:[#allocation16 + $0x24] sm:$0xf]
    %v1749 = vld [vmem:[#allocation16 + $0x28] sm:$0xf]
    %v1750 = vld [vmem:[#allocation16 + $0x2c] sm:$0xf]
    %v1751 = vld [vmem:[#allocation16 + $0x30] sm:$0xf]
    %v1752 = vld [vmem:[#allocation16 + $0x34] sm:$0xf]
    %v1753 = vld [vmem:[#allocation16 + $0x38] sm:$0xf]
    %v1754 = vld [vmem:[#allocation16 + $0x3c] sm:$0xf]
    %v1756 = vshrl.u32 %v1706, 16
    %v1758 = vshll.u32 %v1706, 16
    %v1760 = vrot.slane %v1758, 1
    %v1761 = vor.u32 %v1756, %v1760
    %v1779 = vunpack.c.l.b16 %v1739
    %v1780 = vunpack.c.l.b16 %v1740
    %v1781 = vunpack.c.l.b16 %v1741
    %v1782 = vunpack.c.l.b16 %v1742
    %v1783 = vunpack.c.l.b16 %v1743
    %v1784 = vunpack.c.l.b16 %v1744
    %v1785 = vunpack.c.l.b16 %v1745
    %v1786 = vunpack.c.l.b16 %v1746
    %v1787 = vunpack.c.l.b16 %v1747
    %v1788 = vunpack.c.l.b16 %v1748
    %v1789 = vunpack.c.l.b16 %v1749
    %v1790 = vunpack.c.l.b16 %v1750
    %v1791 = vunpack.c.l.b16 %v1751
    %v1792 = vunpack.c.l.b16 %v1752
    %v1793 = vunpack.c.l.b16 %v1753
    %v1794 = vunpack.c.l.b16 %v1754
    %v1795 = vpack.c.b16 %v1780, %v1779
    %v1796 = vpack.c.b16 %v1782, %v1781
    %v1797 = vpack.c.b16 %v1784, %v1783
    %v1798 = vpack.c.b16 %v1786, %v1785
    %v1799 = vpack.c.b16 %v1788, %v1787
    %v1800 = vpack.c.b16 %v1790, %v1789
    %v1801 = vpack.c.b16 %v1792, %v1791
    %v1802 = vpack.c.b16 %v1794, %v1793
    %1811 = vmatprep.subr.bf16.mxu0 0
    %1812 = vmatpush1.bf16.msra.mxu0 %v1795
    %1813 = vmatprep.subr.bf16.mxu0 0
    %1814 = vmatpush1.bf16.msra.mxu0 %v1796
    %1815 = vmatprep.subr.bf16.mxu0 0
    %1816 = vmatpush1.bf16.msra.mxu0 %v1797
    %1817 = vmatprep.subr.bf16.mxu0 0
    %1818 = vmatpush1.bf16.msra.mxu0 %v1798
    %1819 = vmatprep.subr.bf16.mxu0 0
    %1820 = vmatpush1.bf16.msra.mxu0 %v1799
    %1821 = vmatprep.subr.bf16.mxu0 0
    %1822 = vmatpush1.bf16.msra.mxu0 %v1800
    %1823 = vmatprep.subr.bf16.mxu0 0
    %1824 = vmatpush1.bf16.msra.mxu0 %v1801
    %1825 = vmatprep.subr.bf16.mxu0 0
    %1826 = vmatpush1.bf16.msra.mxu0 %v1802
    %1827 = vmatprep.subr.bf16.mxu0 0
    %1828 = vmatpush1.bf16.msra.mxu0 0
    %1829 = vmatprep.subr.bf16.mxu0 0
    %1830 = vmatpush1.bf16.msra.mxu0 0
    %1831 = vmatprep.subr.bf16.mxu0 0
    %1832 = vmatpush1.bf16.msra.mxu0 0
    %1833 = vmatprep.subr.bf16.mxu0 0
    %1834 = vmatpush1.bf16.msra.mxu0 0
    %1835 = vmatprep.subr.bf16.mxu0 0
    %1836 = vmatpush1.bf16.msra.mxu0 0
    %1837 = vmatprep.subr.bf16.mxu0 0
    %1838 = vmatpush1.bf16.msra.mxu0 0
    %1839 = vmatprep.subr.bf16.mxu0 0
    %1840 = vmatpush1.bf16.msra.mxu0 0
    %1841 = vmatprep.subr.bf16.mxu0 0
    %1842 = vmatpush1.bf16.msra.mxu0 0
    %1843 = vmatprep.mubr.bf16.mxu0 0
    %1844 = vmatmul.mubr.bf16.gmra.mrb[0].mxu0 %v1761
    %v1845 = vpop.f32.mrb[0].mxu0
    %v1846 = vadd.f32 0.0, %v1845
    %v1847 = vpop.f32.mrb[0].mxu0
    %v1848 = vpop.f32.mrb[0].mxu0
    %v1849 = vpop.f32.mrb[0].mxu0
    %1850 = vdwg.mxu0
    %v1883 = vunpack.c.l.b16 %v1707
    %v1884 = vunpack.c.l.b16 %v1708
    %v1885 = vunpack.c.l.b16 %v1709
    %v1886 = vunpack.c.l.b16 %v1710
    %v1887 = vunpack.c.l.b16 %v1711
    %v1888 = vunpack.c.l.b16 %v1712
    %v1889 = vunpack.c.l.b16 %v1713
    %v1890 = vunpack.c.l.b16 %v1714
    %v1891 = vunpack.c.l.b16 %v1715
    %v1892 = vunpack.c.l.b16 %v1716
    %v1893 = vunpack.c.l.b16 %v1717
    %v1894 = vunpack.c.l.b16 %v1718
    %v1895 = vunpack.c.l.b16 %v1719
    %v1896 = vunpack.c.l.b16 %v1720
    %v1897 = vunpack.c.l.b16 %v1721
    %v1898 = vunpack.c.l.b16 %v1722
    %v1899 = vunpack.c.l.b16 %v1723
    %v1900 = vunpack.c.l.b16 %v1724
    %v1901 = vunpack.c.l.b16 %v1725
    %v1902 = vunpack.c.l.b16 %v1726
    %v1903 = vunpack.c.l.b16 %v1727
    %v1904 = vunpack.c.l.b16 %v1728
    %v1905 = vunpack.c.l.b16 %v1729
    %v1906 = vunpack.c.l.b16 %v1730
    %v1907 = vunpack.c.l.b16 %v1731
    %v1908 = vunpack.c.l.b16 %v1732
    %v1909 = vunpack.c.l.b16 %v1733
    %v1910 = vunpack.c.l.b16 %v1734
    %v1911 = vunpack.c.l.b16 %v1735
    %v1912 = vunpack.c.l.b16 %v1736
    %v1913 = vunpack.c.l.b16 %v1737
    %v1914 = vunpack.c.l.b16 %v1738
    %v1915 = vpack.c.b16 %v1884, %v1883
    %v1916 = vpack.c.b16 %v1886, %v1885
    %v1917 = vpack.c.b16 %v1888, %v1887
    %v1918 = vpack.c.b16 %v1890, %v1889
    %v1919 = vpack.c.b16 %v1892, %v1891
    %v1920 = vpack.c.b16 %v1894, %v1893
    %v1921 = vpack.c.b16 %v1896, %v1895
    %v1922 = vpack.c.b16 %v1898, %v1897
    %v1923 = vpack.c.b16 %v1900, %v1899
    %v1924 = vpack.c.b16 %v1902, %v1901
    %v1925 = vpack.c.b16 %v1904, %v1903
    %v1926 = vpack.c.b16 %v1906, %v1905
    %v1927 = vpack.c.b16 %v1908, %v1907
    %v1928 = vpack.c.b16 %v1910, %v1909
    %v1929 = vpack.c.b16 %v1912, %v1911
    %v1930 = vpack.c.b16 %v1914, %v1913
    %1947 = vmatprep.subr.bf16.mxu0 0
    %1948 = vmatpush1.bf16.msra.mxu0 %v1915
    %1949 = vmatprep.subr.bf16.mxu0 0
    %1950 = vmatpush1.bf16.msra.mxu0 %v1916
    %1951 = vmatprep.subr.bf16.mxu0 0
    %1952 = vmatpush1.bf16.msra.mxu0 %v1917
    %1953 = vmatprep.subr.bf16.mxu0 0
    %1954 = vmatpush1.bf16.msra.mxu0 %v1918
    %1955 = vmatprep.subr.bf16.mxu0 0
    %1956 = vmatpush1.bf16.msra.mxu0 %v1919
    %1957 = vmatprep.subr.bf16.mxu0 0
    %1958 = vmatpush1.bf16.msra.mxu0 %v1920
    %1959 = vmatprep.subr.bf16.mxu0 0
    %1960 = vmatpush1.bf16.msra.mxu0 %v1921
    %1961 = vmatprep.subr.bf16.mxu0 0
    %1962 = vmatpush1.bf16.msra.mxu0 %v1922
    %1963 = vmatprep.subr.bf16.mxu0 0
    %1964 = vmatpush1.bf16.msra.mxu0 %v1923
    %1965 = vmatprep.subr.bf16.mxu0 0
    %1966 = vmatpush1.bf16.msra.mxu0 %v1924
    %1967 = vmatprep.subr.bf16.mxu0 0
    %1968 = vmatpush1.bf16.msra.mxu0 %v1925
    %1969 = vmatprep.subr.bf16.mxu0 0
    %1970 = vmatpush1.bf16.msra.mxu0 %v1926
    %1971 = vmatprep.subr.bf16.mxu0 0
    %1972 = vmatpush1.bf16.msra.mxu0 %v1927
    %1973 = vmatprep.subr.bf16.mxu0 0
    %1974 = vmatpush1.bf16.msra.mxu0 %v1928
    %1975 = vmatprep.subr.bf16.mxu0 0
    %1976 = vmatpush1.bf16.msra.mxu0 %v1929
    %1977 = vmatprep.subr.bf16.mxu0 0
    %1978 = vmatpush1.bf16.msra.mxu0 %v1930
    %1979 = vmatprep.mubr.bf16.mxu0 %v1704
    %1980 = vmatmul.mubr.bf16.gmra.mrb[0].mxu0 %v1703
    %v1981 = vpop.f32.mrb[0].mxu0
    %v1982 = vadd.f32 %v1846, %v1981
    %v1983 = vpop.f32.mrb[0].mxu0
    %v1984 = vpop.f32.mrb[0].mxu0
    %v1985 = vpop.f32.mrb[0].mxu0
    %1986 = vdwg.mxu0
    %v1987 = vld [vmem:[%s16] sm:$0x1]
    %v1989 = vlaneseq
    %v1990 = vshrl.u32 %v1989, 7
    %v1991 = vsub.s32 0, %v1990
    %v1992 = vrot.slane %v1987, %v1991
    %v1994 = vadd.f32 %v1982, %v1992
    %v1995 = vmul.f32 %v1994, 0.01
    %v1996 = vmax.f32 %v1994, %v1995
    %1997 = vst [vmem:[#allocation6] sm:$0x1] %v1996
    %v2000 = vunpack.c.l.s4 1983009808
    %v2001 = vunpack.c.0.s8 %v2000
    %v2002 = vlaneseq
    %v2003 = vshrl.u32 %v2002, 7
    %v2004 = vsub.s32 %v2001, %v2003
    %v2005 = vrot.slane %v1996, %v2004
    %v2006 = vrot.slane %v2005, 7
    %v2007 = vrot.slane %v2006, 2
    %2009 = vst [vmem:[#allocation6 + $0x2] sm:$0x1] %v2007
    %v2010 = vcombine.high %v2005, %v2005
    %v2011 = vrot.slane %v2010, 7
    %v2012 = vrot.slane %v2011, 2
    %2014 = vst [vmem:[#allocation6 + $0x1] sm:$0x1] %v2012
    %v2015 = vcombine.high %v1996, %v1996
    %v2017 = vunpack.c.l.s4 1983009808
    %v2018 = vunpack.c.0.s8 %v2017
    %v2019 = vlaneseq
    %v2020 = vshrl.u32 %v2019, 7
    %v2021 = vsub.s32 %v2018, %v2020
    %v2022 = vrot.slane %v2015, %v2021
    %2024 = vst [vmem:[#allocation6 + $0x3] sm:$0x1] %v2022
    %v2025 = vld [vmem:[#allocation6] sm:$0xf]
    %v2028 = vunpack.c.l.s4 1983009808
    %v2029 = vunpack.c.0.s8 %v2028
    %v2030 = vlaneseq
    %v2031 = vshrl.u32 %v2030, 7
    %v2032 = vsub.s32 %v2029, %v2031
    %v2033 = vrot.slane %v2025, %v2032
    %v2034 = vcombine.high %v2033, %v2033
    %v2037 = vpack.c.bf16 %v2033, %v2033
    %v2038 = vpack.c.bf16 %v2034, %v2034
    %v2039 = vld [vmem:[#allocation18] sm:$0xf]
    %v2040 = vld [vmem:[#allocation18 + $0x4] sm:$0xf]
    %v2041 = vld [vmem:[#allocation18 + $0x8] sm:$0xf]
    %v2042 = vld [vmem:[#allocation18 + $0xc] sm:$0xf]
    %v2043 = vld [vmem:[#allocation18 + $0x10] sm:$0xf]
    %v2044 = vld [vmem:[#allocation18 + $0x14] sm:$0xf]
    %v2045 = vld [vmem:[#allocation18 + $0x18] sm:$0xf]
    %v2046 = vld [vmem:[#allocation18 + $0x1c] sm:$0xf]
    %v2047 = vld [vmem:[#allocation18 + $0x20] sm:$0xf]
    %v2048 = vld [vmem:[#allocation18 + $0x24] sm:$0xf]
    %v2049 = vld [vmem:[#allocation18 + $0x28] sm:$0xf]
    %v2050 = vld [vmem:[#allocation18 + $0x2c] sm:$0xf]
    %v2051 = vld [vmem:[#allocation18 + $0x30] sm:$0xf]
    %v2052 = vld [vmem:[#allocation18 + $0x34] sm:$0xf]
    %v2053 = vld [vmem:[#allocation18 + $0x38] sm:$0xf]
    %v2054 = vld [vmem:[#allocation18 + $0x3c] sm:$0xf]
    %v2055 = vld [vmem:[#allocation18 + $0x40] sm:$0xf]
    %v2056 = vld [vmem:[#allocation18 + $0x44] sm:$0xf]
    %v2057 = vld [vmem:[#allocation18 + $0x48] sm:$0xf]
    %v2058 = vld [vmem:[#allocation18 + $0x4c] sm:$0xf]
    %v2059 = vld [vmem:[#allocation18 + $0x50] sm:$0xf]
    %v2060 = vld [vmem:[#allocation18 + $0x54] sm:$0xf]
    %v2061 = vld [vmem:[#allocation18 + $0x58] sm:$0xf]
    %v2062 = vld [vmem:[#allocation18 + $0x5c] sm:$0xf]
    %v2063 = vld [vmem:[#allocation18 + $0x60] sm:$0xf]
    %v2064 = vld [vmem:[#allocation18 + $0x64] sm:$0xf]
    %v2065 = vld [vmem:[#allocation18 + $0x68] sm:$0xf]
    %v2066 = vld [vmem:[#allocation18 + $0x6c] sm:$0xf]
    %v2067 = vld [vmem:[#allocation18 + $0x70] sm:$0xf]
    %v2068 = vld [vmem:[#allocation18 + $0x74] sm:$0xf]
    %v2069 = vld [vmem:[#allocation18 + $0x78] sm:$0xf]
    %v2070 = vld [vmem:[#allocation18 + $0x7c] sm:$0xf]
    %v2071 = vld [vmem:[%s17] sm:$0x1]
    %v2073 = vlaneseq
    %v2074 = vshrl.u32 %v2073, 7
    %v2075 = vsub.s32 0, %v2074
    %v2076 = vrot.slane %v2071, %v2075
    %v2110 = vunpack.c.l.b16 %v2039
    %v2111 = vunpack.c.l.b16 %v2040
    %v2112 = vunpack.c.l.b16 %v2041
    %v2113 = vunpack.c.l.b16 %v2042
    %v2114 = vunpack.c.l.b16 %v2043
    %v2115 = vunpack.c.l.b16 %v2044
    %v2116 = vunpack.c.l.b16 %v2045
    %v2117 = vunpack.c.l.b16 %v2046
    %v2118 = vunpack.c.l.b16 %v2047
    %v2119 = vunpack.c.l.b16 %v2048
    %v2120 = vunpack.c.l.b16 %v2049
    %v2121 = vunpack.c.l.b16 %v2050
    %v2122 = vunpack.c.l.b16 %v2051
    %v2123 = vunpack.c.l.b16 %v2052
    %v2124 = vunpack.c.l.b16 %v2053
    %v2125 = vunpack.c.l.b16 %v2054
    %v2126 = vunpack.c.l.b16 %v2055
    %v2127 = vunpack.c.l.b16 %v2056
    %v2128 = vunpack.c.l.b16 %v2057
    %v2129 = vunpack.c.l.b16 %v2058
    %v2130 = vunpack.c.l.b16 %v2059
    %v2131 = vunpack.c.l.b16 %v2060
    %v2132 = vunpack.c.l.b16 %v2061
    %v2133 = vunpack.c.l.b16 %v2062
    %v2134 = vunpack.c.l.b16 %v2063
    %v2135 = vunpack.c.l.b16 %v2064
    %v2136 = vunpack.c.l.b16 %v2065
    %v2137 = vunpack.c.l.b16 %v2066
    %v2138 = vunpack.c.l.b16 %v2067
    %v2139 = vunpack.c.l.b16 %v2068
    %v2140 = vunpack.c.l.b16 %v2069
    %v2141 = vunpack.c.l.b16 %v2070
    %v2142 = vpack.c.b16 %v2111, %v2110
    %v2143 = vpack.c.b16 %v2113, %v2112
    %v2144 = vpack.c.b16 %v2115, %v2114
    %v2145 = vpack.c.b16 %v2117, %v2116
    %v2146 = vpack.c.b16 %v2119, %v2118
    %v2147 = vpack.c.b16 %v2121, %v2120
    %v2148 = vpack.c.b16 %v2123, %v2122
    %v2149 = vpack.c.b16 %v2125, %v2124
    %v2150 = vpack.c.b16 %v2127, %v2126
    %v2151 = vpack.c.b16 %v2129, %v2128
    %v2152 = vpack.c.b16 %v2131, %v2130
    %v2153 = vpack.c.b16 %v2133, %v2132
    %v2154 = vpack.c.b16 %v2135, %v2134
    %v2155 = vpack.c.b16 %v2137, %v2136
    %v2156 = vpack.c.b16 %v2139, %v2138
    %v2157 = vpack.c.b16 %v2141, %v2140
    %2174 = vmatprep.subr.bf16.mxu0 0
    %2175 = vmatpush1.bf16.msra.mxu0 %v2142
    %2176 = vmatprep.subr.bf16.mxu0 0
    %2177 = vmatpush1.bf16.msra.mxu0 %v2143
    %2178 = vmatprep.subr.bf16.mxu0 0
    %2179 = vmatpush1.bf16.msra.mxu0 %v2144
    %2180 = vmatprep.subr.bf16.mxu0 0
    %2181 = vmatpush1.bf16.msra.mxu0 %v2145
    %2182 = vmatprep.subr.bf16.mxu0 0
    %2183 = vmatpush1.bf16.msra.mxu0 %v2146
    %2184 = vmatprep.subr.bf16.mxu0 0
    %2185 = vmatpush1.bf16.msra.mxu0 %v2147
    %2186 = vmatprep.subr.bf16.mxu0 0
    %2187 = vmatpush1.bf16.msra.mxu0 %v2148
    %2188 = vmatprep.subr.bf16.mxu0 0
    %2189 = vmatpush1.bf16.msra.mxu0 %v2149
    %2190 = vmatprep.subr.bf16.mxu0 0
    %2191 = vmatpush1.bf16.msra.mxu0 %v2150
    %2192 = vmatprep.subr.bf16.mxu0 0
    %2193 = vmatpush1.bf16.msra.mxu0 %v2151
    %2194 = vmatprep.subr.bf16.mxu0 0
    %2195 = vmatpush1.bf16.msra.mxu0 %v2152
    %2196 = vmatprep.subr.bf16.mxu0 0
    %2197 = vmatpush1.bf16.msra.mxu0 %v2153
    %2198 = vmatprep.subr.bf16.mxu0 0
    %2199 = vmatpush1.bf16.msra.mxu0 %v2154
    %2200 = vmatprep.subr.bf16.mxu0 0
    %2201 = vmatpush1.bf16.msra.mxu0 %v2155
    %2202 = vmatprep.subr.bf16.mxu0 0
    %2203 = vmatpush1.bf16.msra.mxu0 %v2156
    %2204 = vmatprep.subr.bf16.mxu0 0
    %2205 = vmatpush1.bf16.msra.mxu0 %v2157
    %2206 = vmatprep.mubr.bf16.mxu0 %v2038
    %2207 = vmatmul.mubr.bf16.gmra.mrb[0].mxu0 %v2037
    %v2208 = vpop.f32.mrb[0].mxu0
    %v2209 = vadd.f32 %v2076, %v2208
    %v2210 = vpop.f32.mrb[0].mxu0
    %v2211 = vpop.f32.mrb[0].mxu0
    %v2212 = vpop.f32.mrb[0].mxu0
    %2213 = vdwg.mxu0
    %v2214 = vmul.f32 %v2209, 0.01
    %v2215 = vmax.f32 %v2209, %v2214
    %v2216 = vpack.c.bf16 %v2215, %v2215
    %v2217 = vld [vmem:[%s11] sm:$0xf]
    %v2218 = vld [vmem:[%s11 + $0x4] sm:$0xf]
    %v2219 = vld [vmem:[%s11 + $0x8] sm:$0xf]
    %v2220 = vld [vmem:[%s11 + $0xc] sm:$0xf]
    %v2221 = vld [vmem:[%s11 + $0x10] sm:$0xf]
    %v2222 = vld [vmem:[%s11 + $0x14] sm:$0xf]
    %v2223 = vld [vmem:[%s11 + $0x18] sm:$0xf]
    %v2224 = vld [vmem:[%s11 + $0x1c] sm:$0xf]
    %v2225 = vld [vmem:[%s11 + $0x20] sm:$0xf]
    %v2226 = vld [vmem:[%s11 + $0x24] sm:$0xf]
    %v2227 = vld [vmem:[%s11 + $0x28] sm:$0xf]
    %v2228 = vld [vmem:[%s11 + $0x2c] sm:$0xf]
    %v2229 = vld [vmem:[%s11 + $0x30] sm:$0xf]
    %v2230 = vld [vmem:[%s11 + $0x34] sm:$0xf]
    %v2231 = vld [vmem:[%s11 + $0x38] sm:$0xf]
    %v2232 = vld [vmem:[%s11 + $0x3c] sm:$0xf]
    %v2233 = vld [vmem:[%s18] sm:$0x1]
    %v2235 = vlaneseq
    %v2236 = vshrl.u32 %v2235, 7
    %v2237 = vsub.s32 0, %v2236
    %v2238 = vrot.slane %v2233, %v2237
    %v2256 = vunpack.c.l.b16 %v2217
    %v2257 = vunpack.c.l.b16 %v2218
    %v2258 = vunpack.c.l.b16 %v2219
    %v2259 = vunpack.c.l.b16 %v2220
    %v2260 = vunpack.c.l.b16 %v2221
    %v2261 = vunpack.c.l.b16 %v2222
    %v2262 = vunpack.c.l.b16 %v2223
    %v2263 = vunpack.c.l.b16 %v2224
    %v2264 = vunpack.c.l.b16 %v2225
    %v2265 = vunpack.c.l.b16 %v2226
    %v2266 = vunpack.c.l.b16 %v2227
    %v2267 = vunpack.c.l.b16 %v2228
    %v2268 = vunpack.c.l.b16 %v2229
    %v2269 = vunpack.c.l.b16 %v2230
    %v2270 = vunpack.c.l.b16 %v2231
    %v2271 = vunpack.c.l.b16 %v2232
    %v2272 = vpack.c.b16 %v2257, %v2256
    %v2273 = vpack.c.b16 %v2259, %v2258
    %v2274 = vpack.c.b16 %v2261, %v2260
    %v2275 = vpack.c.b16 %v2263, %v2262
    %v2276 = vpack.c.b16 %v2265, %v2264
    %v2277 = vpack.c.b16 %v2267, %v2266
    %v2278 = vpack.c.b16 %v2269, %v2268
    %v2279 = vpack.c.b16 %v2271, %v2270
    %2288 = vmatprep.subr.bf16.mxu0 0
    %2289 = vmatpush1.bf16.msra.mxu0 %v2272
    %2290 = vmatprep.subr.bf16.mxu0 0
    %2291 = vmatpush1.bf16.msra.mxu0 %v2273
    %2292 = vmatprep.subr.bf16.mxu0 0
    %2293 = vmatpush1.bf16.msra.mxu0 %v2274
    %2294 = vmatprep.subr.bf16.mxu0 0
    %2295 = vmatpush1.bf16.msra.mxu0 %v2275
    %2296 = vmatprep.subr.bf16.mxu0 0
    %2297 = vmatpush1.bf16.msra.mxu0 %v2276
    %2298 = vmatprep.subr.bf16.mxu0 0
    %2299 = vmatpush1.bf16.msra.mxu0 %v2277
    %2300 = vmatprep.subr.bf16.mxu0 0
    %2301 = vmatpush1.bf16.msra.mxu0 %v2278
    %2302 = vmatprep.subr.bf16.mxu0 0
    %2303 = vmatpush1.bf16.msra.mxu0 %v2279
    %2304 = vmatprep.subr.bf16.mxu0 0
    %2305 = vmatpush1.bf16.msra.mxu0 0
    %2306 = vmatprep.subr.bf16.mxu0 0
    %2307 = vmatpush1.bf16.msra.mxu0 0
    %2308 = vmatprep.subr.bf16.mxu0 0
    %2309 = vmatpush1.bf16.msra.mxu0 0
    %2310 = vmatprep.subr.bf16.mxu0 0
    %2311 = vmatpush1.bf16.msra.mxu0 0
    %2312 = vmatprep.subr.bf16.mxu0 0
    %2313 = vmatpush1.bf16.msra.mxu0 0
    %2314 = vmatprep.subr.bf16.mxu0 0
    %2315 = vmatpush1.bf16.msra.mxu0 0
    %2316 = vmatprep.subr.bf16.mxu0 0
    %2317 = vmatpush1.bf16.msra.mxu0 0
    %2318 = vmatprep.subr.bf16.mxu0 0
    %2319 = vmatpush1.bf16.msra.mxu0 0
    %2320 = vmatprep.mubr.bf16.mxu0 0
    %2321 = vmatmul.mubr.bf16.gmra.mrb[0].mxu0 %v2216
    %v2322 = vpop.f32.mrb[0].mxu0
    %v2323 = vadd.f32 %v2238, %v2322
    %v2324 = vpop.f32.mrb[0].mxu0
    %v2325 = vpop.f32.mrb[0].mxu0
    %v2326 = vpop.f32.mrb[0].mxu0
    %2327 = vdwg.mxu0
    %v2328 = vmul.f32 %v2323, 0.01
    %v2329 = vmax.f32 %v2323, %v2328
    %v2330 = vpack.c.bf16 %v2329, %v2329
    %v2331 = vld [vmem:[%s12] sm:$0xf]
    %v2332 = vld [vmem:[%s12 + $0x4] sm:$0xf]
    %v2333 = vld [vmem:[%s12 + $0x8] sm:$0xf]
    %v2334 = vld [vmem:[%s12 + $0xc] sm:$0xf]
    %v2335 = vld [vmem:[%s19] sm:$0x1]
    %v2337 = vlaneseq
    %v2338 = vshrl.u32 %v2337, 7
    %v2339 = vsub.s32 0, %v2338
    %v2340 = vrot.slane %v2335, %v2339
    %v2346 = vunpack.c.l.b16 %v2331
    %v2347 = vunpack.c.l.b16 %v2332
    %v2348 = vunpack.c.l.b16 %v2333
    %v2349 = vunpack.c.l.b16 %v2334
    %v2350 = vpack.c.b16 %v2347, %v2346
    %v2351 = vpack.c.b16 %v2349, %v2348
    %vm2354 = vcmask 261120
    %v2356 = vsel %vm2354, %v2330, 0
    %2358 = vmatprep.subr.bf16.mxu0 0
    %2359 = vmatpush1.bf16.msra.mxu0 %v2350
    %2360 = vmatprep.subr.bf16.mxu0 0
    %2361 = vmatpush1.bf16.msra.mxu0 %v2351
    %2362 = vmatprep.subr.bf16.mxu0 0
    %2363 = vmatpush1.bf16.msra.mxu0 0
    %2364 = vmatprep.subr.bf16.mxu0 0
    %2365 = vmatpush1.bf16.msra.mxu0 0
    %2366 = vmatprep.subr.bf16.mxu0 0
    %2367 = vmatpush1.bf16.msra.mxu0 0
    %2368 = vmatprep.subr.bf16.mxu0 0
    %2369 = vmatpush1.bf16.msra.mxu0 0
    %2370 = vmatprep.subr.bf16.mxu0 0
    %2371 = vmatpush1.bf16.msra.mxu0 0
    %2372 = vmatprep.subr.bf16.mxu0 0
    %2373 = vmatpush1.bf16.msra.mxu0 0
    %2374 = vmatprep.subr.bf16.mxu0 0
    %2375 = vmatpush1.bf16.msra.mxu0 0
    %2376 = vmatprep.subr.bf16.mxu0 0
    %2377 = vmatpush1.bf16.msra.mxu0 0
    %2378 = vmatprep.subr.bf16.mxu0 0
    %2379 = vmatpush1.bf16.msra.mxu0 0
    %2380 = vmatprep.subr.bf16.mxu0 0
    %2381 = vmatpush1.bf16.msra.mxu0 0
    %2382 = vmatprep.subr.bf16.mxu0 0
    %2383 = vmatpush1.bf16.msra.mxu0 0
    %2384 = vmatprep.subr.bf16.mxu0 0
    %2385 = vmatpush1.bf16.msra.mxu0 0
    %2386 = vmatprep.subr.bf16.mxu0 0
    %2387 = vmatpush1.bf16.msra.mxu0 0
    %2388 = vmatprep.subr.bf16.mxu0 0
    %2389 = vmatpush1.bf16.msra.mxu0 0
    %2390 = vmatprep.mubr.bf16.mxu0 0
    %2391 = vmatmul.mubr.bf16.gmra.mrb[0].mxu0 %v2356
    %v2392 = vpop.f32.mrb[0].mxu0
    %v2393 = vadd.f32 %v2340, %v2392
    %v2394 = vpop.f32.mrb[0].mxu0
    %v2395 = vpop.f32.mrb[0].mxu0
    %v2396 = vpop.f32.mrb[0].mxu0
    %2397 = vdwg.mxu0
    %v2398 = vmul.f32 %v2393, 0.01
    %v2399 = vmax.f32 %v2393, %v2398
    %vm2400 = vcmask 254976
    %2401 = vst.msk [vmem:[#allocation19] sm:$0x3] %vm2400, %v2399
    // Predicated region
    $region110: #{forward.1} parent=1 // pred_check
      _
    $region111: #{forward.1} parent=1 // pred_check_branch
      %2403 = sbr.rel (0) target = $region113
    $region112: #{forward.1} parent=1 // pred_region
      %s2405 = ssub.s32 32, 32
      %2406 = vsyncadd [#allocation9], %s2405
      %s2408 = sshll.u32 [#allocation19], 4
      %s2409 = int_to_ptr.vmem [resolvable:$true] %s2408
      %2411 = dma.vmem_to_hbm [thread:$0]  %s2409, 32, %s20, [#allocation9]
    $region113: #{forward.1} parent=1 // pred_fallthru
      _
    // Predicated region
    $region114: #{forward.1} parent=1 // pred_check
      _
    $region115: #{forward.1} parent=1 // pred_check_branch
      %2413 = sbr.rel (0) target = $region117
    $region116: #{forward.1} parent=1 // pred_region
      %2414 = dma.done [#allocation9], 32
    $region117: #{forward.1} parent=1 // pred_fallthru
      _
    %2415 = vsyncpa [#allocation8], 1
    %2416 = vsyncpa [#allocation11], 1
    %2417 = vsyncpa [#allocation14], 1
    %2418 = vsyncpa [#allocation17], 1
    %2419 = vsyncpa [#allocation9], 1

</llo_original>
